<compile_context>
chip_gen: v7x
topology: tpu7x:2x2x1
jax: 0.10.0
libtpu: 0.0.40
codegen_flags: <defaults>
</compile_context>

<pallas_src>
import functools

import jax
import jax.numpy as jnp
from jax.experimental import pallas as pl
from jax.experimental.pallas import tpu as pltpu

HIDDEN_DIM_GCN_ACTOR = 128
LINEAR_ACTOR = [144, 144]


def _round_up(n, m):
    return ((n + m - 1) // m) * m


# ---------------------------------------------------------------------------
# Kernel: one batch tile; purely lane-dense dense-layer chain on the MXU.
# ---------------------------------------------------------------------------
def actor_kernel(x_ref, bw1_ref, bg1_ref, bw2_ref, bg2_ref,
                 bw11_ref, b11_ref, w12_ref, b12_ref, w13_ref, b13_ref,
                 bw21_ref, b21_ref, w22_ref, b22_ref, w23_ref, b23_ref,
                 sb_ref, out_ref):
    cdt = bw1_ref.dtype                      # compute dtype of weights (f32 or bf16)
    relu = lambda v: jnp.maximum(v, 0.0)

    def dense(v, w_ref, b_ref):
        # f32 accumulation on the MXU regardless of the weight dtype.
        return jnp.dot(v.astype(cdt), w_ref[...],
                       preferred_element_type=jnp.float32) + b_ref[...]

    # ---- GCN (adjacency folded into bw1/bw2 at pack time) ----
    h = relu(dense(x_ref[...], bw1_ref, bg1_ref))    # (BT, J*H)
    h = relu(dense(h, bw2_ref, bg2_ref))             # (BT, J*H)

    sb = sb_ref[...]                                 # (4, ad2) f32
    scale_r, bias_r = sb[0:1, :], sb[1:2, :]
    scale_l, bias_l = sb[2:3, :], sb[3:4, :]

    # ---- left branch head (l1_*); left-half mean readout folded into bw11 ----
    hl = relu(dense(h, bw11_ref, b11_ref))           # (BT, L)
    hl = relu(dense(hl, w12_ref, b12_ref))           # (BT, L)
    al = jnp.tanh(dense(hl, w13_ref, b13_ref))       # (BT, ad2)
    al = (al * scale_l + bias_l) * -1.0

    # ---- right branch head (l2_*); right-half mean readout folded into bw21 ----
    hr = relu(dense(h, bw21_ref, b21_ref))
    hr = relu(dense(hr, w22_ref, b22_ref))
    ar = jnp.tanh(dense(hr, w23_ref, b23_ref))
    ar = ar * scale_r + bias_r                       # (BT, ad2)

    # ---- single lane-dense store: cat([ar, al]) padded to 128 lanes ----
    act = jnp.concatenate([ar, al], axis=-1)         # (BT, 2*ad2)
    pad = out_ref.shape[1] - act.shape[1]
    if pad:
        act = jnp.concatenate(
            [act, jnp.zeros((act.shape[0], pad), jnp.float32)], axis=-1)
    out_ref[...] = act


# ---------------------------------------------------------------------------
# Wrapper
# ---------------------------------------------------------------------------
@functools.partial(jax.jit,
                   static_argnames=("action_dim", "block_b", "compute_dtype"))
def actor_forward(x, adj, params, *, action_dim, block_b=256,
                  compute_dtype=jnp.float32):
    """Actor.forward.

    block_b is the batch tile per grid step (256 is safe on all generations;
    keep <= ~512 on v5e / f32 to stay well inside scoped VMEM).
    compute_dtype=jnp.bfloat16 enables the bf16 MXU fast path (f32 accumulation)
    on v6e/v7x and halves the resident fused-weight VMEM.
    """
    B, J, F = x.shape
    H = params["wg1"].shape[1]
    L = params["w11"].shape[1]
    assert params["w21"].shape[1] == L
    ad2 = action_dim // 2
    half = J // 2
    f32 = jnp.float32
    cdt = compute_dtype

    adj_f = adj.astype(f32)

    # ---- fold graph structure + readout means into dense weights (pack time) ----
    # layer k (k=1,2):  relu(adj @ (h @ Wk) + bk) == relu(h_lanes @ kron(adj.T, Wk) + tile(bk))
    bw1 = jnp.kron(adj_f.T, params["wg1"].astype(f32)).astype(cdt)     # (J*F, J*H)
    bw2 = jnp.kron(adj_f.T, params["wg2"].astype(f32)).astype(cdt)     # (J*H, J*H)
    bg1 = jnp.tile(params["bg1"].astype(f32).reshape(1, H), (1, J))    # (1, J*H)
    bg2 = jnp.tile(params["bg2"].astype(f32).reshape(1, H), (1, J))    # (1, J*H)

    # readout means folded into the first head layers (right = first half of nodes).
    mask_r = jnp.concatenate(
        [jnp.full((half, 1), 1.0 / half, f32),
         jnp.zeros((J - half, 1), f32)], axis=0)
    mask_l = jnp.concatenate(
        [jnp.zeros((half, 1), f32),
         jnp.full((J - half, 1), 1.0 / (J - half), f32)], axis=0)
    bw11 = jnp.kron(mask_l, params["w11"].astype(f32)).astype(cdt)     # (J*H, L)
    bw21 = jnp.kron(mask_r, params["w21"].astype(f32)).astype(cdt)     # (J*H, L)

    w12 = params["w12"].astype(cdt)
    w22 = params["w22"].astype(cdt)
    w13 = params["w13"].astype(cdt)
    w23 = params["w23"].astype(cdt)
    b11 = params["b11"].astype(f32).reshape(1, L)
    b12 = params["b12"].astype(f32).reshape(1, L)
    b13 = params["b13"].astype(f32).reshape(1, ad2)
    b21 = params["b21"].astype(f32).reshape(1, L)
    b22 = params["b22"].astype(f32).reshape(1, L)
    b23 = params["b23"].astype(f32).reshape(1, ad2)
    sb = jnp.concatenate(
        [params["scale_r"].astype(f32).reshape(1, ad2),
         params["bias_r"].astype(f32).reshape(1, ad2),
         params["scale_l"].astype(f32).reshape(1, ad2),
         params["bias_l"].astype(f32).reshape(1, ad2)], axis=0)        # (4, ad2)

    # ---- lane-dense input & batch tiling (>=2 tiles so v7x can use both TCs) ----
    x_lanes = x.reshape(B, J * F).astype(f32)
    bt = _round_up(min(block_b, max(1, -(-B // 2))), 8)
    b_pad = _round_up(B, bt)
    if b_pad != B:
        x_lanes = jnp.pad(x_lanes, ((0, b_pad - B), (0, 0)))
    out_lanes = _round_up(max(2 * ad2, 1), 128)                        # lane-dense store
    grid = (b_pad // bt,)

    weights = (bw1, bg1, bw2, bg2, bw11, b11, w12, b12, w13, b13,
               bw21, b21, w22, b22, w23, b23, sb)
    in_specs = ([pl.BlockSpec((bt, J * F), lambda i: (i, 0))]
                + [pl.BlockSpec(w.shape, lambda i: (0, 0)) for w in weights])

    out = pl.pallas_call(
        actor_kernel,
        out_shape=jax.ShapeDtypeStruct((b_pad, out_lanes), jnp.float32),
        grid=grid,
        in_specs=in_specs,
        out_specs=pl.BlockSpec((bt, out_lanes), lambda i: (i, 0)),
        compiler_params=pltpu.CompilerParams(
            dimension_semantics=("parallel",),          # 2 TCs on v7x
            vmem_limit_bytes=48 * 1024 * 1024),          # resident fused weights + acts
    )(x_lanes, *weights)

    return out[:B, :2 * ad2]


# ---------------------------------------------------------------------------
# Init, pure-JAX reference, demo
# ---------------------------------------------------------------------------
def init_params(key, num_joint, feature_dim, action_dim):
    """Deterministic init mimicking nn.Linear default (uniform +-1/sqrt(fan_in))."""
    H = HIDDEN_DIM_GCN_ACTOR
    ad2 = action_dim // 2
    dims = [
        ("wg1", (feature_dim, H)), ("bg1", (1, H)),
        ("wg2", (H, H)),           ("bg2", (1, H)),
        ("w11", (H, LINEAR_ACTOR[0])),               ("b11", (1, LINEAR_ACTOR[0])),
        ("w12", (LINEAR_ACTOR[0], LINEAR_ACTOR[0])), ("b12", (1, LINEAR_ACTOR[0])),
        ("w13", (LINEAR_ACTOR[0], ad2)),             ("b13", (1, ad2)),
        ("w21", (H, LINEAR_ACTOR[1])),               ("b21", (1, LINEAR_ACTOR[1])),
        ("w22", (LINEAR_ACTOR[1], LINEAR_ACTOR[1])), ("b22", (1, LINEAR_ACTOR[1])),
        ("w23", (LINEAR_ACTOR[1], ad2)),             ("b23", (1, ad2)),
    ]
    params = {}
    keys = jax.random.split(key, len(dims))
    for k, (name, shape) in zip(keys, dims):
        fan_in = shape[0] if name.startswith("w") else shape[1]
        bound = 1.0 / jnp.sqrt(jnp.float32(fan_in))
        params[name] = jax.random.uniform(
            k, shape, dtype=jnp.float32, minval=-bound, maxval=bound)
    # action_lim == None  ->  action_scale = 1.0, action_bias = 0.0
    params["scale_r"] = jnp.ones((1, ad2), jnp.float32)
    params["bias_r"] = jnp.zeros((1, ad2), jnp.float32)
    params["scale_l"] = jnp.ones((1, ad2), jnp.float32)
    params["bias_l"] = jnp.zeros((1, ad2), jnp.float32)
    return params


def actor_forward_ref(x, adj, params):
    """Pure-JAX reference (mirrors the PyTorch forward semantics)."""
    relu = lambda v: jnp.maximum(v, 0.0)
    h = relu(jnp.einsum("jk,bkf,fh->bjh", adj, x, params["wg1"]) + params["bg1"])
    h2 = relu(jnp.einsum("jk,bkh,hg->bjg", adj, h, params["wg2"]) + params["bg2"])
    half = x.shape[1] // 2
    outr = h2[:, :half, :].mean(axis=1)
    outl = h2[:, half:, :].mean(axis=1)

    al = relu(outl @ params["w11"] + params["b11"])
    al = relu(al @ params["w12"] + params["b12"])
    al = (jnp.tanh(al @ params["w13"] + params["b13"]) * params["scale_l"]
          + params["bias_l"]) * -1.0

    ar = relu(outr @ params["w21"] + params["b21"])
    ar = relu(ar @ params["w22"] + params["b22"])
    ar = jnp.tanh(ar @ params["w23"] + params["b23"]) * params["scale_r"] + params["bias_r"]
    return jnp.concatenate([ar, al], axis=1)


def make_chain_adjacency(num_joint):
    """Symmetric-normalized chain graph with self loops: D^-1/2 (A+I) D^-1/2."""
    a = jnp.eye(num_joint, dtype=jnp.float32)
    idx = jnp.arange(num_joint - 1)
    a = a.at[idx, idx + 1].set(1.0)
    a = a.at[idx + 1, idx].set(1.0)
    deg = a.sum(axis=1)
    d_inv_sqrt = 1.0 / jnp.sqrt(deg)
    return a * d_inv_sqrt[:, None] * d_inv_sqrt[None, :]


if __name__ == "__main__":
    num_joint = 8
    feature_dim = 16
    action_dim = 6  # 3 right + 3 left

    key = jax.random.PRNGKey(0)
    k_param, k_x1, k_x2 = jax.random.split(key, 3)
    params = init_params(k_param, num_joint, feature_dim, action_dim)
    adj = make_chain_adjacency(num_joint)

    # --- f32 path, default tiling (grid has 2 steps for B=16) ---
    batch = 16
    x = jax.random.normal(k_x1, (batch, num_joint, feature_dim), dtype=jnp.float32)
    ref = actor_forward_ref(x, adj, params)
    out = jax.block_until_ready(actor_forward(x, adj, params, action_dim=action_dim))
    assert out.shape == (batch, action_dim), out.shape
    assert jnp.allclose(out, ref, atol=3e-4, rtol=3e-3), (out, ref)

    # --- f32 path, multi-step grid with batch padding (B=20 not divisible by 8) ---
    batch2 = 20
    x2 = jax.random.normal(k_x2, (batch2, num_joint, feature_dim), dtype=jnp.float32)
    ref2 = actor_forward_ref(x2, adj, params)
    out2 = jax.block_until_ready(
        actor_forward(x2, adj, params, action_dim=action_dim, block_b=8))
    assert out2.shape == (batch2, action_dim), out2.shape
    assert jnp.allclose(out2, ref2, atol=3e-4, rtol=3e-3), (out2, ref2)

    # --- bf16 weights (v6e/v7x MXU fast path), f32 accumulation ---
    out_bf16 = jax.block_until_ready(
        actor_forward(x, adj, params, action_dim=action_dim,
                      compute_dtype=jnp.bfloat16))
    assert out_bf16.shape == (batch, action_dim), out_bf16.shape
    assert bool(jnp.all(jnp.isfinite(out_bf16)))
    assert jnp.allclose(out_bf16, ref, atol=0.25, rtol=0.25)

    print("KERNEL_OK")
</pallas_src>

<mosaic_0001>
module attributes {stable_mosaic.version = 11 : i64} {
  func.func @actor_kernel(%arg0: i32, %arg1: memref<8x128xf32, #tpu.memory_space<vmem>>, %arg2: memref<128x1024xf32, #tpu.memory_space<vmem>>, %arg3: memref<1x1024xf32, #tpu.memory_space<vmem>>, %arg4: memref<1024x1024xf32, #tpu.memory_space<vmem>>, %arg5: memref<1x1024xf32, #tpu.memory_space<vmem>>, %arg6: memref<1024x144xf32, #tpu.memory_space<vmem>>, %arg7: memref<1x144xf32, #tpu.memory_space<vmem>>, %arg8: memref<144x144xf32, #tpu.memory_space<vmem>>, %arg9: memref<1x144xf32, #tpu.memory_space<vmem>>, %arg10: memref<144x3xf32, #tpu.memory_space<vmem>>, %arg11: memref<1x3xf32, #tpu.memory_space<vmem>>, %arg12: memref<1024x144xf32, #tpu.memory_space<vmem>>, %arg13: memref<1x144xf32, #tpu.memory_space<vmem>>, %arg14: memref<144x144xf32, #tpu.memory_space<vmem>>, %arg15: memref<1x144xf32, #tpu.memory_space<vmem>>, %arg16: memref<144x3xf32, #tpu.memory_space<vmem>>, %arg17: memref<1x3xf32, #tpu.memory_space<vmem>>, %arg18: memref<4x3xf32, #tpu.memory_space<vmem>>, %arg19: memref<8x128xf32, #tpu.memory_space<vmem>>) attributes {dimension_semantics = [#tpu.dimension_semantics<parallel>], iteration_bounds = array<i64: 2>, scalar_prefetch = 0 : i64, scratch_operands = 0 : i64, tpu.core_type = #tpu.core_type<tc>, window_params = [{transform_indices = @transform_0, window_bounds = array<i64: 8, 128>}, {pipeline_mode = #tpu.pipeline_mode<synchronous>, transform_indices = @transform_1, window_bounds = array<i64: 128, 1024>}, {pipeline_mode = #tpu.pipeline_mode<synchronous>, transform_indices = @transform_2, window_bounds = array<i64: 1, 1024>}, {pipeline_mode = #tpu.pipeline_mode<synchronous>, transform_indices = @transform_3, window_bounds = array<i64: 1024, 1024>}, {pipeline_mode = #tpu.pipeline_mode<synchronous>, transform_indices = @transform_4, window_bounds = array<i64: 1, 1024>}, {pipeline_mode = #tpu.pipeline_mode<synchronous>, transform_indices = @transform_5, window_bounds = array<i64: 1024, 144>}, {pipeline_mode = #tpu.pipeline_mode<synchronous>, transform_indices = @transform_6, window_bounds = array<i64: 1, 144>}, {pipeline_mode = #tpu.pipeline_mode<synchronous>, transform_indices = @transform_7, window_bounds = array<i64: 144, 144>}, {pipeline_mode = #tpu.pipeline_mode<synchronous>, transform_indices = @transform_8, window_bounds = array<i64: 1, 144>}, {pipeline_mode = #tpu.pipeline_mode<synchronous>, transform_indices = @transform_9, window_bounds = array<i64: 144, 3>}, {pipeline_mode = #tpu.pipeline_mode<synchronous>, transform_indices = @transform_10, window_bounds = array<i64: 1, 3>}, {pipeline_mode = #tpu.pipeline_mode<synchronous>, transform_indices = @transform_11, window_bounds = array<i64: 1024, 144>}, {pipeline_mode = #tpu.pipeline_mode<synchronous>, transform_indices = @transform_12, window_bounds = array<i64: 1, 144>}, {pipeline_mode = #tpu.pipeline_mode<synchronous>, transform_indices = @transform_13, window_bounds = array<i64: 144, 144>}, {pipeline_mode = #tpu.pipeline_mode<synchronous>, transform_indices = @transform_14, window_bounds = array<i64: 1, 144>}, {pipeline_mode = #tpu.pipeline_mode<synchronous>, transform_indices = @transform_15, window_bounds = array<i64: 144, 3>}, {pipeline_mode = #tpu.pipeline_mode<synchronous>, transform_indices = @transform_16, window_bounds = array<i64: 1, 3>}, {pipeline_mode = #tpu.pipeline_mode<synchronous>, transform_indices = @transform_17, window_bounds = array<i64: 4, 3>}, {transform_indices = @transform_18, window_bounds = array<i64: 8, 128>}]} {
    %c0 = arith.constant 0 : index
    %c0_0 = arith.constant 0 : index
    %0 = vector.load %arg1[%c0, %c0_0] : memref<8x128xf32, #tpu.memory_space<vmem>>, vector<8x128xf32>
    %c0_1 = arith.constant 0 : index
    %c0_2 = arith.constant 0 : index
    %1 = vector.load %arg2[%c0_1, %c0_2] : memref<128x1024xf32, #tpu.memory_space<vmem>>, vector<128x1024xf32>
    %cst = arith.constant dense<0.000000e+00> : vector<8x1024xf32>
    %2 = tpu.matmul %0, %1, %cst {dimension_numbers = #tpu.dot_dimension_numbers<[1], [0], [0], [1], [0, 0, 1, 1], [], []>} : vector<8x128xf32>, vector<128x1024xf32>, vector<8x1024xf32> -> vector<8x1024xf32>
    %c0_3 = arith.constant 0 : index
    %c0_4 = arith.constant 0 : index
    %3 = vector.load %arg3[%c0_3, %c0_4] : memref<1x1024xf32, #tpu.memory_space<vmem>>, vector<1x1024xf32>
    %4 = vector.broadcast %3 : vector<1x1024xf32> to vector<8x1024xf32>
    %5 = arith.addf %2, %4 : vector<8x1024xf32>
    %cst_5 = arith.constant 0.000000e+00 : f32
    %6 = vector.broadcast %cst_5 : f32 to vector<8x1024xf32>
    %7 = arith.maximumf %5, %6 : vector<8x1024xf32>
    %c0_6 = arith.constant 0 : index
    %c0_7 = arith.constant 0 : index
    %8 = vector.load %arg4[%c0_6, %c0_7] : memref<1024x1024xf32, #tpu.memory_space<vmem>>, vector<1024x1024xf32>
    %cst_8 = arith.constant dense<0.000000e+00> : vector<8x1024xf32>
    %9 = tpu.matmul %7, %8, %cst_8 {dimension_numbers = #tpu.dot_dimension_numbers<[1], [0], [0], [1], [0, 0, 1, 1], [], []>} : vector<8x1024xf32>, vector<1024x1024xf32>, vector<8x1024xf32> -> vector<8x1024xf32>
    %c0_9 = arith.constant 0 : index
    %c0_10 = arith.constant 0 : index
    %10 = vector.load %arg5[%c0_9, %c0_10] : memref<1x1024xf32, #tpu.memory_space<vmem>>, vector<1x1024xf32>
    %11 = vector.broadcast %10 : vector<1x1024xf32> to vector<8x1024xf32>
    %12 = arith.addf %9, %11 : vector<8x1024xf32>
    %cst_11 = arith.constant 0.000000e+00 : f32
    %13 = vector.broadcast %cst_11 : f32 to vector<8x1024xf32>
    %14 = arith.maximumf %12, %13 : vector<8x1024xf32>
    %c0_12 = arith.constant 0 : index
    %c0_13 = arith.constant 0 : index
    %15 = vector.load %arg18[%c0_12, %c0_13] : memref<4x3xf32, #tpu.memory_space<vmem>>, vector<4x3xf32>
    %16 = vector.extract_strided_slice %15 {offsets = [0, 0], sizes = [1, 3], strides = [1, 1]} : vector<4x3xf32> to vector<1x3xf32>
    %17 = vector.extract_strided_slice %15 {offsets = [1, 0], sizes = [1, 3], strides = [1, 1]} : vector<4x3xf32> to vector<1x3xf32>
    %18 = vector.extract_strided_slice %15 {offsets = [2, 0], sizes = [1, 3], strides = [1, 1]} : vector<4x3xf32> to vector<1x3xf32>
    %19 = vector.extract_strided_slice %15 {offsets = [3, 0], sizes = [1, 3], strides = [1, 1]} : vector<4x3xf32> to vector<1x3xf32>
    %c0_14 = arith.constant 0 : index
    %c0_15 = arith.constant 0 : index
    %20 = vector.load %arg6[%c0_14, %c0_15] : memref<1024x144xf32, #tpu.memory_space<vmem>>, vector<1024x144xf32>
    %cst_16 = arith.constant dense<0.000000e+00> : vector<8x144xf32>
    %21 = tpu.matmul %14, %20, %cst_16 {dimension_numbers = #tpu.dot_dimension_numbers<[1], [0], [0], [1], [0, 0, 1, 1], [], []>} : vector<8x1024xf32>, vector<1024x144xf32>, vector<8x144xf32> -> vector<8x144xf32>
    %c0_17 = arith.constant 0 : index
    %c0_18 = arith.constant 0 : index
    %22 = vector.load %arg7[%c0_17, %c0_18] : memref<1x144xf32, #tpu.memory_space<vmem>>, vector<1x144xf32>
    %23 = vector.broadcast %22 : vector<1x144xf32> to vector<8x144xf32>
    %24 = arith.addf %21, %23 : vector<8x144xf32>
    %cst_19 = arith.constant 0.000000e+00 : f32
    %25 = vector.broadcast %cst_19 : f32 to vector<8x144xf32>
    %26 = arith.maximumf %24, %25 : vector<8x144xf32>
    %c0_20 = arith.constant 0 : index
    %c0_21 = arith.constant 0 : index
    %27 = vector.load %arg8[%c0_20, %c0_21] : memref<144x144xf32, #tpu.memory_space<vmem>>, vector<144x144xf32>
    %cst_22 = arith.constant dense<0.000000e+00> : vector<8x144xf32>
    %28 = tpu.matmul %26, %27, %cst_22 {dimension_numbers = #tpu.dot_dimension_numbers<[1], [0], [0], [1], [0, 0, 1, 1], [], []>} : vector<8x144xf32>, vector<144x144xf32>, vector<8x144xf32> -> vector<8x144xf32>
    %c0_23 = arith.constant 0 : index
    %c0_24 = arith.constant 0 : index
    %29 = vector.load %arg9[%c0_23, %c0_24] : memref<1x144xf32, #tpu.memory_space<vmem>>, vector<1x144xf32>
    %30 = vector.broadcast %29 : vector<1x144xf32> to vector<8x144xf32>
    %31 = arith.addf %28, %30 : vector<8x144xf32>
    %cst_25 = arith.constant 0.000000e+00 : f32
    %32 = vector.broadcast %cst_25 : f32 to vector<8x144xf32>
    %33 = arith.maximumf %31, %32 : vector<8x144xf32>
    %c0_26 = arith.constant 0 : index
    %c0_27 = arith.constant 0 : index
    %34 = vector.load %arg10[%c0_26, %c0_27] : memref<144x3xf32, #tpu.memory_space<vmem>>, vector<144x3xf32>
    %cst_28 = arith.constant dense<0.000000e+00> : vector<8x3xf32>
    %35 = tpu.matmul %33, %34, %cst_28 {dimension_numbers = #tpu.dot_dimension_numbers<[1], [0], [0], [1], [0, 0, 1, 1], [], []>} : vector<8x144xf32>, vector<144x3xf32>, vector<8x3xf32> -> vector<8x3xf32>
    %c0_29 = arith.constant 0 : index
    %c0_30 = arith.constant 0 : index
    %36 = vector.load %arg11[%c0_29, %c0_30] : memref<1x3xf32, #tpu.memory_space<vmem>>, vector<1x3xf32>
    %37 = vector.broadcast %36 : vector<1x3xf32> to vector<8x3xf32>
    %38 = arith.addf %35, %37 : vector<8x3xf32>
    %39 = math.tanh %38 : vector<8x3xf32>
    %40 = vector.broadcast %18 : vector<1x3xf32> to vector<8x3xf32>
    %41 = arith.mulf %39, %40 : vector<8x3xf32>
    %42 = vector.broadcast %19 : vector<1x3xf32> to vector<8x3xf32>
    %43 = arith.addf %41, %42 : vector<8x3xf32>
    %cst_31 = arith.constant -1.000000e+00 : f32
    %44 = vector.broadcast %cst_31 : f32 to vector<8x3xf32>
    %45 = arith.mulf %43, %44 : vector<8x3xf32>
    %c0_32 = arith.constant 0 : index
    %c0_33 = arith.constant 0 : index
    %46 = vector.load %arg12[%c0_32, %c0_33] : memref<1024x144xf32, #tpu.memory_space<vmem>>, vector<1024x144xf32>
    %cst_34 = arith.constant dense<0.000000e+00> : vector<8x144xf32>
    %47 = tpu.matmul %14, %46, %cst_34 {dimension_numbers = #tpu.dot_dimension_numbers<[1], [0], [0], [1], [0, 0, 1, 1], [], []>} : vector<8x1024xf32>, vector<1024x144xf32>, vector<8x144xf32> -> vector<8x144xf32>
    %c0_35 = arith.constant 0 : index
    %c0_36 = arith.constant 0 : index
    %48 = vector.load %arg13[%c0_35, %c0_36] : memref<1x144xf32, #tpu.memory_space<vmem>>, vector<1x144xf32>
    %49 = vector.broadcast %48 : vector<1x144xf32> to vector<8x144xf32>
    %50 = arith.addf %47, %49 : vector<8x144xf32>
    %cst_37 = arith.constant 0.000000e+00 : f32
    %51 = vector.broadcast %cst_37 : f32 to vector<8x144xf32>
    %52 = arith.maximumf %50, %51 : vector<8x144xf32>
    %c0_38 = arith.constant 0 : index
    %c0_39 = arith.constant 0 : index
    %53 = vector.load %arg14[%c0_38, %c0_39] : memref<144x144xf32, #tpu.memory_space<vmem>>, vector<144x144xf32>
    %cst_40 = arith.constant dense<0.000000e+00> : vector<8x144xf32>
    %54 = tpu.matmul %52, %53, %cst_40 {dimension_numbers = #tpu.dot_dimension_numbers<[1], [0], [0], [1], [0, 0, 1, 1], [], []>} : vector<8x144xf32>, vector<144x144xf32>, vector<8x144xf32> -> vector<8x144xf32>
    %c0_41 = arith.constant 0 : index
    %c0_42 = arith.constant 0 : index
    %55 = vector.load %arg15[%c0_41, %c0_42] : memref<1x144xf32, #tpu.memory_space<vmem>>, vector<1x144xf32>
    %56 = vector.broadcast %55 : vector<1x144xf32> to vector<8x144xf32>
    %57 = arith.addf %54, %56 : vector<8x144xf32>
    %cst_43 = arith.constant 0.000000e+00 : f32
    %58 = vector.broadcast %cst_43 : f32 to vector<8x144xf32>
    %59 = arith.maximumf %57, %58 : vector<8x144xf32>
    %c0_44 = arith.constant 0 : index
    %c0_45 = arith.constant 0 : index
    %60 = vector.load %arg16[%c0_44, %c0_45] : memref<144x3xf32, #tpu.memory_space<vmem>>, vector<144x3xf32>
    %cst_46 = arith.constant dense<0.000000e+00> : vector<8x3xf32>
    %61 = tpu.matmul %59, %60, %cst_46 {dimension_numbers = #tpu.dot_dimension_numbers<[1], [0], [0], [1], [0, 0, 1, 1], [], []>} : vector<8x144xf32>, vector<144x3xf32>, vector<8x3xf32> -> vector<8x3xf32>
    %c0_47 = arith.constant 0 : index
    %c0_48 = arith.constant 0 : index
    %62 = vector.load %arg17[%c0_47, %c0_48] : memref<1x3xf32, #tpu.memory_space<vmem>>, vector<1x3xf32>
    %63 = vector.broadcast %62 : vector<1x3xf32> to vector<8x3xf32>
    %64 = arith.addf %61, %63 : vector<8x3xf32>
    %65 = math.tanh %64 : vector<8x3xf32>
    %66 = vector.broadcast %16 : vector<1x3xf32> to vector<8x3xf32>
    %67 = arith.mulf %65, %66 : vector<8x3xf32>
    %68 = vector.broadcast %17 : vector<1x3xf32> to vector<8x3xf32>
    %69 = arith.addf %67, %68 : vector<8x3xf32>
    %70 = tpu.concatenate %69, %45 in 1 : vector<8x3xf32>, vector<8x3xf32> -> vector<8x6xf32>
    %cst_49 = arith.constant 0.000000e+00 : f32
    %71 = vector.broadcast %cst_49 : f32 to vector<8x122xf32>
    %72 = tpu.concatenate %70, %71 in 1 : vector<8x6xf32>, vector<8x122xf32> -> vector<8x128xf32>
    %c0_50 = arith.constant 0 : index
    %c0_51 = arith.constant 0 : index
    %73 = vector.load %arg19[%c0_50, %c0_51] : memref<8x128xf32, #tpu.memory_space<vmem>>, vector<8x128xf32>
    tpu.vector_store %arg19[%c0_50, %c0_51], %72 {strides = array<i32>} : memref<8x128xf32, #tpu.memory_space<vmem>>, vector<8x128xf32>,
    return
  }
  func.func @transform_0(%arg0: i32) -> (i32, i32) {
    %c0_i32 = arith.constant 0 : i32
    %c0_i32_0 = arith.constant 0 : i32
    return %arg0, %c0_i32 : i32, i32
  }
  func.func @transform_1(%arg0: i32) -> (i32, i32) {
    %c0_i32 = arith.constant 0 : i32
    %c0_i32_0 = arith.constant 0 : i32
    %c0_i32_1 = arith.constant 0 : i32
    return %c0_i32, %c0_i32_0 : i32, i32
  }
  func.func @transform_2(%arg0: i32) -> (i32, i32) {
    %c0_i32 = arith.constant 0 : i32
    %c0_i32_0 = arith.constant 0 : i32
    %c0_i32_1 = arith.constant 0 : i32
    return %c0_i32, %c0_i32_0 : i32, i32
  }
  func.func @transform_3(%arg0: i32) -> (i32, i32) {
    %c0_i32 = arith.constant 0 : i32
    %c0_i32_0 = arith.constant 0 : i32
    %c0_i32_1 = arith.constant 0 : i32
    return %c0_i32, %c0_i32_0 : i32, i32
  }
  func.func @transform_4(%arg0: i32) -> (i32, i32) {
    %c0_i32 = arith.constant 0 : i32
    %c0_i32_0 = arith.constant 0 : i32
    %c0_i32_1 = arith.constant 0 : i32
    return %c0_i32, %c0_i32_0 : i32, i32
  }
  func.func @transform_5(%arg0: i32) -> (i32, i32) {
    %c0_i32 = arith.constant 0 : i32
    %c0_i32_0 = arith.constant 0 : i32
    %c0_i32_1 = arith.constant 0 : i32
    return %c0_i32, %c0_i32_0 : i32, i32
  }
  func.func @transform_6(%arg0: i32) -> (i32, i32) {
    %c0_i32 = arith.constant 0 : i32
    %c0_i32_0 = arith.constant 0 : i32
    %c0_i32_1 = arith.constant 0 : i32
    return %c0_i32, %c0_i32_0 : i32, i32
  }
  func.func @transform_7(%arg0: i32) -> (i32, i32) {
    %c0_i32 = arith.constant 0 : i32
    %c0_i32_0 = arith.constant 0 : i32
    %c0_i32_1 = arith.constant 0 : i32
    return %c0_i32, %c0_i32_0 : i32, i32
  }
  func.func @transform_8(%arg0: i32) -> (i32, i32) {
    %c0_i32 = arith.constant 0 : i32
    %c0_i32_0 = arith.constant 0 : i32
    %c0_i32_1 = arith.constant 0 : i32
    return %c0_i32, %c0_i32_0 : i32, i32
  }
  func.func @transform_9(%arg0: i32) -> (i32, i32) {
    %c0_i32 = arith.constant 0 : i32
    %c0_i32_0 = arith.constant 0 : i32
    %c0_i32_1 = arith.constant 0 : i32
    return %c0_i32, %c0_i32_0 : i32, i32
  }
  func.func @transform_10(%arg0: i32) -> (i32, i32) {
    %c0_i32 = arith.constant 0 : i32
    %c0_i32_0 = arith.constant 0 : i32
    %c0_i32_1 = arith.constant 0 : i32
    return %c0_i32, %c0_i32_0 : i32, i32
  }
  func.func @transform_11(%arg0: i32) -> (i32, i32) {
    %c0_i32 = arith.constant 0 : i32
    %c0_i32_0 = arith.constant 0 : i32
    %c0_i32_1 = arith.constant 0 : i32
    return %c0_i32, %c0_i32_0 : i32, i32
  }
  func.func @transform_12(%arg0: i32) -> (i32, i32) {
    %c0_i32 = arith.constant 0 : i32
    %c0_i32_0 = arith.constant 0 : i32
    %c0_i32_1 = arith.constant 0 : i32
    return %c0_i32, %c0_i32_0 : i32, i32
  }
  func.func @transform_13(%arg0: i32) -> (i32, i32) {
    %c0_i32 = arith.constant 0 : i32
    %c0_i32_0 = arith.constant 0 : i32
    %c0_i32_1 = arith.constant 0 : i32
    return %c0_i32, %c0_i32_0 : i32, i32
  }
  func.func @transform_14(%arg0: i32) -> (i32, i32) {
    %c0_i32 = arith.constant 0 : i32
    %c0_i32_0 = arith.constant 0 : i32
    %c0_i32_1 = arith.constant 0 : i32
    return %c0_i32, %c0_i32_0 : i32, i32
  }
  func.func @transform_15(%arg0: i32) -> (i32, i32) {
    %c0_i32 = arith.constant 0 : i32
    %c0_i32_0 = arith.constant 0 : i32
    %c0_i32_1 = arith.constant 0 : i32
    return %c0_i32, %c0_i32_0 : i32, i32
  }
  func.func @transform_16(%arg0: i32) -> (i32, i32) {
    %c0_i32 = arith.constant 0 : i32
    %c0_i32_0 = arith.constant 0 : i32
    %c0_i32_1 = arith.constant 0 : i32
    return %c0_i32, %c0_i32_0 : i32, i32
  }
  func.func @transform_17(%arg0: i32) -> (i32, i32) {
    %c0_i32 = arith.constant 0 : i32
    %c0_i32_0 = arith.constant 0 : i32
    %c0_i32_1 = arith.constant 0 : i32
    return %c0_i32, %c0_i32_0 : i32, i32
  }
  func.func @transform_18(%arg0: i32) -> (i32, i32) {
    %c0_i32 = arith.constant 0 : i32
    %c0_i32_0 = arith.constant 0 : i32
    return %arg0, %c0_i32 : i32, i32
  }
}

</mosaic_0001>

<llo_original>
// kernel: actor_forward.1
$region0: #{actor_forward.1}
  #allocation0 [shape = 'u32[]', space=smem, size = 0x4, offset = 0x4, fixed_abs, tag = 'smem constant byte address 0x4 - core index']
  #allocation1 [shape = 'u32[144,128]{1,0:T(1,128)}', space=vmem, size = 0x12000, scoped, tag = 'internal scratch']
  %s0 = inlined_call_operand.vmem [shape: f32[16,128], index: 0, kind: input, shape index: {}]
  %s1 = inlined_call_operand.vmem [shape: f32[128,1024], index: 1, kind: input, shape index: {}]
  %s2 = inlined_call_operand.vmem [shape: f32[1,1024], index: 2, kind: input, shape index: {}]
  %s3 = inlined_call_operand.vmem [shape: f32[1024,1024], index: 3, kind: input, shape index: {}]
  %s4 = inlined_call_operand.vmem [shape: f32[1,1024], index: 4, kind: input, shape index: {}]
  %s5 = inlined_call_operand.vmem [shape: f32[1024,144], index: 5, kind: input, shape index: {}]
  %s6 = inlined_call_operand.vmem [shape: f32[1,144], index: 6, kind: input, shape index: {}]
  %s7 = inlined_call_operand.vmem [shape: f32[144,144], index: 7, kind: input, shape index: {}]
  %s8 = inlined_call_operand.vmem [shape: f32[1,144], index: 8, kind: input, shape index: {}]
  %s9 = inlined_call_operand.vmem [shape: f32[144,3], index: 9, kind: input, shape index: {}]
  %s10 = inlined_call_operand.vmem [shape: f32[1,3], index: 10, kind: input, shape index: {}]
  %s11 = inlined_call_operand.vmem [shape: f32[1024,144], index: 11, kind: input, shape index: {}]
  %s12 = inlined_call_operand.vmem [shape: f32[1,144], index: 12, kind: input, shape index: {}]
  %s13 = inlined_call_operand.vmem [shape: f32[144,144], index: 13, kind: input, shape index: {}]
  %s14 = inlined_call_operand.vmem [shape: f32[1,144], index: 14, kind: input, shape index: {}]
  %s15 = inlined_call_operand.vmem [shape: f32[144,3], index: 15, kind: input, shape index: {}]
  %s16 = inlined_call_operand.vmem [shape: f32[1,3], index: 16, kind: input, shape index: {}]
  %s17 = inlined_call_operand.vmem [shape: f32[4,3], index: 17, kind: input, shape index: {}]
  %s18 = inlined_call_operand.vmem [shape: f32[16,128], index: 18, kind: output, shape index: {}]
  %s19 = sld [smem:[#allocation0]]
  $region105: #{actor_forward.1} parent=0
    _
  %s21 = ssub.s32 1, %s19
  %s22 = scalar_select 0, %s21, %s19
  loop: start=0, step=1, limit=4
  $region2: #{actor_forward.1} parent=0 // loop_pre_header
    _
  $region3: #{actor_forward.1} parent=0 // loop_header
    %s24 = sphi 0, %s28
    %p25 = scmp.ge.s32.totalorder %s24, 4
    %s34 = sphi 0, %s36
    %s37 = sphi 0, %s34
    %s38 = sphi 0, %s37
    %s54 = sphi 0, %s38
    %s58 = sphi 0, %s58
    %s60 = sphi 0, %s58
    %s61 = sphi 0, %s60
    %s75 = sphi 0, %s61
    %s79 = sphi 0, %s79
    %s81 = sphi 0, %s79
    %s82 = sphi 0, %s81
    %s96 = sphi 0, %s82
    %s100 = sphi 0, %s100
    %s102 = sphi 0, %s100
    %s103 = sphi 0, %s102
    %s117 = sphi 0, %s103
    %s121 = sphi 0, %s121
    %s123 = sphi 0, %s121
    %s124 = sphi 0, %s123
    %s138 = sphi 0, %s124
    %s142 = sphi 0, %s142
    %s144 = sphi 0, %s142
    %s145 = sphi 0, %s144
    %s159 = sphi 0, %s145
    %s163 = sphi 0, %s163
    %s165 = sphi 0, %s163
    %s166 = sphi 0, %s165
    %s180 = sphi 0, %s166
    %s184 = sphi 0, %s184
    %s186 = sphi 0, %s184
    %s187 = sphi 0, %s186
    %s201 = sphi 0, %s187
    %s205 = sphi 0, %s205
    %s207 = sphi 0, %s205
    %s208 = sphi 0, %s207
    %s222 = sphi 0, %s208
    %s226 = sphi 0, %s226
    %s228 = sphi 0, %s226
    %s229 = sphi 0, %s228
    %s243 = sphi 0, %s229
    %s247 = sphi 0, %s247
    %s249 = sphi 0, %s247
    %s250 = sphi 0, %s249
    %s264 = sphi 0, %s250
    %s268 = sphi 0, %s268
    %s270 = sphi 0, %s268
    %s271 = sphi 0, %s270
    %s285 = sphi 0, %s271
    %s289 = sphi 0, %s289
    %s291 = sphi 0, %s289
    %s292 = sphi 0, %s291
    %s306 = sphi 0, %s292
    %s310 = sphi 0, %s310
    %s312 = sphi 0, %s310
    %s313 = sphi 0, %s312
    %s327 = sphi 0, %s313
    %s331 = sphi 0, %s331
    %s333 = sphi 0, %s331
    %s334 = sphi 0, %s333
    %s348 = sphi 0, %s334
    %s352 = sphi 0, %s352
    %s354 = sphi 0, %s352
    %s355 = sphi 0, %s354
    %s369 = sphi 0, %s355
    %s373 = sphi 0, %s373
    %s375 = sphi 0, %s373
    %s376 = sphi 0, %s375
    %s390 = sphi 0, %s376
    %s394 = sphi 0, %s394
    %s396 = sphi 0, %s394
    %s397 = sphi 0, %s396
    %s411 = sphi 0, %s397
    %s417 = sphi 0, %s419
    %s420 = sphi 0, %s417
    %s421 = sphi 0, %s420
    %s437 = sphi 0, %s421
  $region4: #{actor_forward.1} parent=0 // loop_header_branch
    %27 = sbr.rel (%p25) target = $region8
  $region5: #{actor_forward.1} parent=0 // loop_body
    %s29 = ssub.s32 %s24, 1
    %s30 = ssub.s32 %s24, 2
    %s31 = sadd.s32 %s24, 1
    %s32 = ssub.s32 %s24, %s31
    %p33 = scmp.eq.s32.totalorder %s32, 0
    %s35 = sadd.s32 %s34, 1
    %s36 = scalar_select %p33, %s34, %s35
    %p39 = pneg %p33
    %p40 = scmp.eq.s32.totalorder %s24, 1
    %p41 = por %p39, %p40
    %p42 = scmp.ne.s32.totalorder %s34, %s37
    %p43 = scmp.eq.s32.totalorder %s24, 0
    %p44 = por %p42, %p43
    %p45 = scmp.ne.s32.totalorder %s34, %s37
    %p46 = scmp.eq.s32.totalorder %s29, 1
    %p47 = por %p45, %p46
    %p48 = scmp.ne.s32.totalorder %s37, %s38
    %p49 = scmp.eq.s32.totalorder %s29, 0
    %p50 = por %p48, %p49
    %p51 = scmp.ne.s32.totalorder %s37, %s38
    %p52 = scmp.eq.s32.totalorder %s30, 1
    %p53 = por %p51, %p52
    %p55 = scmp.ne.s32.totalorder %s38, %s54
    %p56 = scmp.eq.s32.totalorder %s30, 0
    %p57 = por %p55, %p56
    %s59 = sadd.s32 %s58, 1
    %p62 = scmp.eq.s32.totalorder %s24, 1
    %p63 = scmp.ne.s32.totalorder %s58, %s60
    %p64 = scmp.eq.s32.totalorder %s24, 0
    %p65 = por %p63, %p64
    %p66 = scmp.ne.s32.totalorder %s58, %s60
    %p67 = scmp.eq.s32.totalorder %s29, 1
    %p68 = por %p66, %p67
    %p69 = scmp.ne.s32.totalorder %s60, %s61
    %p70 = scmp.eq.s32.totalorder %s29, 0
    %p71 = por %p69, %p70
    %p72 = scmp.ne.s32.totalorder %s60, %s61
    %p73 = scmp.eq.s32.totalorder %s30, 1
    %p74 = por %p72, %p73
    %p76 = scmp.ne.s32.totalorder %s61, %s75
    %p77 = scmp.eq.s32.totalorder %s30, 0
    %p78 = por %p76, %p77
    %s80 = sadd.s32 %s79, 1
    %p83 = scmp.eq.s32.totalorder %s24, 1
    %p84 = scmp.ne.s32.totalorder %s79, %s81
    %p85 = scmp.eq.s32.totalorder %s24, 0
    %p86 = por %p84, %p85
    %p87 = scmp.ne.s32.totalorder %s79, %s81
    %p88 = scmp.eq.s32.totalorder %s29, 1
    %p89 = por %p87, %p88
    %p90 = scmp.ne.s32.totalorder %s81, %s82
    %p91 = scmp.eq.s32.totalorder %s29, 0
    %p92 = por %p90, %p91
    %p93 = scmp.ne.s32.totalorder %s81, %s82
    %p94 = scmp.eq.s32.totalorder %s30, 1
    %p95 = por %p93, %p94
    %p97 = scmp.ne.s32.totalorder %s82, %s96
    %p98 = scmp.eq.s32.totalorder %s30, 0
    %p99 = por %p97, %p98
    %s101 = sadd.s32 %s100, 1
    %p104 = scmp.eq.s32.totalorder %s24, 1
    %p105 = scmp.ne.s32.totalorder %s100, %s102
    %p106 = scmp.eq.s32.totalorder %s24, 0
    %p107 = por %p105, %p106
    %p108 = scmp.ne.s32.totalorder %s100, %s102
    %p109 = scmp.eq.s32.totalorder %s29, 1
    %p110 = por %p108, %p109
    %p111 = scmp.ne.s32.totalorder %s102, %s103
    %p112 = scmp.eq.s32.totalorder %s29, 0
    %p113 = por %p111, %p112
    %p114 = scmp.ne.s32.totalorder %s102, %s103
    %p115 = scmp.eq.s32.totalorder %s30, 1
    %p116 = por %p114, %p115
    %p118 = scmp.ne.s32.totalorder %s103, %s117
    %p119 = scmp.eq.s32.totalorder %s30, 0
    %p120 = por %p118, %p119
    %s122 = sadd.s32 %s121, 1
    %p125 = scmp.eq.s32.totalorder %s24, 1
    %p126 = scmp.ne.s32.totalorder %s121, %s123
    %p127 = scmp.eq.s32.totalorder %s24, 0
    %p128 = por %p126, %p127
    %p129 = scmp.ne.s32.totalorder %s121, %s123
    %p130 = scmp.eq.s32.totalorder %s29, 1
    %p131 = por %p129, %p130
    %p132 = scmp.ne.s32.totalorder %s123, %s124
    %p133 = scmp.eq.s32.totalorder %s29, 0
    %p134 = por %p132, %p133
    %p135 = scmp.ne.s32.totalorder %s123, %s124
    %p136 = scmp.eq.s32.totalorder %s30, 1
    %p137 = por %p135, %p136
    %p139 = scmp.ne.s32.totalorder %s124, %s138
    %p140 = scmp.eq.s32.totalorder %s30, 0
    %p141 = por %p139, %p140
    %s143 = sadd.s32 %s142, 1
    %p146 = scmp.eq.s32.totalorder %s24, 1
    %p147 = scmp.ne.s32.totalorder %s142, %s144
    %p148 = scmp.eq.s32.totalorder %s24, 0
    %p149 = por %p147, %p148
    %p150 = scmp.ne.s32.totalorder %s142, %s144
    %p151 = scmp.eq.s32.totalorder %s29, 1
    %p152 = por %p150, %p151
    %p153 = scmp.ne.s32.totalorder %s144, %s145
    %p154 = scmp.eq.s32.totalorder %s29, 0
    %p155 = por %p153, %p154
    %p156 = scmp.ne.s32.totalorder %s144, %s145
    %p157 = scmp.eq.s32.totalorder %s30, 1
    %p158 = por %p156, %p157
    %p160 = scmp.ne.s32.totalorder %s145, %s159
    %p161 = scmp.eq.s32.totalorder %s30, 0
    %p162 = por %p160, %p161
    %s164 = sadd.s32 %s163, 1
    %p167 = scmp.eq.s32.totalorder %s24, 1
    %p168 = scmp.ne.s32.totalorder %s163, %s165
    %p169 = scmp.eq.s32.totalorder %s24, 0
    %p170 = por %p168, %p169
    %p171 = scmp.ne.s32.totalorder %s163, %s165
    %p172 = scmp.eq.s32.totalorder %s29, 1
    %p173 = por %p171, %p172
    %p174 = scmp.ne.s32.totalorder %s165, %s166
    %p175 = scmp.eq.s32.totalorder %s29, 0
    %p176 = por %p174, %p175
    %p177 = scmp.ne.s32.totalorder %s165, %s166
    %p178 = scmp.eq.s32.totalorder %s30, 1
    %p179 = por %p177, %p178
    %p181 = scmp.ne.s32.totalorder %s166, %s180
    %p182 = scmp.eq.s32.totalorder %s30, 0
    %p183 = por %p181, %p182
    %s185 = sadd.s32 %s184, 1
    %p188 = scmp.eq.s32.totalorder %s24, 1
    %p189 = scmp.ne.s32.totalorder %s184, %s186
    %p190 = scmp.eq.s32.totalorder %s24, 0
    %p191 = por %p189, %p190
    %p192 = scmp.ne.s32.totalorder %s184, %s186
    %p193 = scmp.eq.s32.totalorder %s29, 1
    %p194 = por %p192, %p193
    %p195 = scmp.ne.s32.totalorder %s186, %s187
    %p196 = scmp.eq.s32.totalorder %s29, 0
    %p197 = por %p195, %p196
    %p198 = scmp.ne.s32.totalorder %s186, %s187
    %p199 = scmp.eq.s32.totalorder %s30, 1
    %p200 = por %p198, %p199
    %p202 = scmp.ne.s32.totalorder %s187, %s201
    %p203 = scmp.eq.s32.totalorder %s30, 0
    %p204 = por %p202, %p203
    %s206 = sadd.s32 %s205, 1
    %p209 = scmp.eq.s32.totalorder %s24, 1
    %p210 = scmp.ne.s32.totalorder %s205, %s207
    %p211 = scmp.eq.s32.totalorder %s24, 0
    %p212 = por %p210, %p211
    %p213 = scmp.ne.s32.totalorder %s205, %s207
    %p214 = scmp.eq.s32.totalorder %s29, 1
    %p215 = por %p213, %p214
    %p216 = scmp.ne.s32.totalorder %s207, %s208
    %p217 = scmp.eq.s32.totalorder %s29, 0
    %p218 = por %p216, %p217
    %p219 = scmp.ne.s32.totalorder %s207, %s208
    %p220 = scmp.eq.s32.totalorder %s30, 1
    %p221 = por %p219, %p220
    %p223 = scmp.ne.s32.totalorder %s208, %s222
    %p224 = scmp.eq.s32.totalorder %s30, 0
    %p225 = por %p223, %p224
    %s227 = sadd.s32 %s226, 1
    %p230 = scmp.eq.s32.totalorder %s24, 1
    %p231 = scmp.ne.s32.totalorder %s226, %s228
    %p232 = scmp.eq.s32.totalorder %s24, 0
    %p233 = por %p231, %p232
    %p234 = scmp.ne.s32.totalorder %s226, %s228
    %p235 = scmp.eq.s32.totalorder %s29, 1
    %p236 = por %p234, %p235
    %p237 = scmp.ne.s32.totalorder %s228, %s229
    %p238 = scmp.eq.s32.totalorder %s29, 0
    %p239 = por %p237, %p238
    %p240 = scmp.ne.s32.totalorder %s228, %s229
    %p241 = scmp.eq.s32.totalorder %s30, 1
    %p242 = por %p240, %p241
    %p244 = scmp.ne.s32.totalorder %s229, %s243
    %p245 = scmp.eq.s32.totalorder %s30, 0
    %p246 = por %p244, %p245
    %s248 = sadd.s32 %s247, 1
    %p251 = scmp.eq.s32.totalorder %s24, 1
    %p252 = scmp.ne.s32.totalorder %s247, %s249
    %p253 = scmp.eq.s32.totalorder %s24, 0
    %p254 = por %p252, %p253
    %p255 = scmp.ne.s32.totalorder %s247, %s249
    %p256 = scmp.eq.s32.totalorder %s29, 1
    %p257 = por %p255, %p256
    %p258 = scmp.ne.s32.totalorder %s249, %s250
    %p259 = scmp.eq.s32.totalorder %s29, 0
    %p260 = por %p258, %p259
    %p261 = scmp.ne.s32.totalorder %s249, %s250
    %p262 = scmp.eq.s32.totalorder %s30, 1
    %p263 = por %p261, %p262
    %p265 = scmp.ne.s32.totalorder %s250, %s264
    %p266 = scmp.eq.s32.totalorder %s30, 0
    %p267 = por %p265, %p266
    %s269 = sadd.s32 %s268, 1
    %p272 = scmp.eq.s32.totalorder %s24, 1
    %p273 = scmp.ne.s32.totalorder %s268, %s270
    %p274 = scmp.eq.s32.totalorder %s24, 0
    %p275 = por %p273, %p274
    %p276 = scmp.ne.s32.totalorder %s268, %s270
    %p277 = scmp.eq.s32.totalorder %s29, 1
    %p278 = por %p276, %p277
    %p279 = scmp.ne.s32.totalorder %s270, %s271
    %p280 = scmp.eq.s32.totalorder %s29, 0
    %p281 = por %p279, %p280
    %p282 = scmp.ne.s32.totalorder %s270, %s271
    %p283 = scmp.eq.s32.totalorder %s30, 1
    %p284 = por %p282, %p283
    %p286 = scmp.ne.s32.totalorder %s271, %s285
    %p287 = scmp.eq.s32.totalorder %s30, 0
    %p288 = por %p286, %p287
    %s290 = sadd.s32 %s289, 1
    %p293 = scmp.eq.s32.totalorder %s24, 1
    %p294 = scmp.ne.s32.totalorder %s289, %s291
    %p295 = scmp.eq.s32.totalorder %s24, 0
    %p296 = por %p294, %p295
    %p297 = scmp.ne.s32.totalorder %s289, %s291
    %p298 = scmp.eq.s32.totalorder %s29, 1
    %p299 = por %p297, %p298
    %p300 = scmp.ne.s32.totalorder %s291, %s292
    %p301 = scmp.eq.s32.totalorder %s29, 0
    %p302 = por %p300, %p301
    %p303 = scmp.ne.s32.totalorder %s291, %s292
    %p304 = scmp.eq.s32.totalorder %s30, 1
    %p305 = por %p303, %p304
    %p307 = scmp.ne.s32.totalorder %s292, %s306
    %p308 = scmp.eq.s32.totalorder %s30, 0
    %p309 = por %p307, %p308
    %s311 = sadd.s32 %s310, 1
    %p314 = scmp.eq.s32.totalorder %s24, 1
    %p315 = scmp.ne.s32.totalorder %s310, %s312
    %p316 = scmp.eq.s32.totalorder %s24, 0
    %p317 = por %p315, %p316
    %p318 = scmp.ne.s32.totalorder %s310, %s312
    %p319 = scmp.eq.s32.totalorder %s29, 1
    %p320 = por %p318, %p319
    %p321 = scmp.ne.s32.totalorder %s312, %s313
    %p322 = scmp.eq.s32.totalorder %s29, 0
    %p323 = por %p321, %p322
    %p324 = scmp.ne.s32.totalorder %s312, %s313
    %p325 = scmp.eq.s32.totalorder %s30, 1
    %p326 = por %p324, %p325
    %p328 = scmp.ne.s32.totalorder %s313, %s327
    %p329 = scmp.eq.s32.totalorder %s30, 0
    %p330 = por %p328, %p329
    %s332 = sadd.s32 %s331, 1
    %p335 = scmp.eq.s32.totalorder %s24, 1
    %p336 = scmp.ne.s32.totalorder %s331, %s333
    %p337 = scmp.eq.s32.totalorder %s24, 0
    %p338 = por %p336, %p337
    %p339 = scmp.ne.s32.totalorder %s331, %s333
    %p340 = scmp.eq.s32.totalorder %s29, 1
    %p341 = por %p339, %p340
    %p342 = scmp.ne.s32.totalorder %s333, %s334
    %p343 = scmp.eq.s32.totalorder %s29, 0
    %p344 = por %p342, %p343
    %p345 = scmp.ne.s32.totalorder %s333, %s334
    %p346 = scmp.eq.s32.totalorder %s30, 1
    %p347 = por %p345, %p346
    %p349 = scmp.ne.s32.totalorder %s334, %s348
    %p350 = scmp.eq.s32.totalorder %s30, 0
    %p351 = por %p349, %p350
    %s353 = sadd.s32 %s352, 1
    %p356 = scmp.eq.s32.totalorder %s24, 1
    %p357 = scmp.ne.s32.totalorder %s352, %s354
    %p358 = scmp.eq.s32.totalorder %s24, 0
    %p359 = por %p357, %p358
    %p360 = scmp.ne.s32.totalorder %s352, %s354
    %p361 = scmp.eq.s32.totalorder %s29, 1
    %p362 = por %p360, %p361
    %p363 = scmp.ne.s32.totalorder %s354, %s355
    %p364 = scmp.eq.s32.totalorder %s29, 0
    %p365 = por %p363, %p364
    %p366 = scmp.ne.s32.totalorder %s354, %s355
    %p367 = scmp.eq.s32.totalorder %s30, 1
    %p368 = por %p366, %p367
    %p370 = scmp.ne.s32.totalorder %s355, %s369
    %p371 = scmp.eq.s32.totalorder %s30, 0
    %p372 = por %p370, %p371
    %s374 = sadd.s32 %s373, 1
    %p377 = scmp.eq.s32.totalorder %s24, 1
    %p378 = scmp.ne.s32.totalorder %s373, %s375
    %p379 = scmp.eq.s32.totalorder %s24, 0
    %p380 = por %p378, %p379
    %p381 = scmp.ne.s32.totalorder %s373, %s375
    %p382 = scmp.eq.s32.totalorder %s29, 1
    %p383 = por %p381, %p382
    %p384 = scmp.ne.s32.totalorder %s375, %s376
    %p385 = scmp.eq.s32.totalorder %s29, 0
    %p386 = por %p384, %p385
    %p387 = scmp.ne.s32.totalorder %s375, %s376
    %p388 = scmp.eq.s32.totalorder %s30, 1
    %p389 = por %p387, %p388
    %p391 = scmp.ne.s32.totalorder %s376, %s390
    %p392 = scmp.eq.s32.totalorder %s30, 0
    %p393 = por %p391, %p392
    %s395 = sadd.s32 %s394, 1
    %p398 = scmp.eq.s32.totalorder %s24, 1
    %p399 = scmp.ne.s32.totalorder %s394, %s396
    %p400 = scmp.eq.s32.totalorder %s24, 0
    %p401 = por %p399, %p400
    %p402 = scmp.ne.s32.totalorder %s394, %s396
    %p403 = scmp.eq.s32.totalorder %s29, 1
    %p404 = por %p402, %p403
    %p405 = scmp.ne.s32.totalorder %s396, %s397
    %p406 = scmp.eq.s32.totalorder %s29, 0
    %p407 = por %p405, %p406
    %p408 = scmp.ne.s32.totalorder %s396, %s397
    %p409 = scmp.eq.s32.totalorder %s30, 1
    %p410 = por %p408, %p409
    %p412 = scmp.ne.s32.totalorder %s397, %s411
    %p413 = scmp.eq.s32.totalorder %s30, 0
    %p414 = por %p412, %p413
    %s415 = ssub.s32 %s24, %s31
    %p416 = scmp.eq.s32.totalorder %s415, 0
    %s418 = sadd.s32 %s417, 1
    %s419 = scalar_select %p416, %s417, %s418
    %p422 = pneg %p416
    %p423 = scmp.eq.s32.totalorder %s24, 1
    %p424 = por %p422, %p423
    %p425 = scmp.ne.s32.totalorder %s417, %s420
    %p426 = scmp.eq.s32.totalorder %s24, 0
    %p427 = por %p425, %p426
    %p428 = scmp.ne.s32.totalorder %s417, %s420
    %p429 = scmp.eq.s32.totalorder %s29, 1
    %p430 = por %p428, %p429
    %p431 = scmp.ne.s32.totalorder %s420, %s421
    %p432 = scmp.eq.s32.totalorder %s29, 0
    %p433 = por %p431, %p432
    %p434 = scmp.ne.s32.totalorder %s420, %s421
    %p435 = scmp.eq.s32.totalorder %s30, 1
    %p436 = por %p434, %p435
    %p438 = scmp.ne.s32.totalorder %s421, %s437
    %p439 = scmp.eq.s32.totalorder %s30, 0
    %p440 = por %p438, %p439
    %p441 = scmp.le.s32.totalorder 1, %s24
    %p442 = scmp.lt.s32.totalorder %s24, 3
    %p443 = pnand %p441, %p442
    %p444 = pneg %p443
    // Predicated region
    $region9: #{actor_forward.1} parent=5 // pred_check
      _
    $region10: #{actor_forward.1} parent=5 // pred_check_branch
      %446 = sbr.rel (%p443) target = $region12
    $region11: #{actor_forward.1} parent=5 // pred_region
      %s447 = ssub.s32 %s24, 1
      // Predicated region
      $region13: #{actor_forward.1} parent=11 // pred_check
        %p448 = pneg %p71
      $region14: #{actor_forward.1} parent=11 // pred_check_branch
        %450 = sbr.rel (%p448) target = $region16
      $region15: #{actor_forward.1} parent=11 // pred_region
        _
      $region16: #{actor_forward.1} parent=11 // pred_fallthru
        _
      // Predicated region
      $region17: #{actor_forward.1} parent=11 // pred_check
        %p451 = pneg %p92
      $region18: #{actor_forward.1} parent=11 // pred_check_branch
        %453 = sbr.rel (%p451) target = $region20
      $region19: #{actor_forward.1} parent=11 // pred_region
        _
      $region20: #{actor_forward.1} parent=11 // pred_fallthru
        _
      // Predicated region
      $region21: #{actor_forward.1} parent=11 // pred_check
        %p454 = pneg %p113
      $region22: #{actor_forward.1} parent=11 // pred_check_branch
        %456 = sbr.rel (%p454) target = $region24
      $region23: #{actor_forward.1} parent=11 // pred_region
        _
      $region24: #{actor_forward.1} parent=11 // pred_fallthru
        _
      // Predicated region
      $region25: #{actor_forward.1} parent=11 // pred_check
        %p457 = pneg %p134
      $region26: #{actor_forward.1} parent=11 // pred_check_branch
        %459 = sbr.rel (%p457) target = $region28
      $region27: #{actor_forward.1} parent=11 // pred_region
        _
      $region28: #{actor_forward.1} parent=11 // pred_fallthru
        _
      // Predicated region
      $region29: #{actor_forward.1} parent=11 // pred_check
        %p460 = pneg %p155
      $region30: #{actor_forward.1} parent=11 // pred_check_branch
        %462 = sbr.rel (%p460) target = $region32
      $region31: #{actor_forward.1} parent=11 // pred_region
        _
      $region32: #{actor_forward.1} parent=11 // pred_fallthru
        _
      // Predicated region
      $region33: #{actor_forward.1} parent=11 // pred_check
        %p463 = pneg %p176
      $region34: #{actor_forward.1} parent=11 // pred_check_branch
        %465 = sbr.rel (%p463) target = $region36
      $region35: #{actor_forward.1} parent=11 // pred_region
        _
      $region36: #{actor_forward.1} parent=11 // pred_fallthru
        _
      // Predicated region
      $region37: #{actor_forward.1} parent=11 // pred_check
        %p466 = pneg %p197
      $region38: #{actor_forward.1} parent=11 // pred_check_branch
        %468 = sbr.rel (%p466) target = $region40
      $region39: #{actor_forward.1} parent=11 // pred_region
        _
      $region40: #{actor_forward.1} parent=11 // pred_fallthru
        _
      // Predicated region
      $region41: #{actor_forward.1} parent=11 // pred_check
        %p469 = pneg %p218
      $region42: #{actor_forward.1} parent=11 // pred_check_branch
        %471 = sbr.rel (%p469) target = $region44
      $region43: #{actor_forward.1} parent=11 // pred_region
        _
      $region44: #{actor_forward.1} parent=11 // pred_fallthru
        _
      // Predicated region
      $region45: #{actor_forward.1} parent=11 // pred_check
        %p472 = pneg %p239
      $region46: #{actor_forward.1} parent=11 // pred_check_branch
        %474 = sbr.rel (%p472) target = $region48
      $region47: #{actor_forward.1} parent=11 // pred_region
        _
      $region48: #{actor_forward.1} parent=11 // pred_fallthru
        _
      // Predicated region
      $region49: #{actor_forward.1} parent=11 // pred_check
        %p475 = pneg %p260
      $region50: #{actor_forward.1} parent=11 // pred_check_branch
        %477 = sbr.rel (%p475) target = $region52
      $region51: #{actor_forward.1} parent=11 // pred_region
        _
      $region52: #{actor_forward.1} parent=11 // pred_fallthru
        _
      // Predicated region
      $region53: #{actor_forward.1} parent=11 // pred_check
        %p478 = pneg %p281
      $region54: #{actor_forward.1} parent=11 // pred_check_branch
        %480 = sbr.rel (%p478) target = $region56
      $region55: #{actor_forward.1} parent=11 // pred_region
        _
      $region56: #{actor_forward.1} parent=11 // pred_fallthru
        _
      // Predicated region
      $region57: #{actor_forward.1} parent=11 // pred_check
        %p481 = pneg %p302
      $region58: #{actor_forward.1} parent=11 // pred_check_branch
        %483 = sbr.rel (%p481) target = $region60
      $region59: #{actor_forward.1} parent=11 // pred_region
        _
      $region60: #{actor_forward.1} parent=11 // pred_fallthru
        _
      // Predicated region
      $region61: #{actor_forward.1} parent=11 // pred_check
        %p484 = pneg %p323
      $region62: #{actor_forward.1} parent=11 // pred_check_branch
        %486 = sbr.rel (%p484) target = $region64
      $region63: #{actor_forward.1} parent=11 // pred_region
        _
      $region64: #{actor_forward.1} parent=11 // pred_fallthru
        _
      // Predicated region
      $region65: #{actor_forward.1} parent=11 // pred_check
        %p487 = pneg %p344
      $region66: #{actor_forward.1} parent=11 // pred_check_branch
        %489 = sbr.rel (%p487) target = $region68
      $region67: #{actor_forward.1} parent=11 // pred_region
        _
      $region68: #{actor_forward.1} parent=11 // pred_fallthru
        _
      // Predicated region
      $region69: #{actor_forward.1} parent=11 // pred_check
        %p490 = pneg %p365
      $region70: #{actor_forward.1} parent=11 // pred_check_branch
        %492 = sbr.rel (%p490) target = $region72
      $region71: #{actor_forward.1} parent=11 // pred_region
        _
      $region72: #{actor_forward.1} parent=11 // pred_fallthru
        _
      // Predicated region
      $region73: #{actor_forward.1} parent=11 // pred_check
        %p493 = pneg %p386
      $region74: #{actor_forward.1} parent=11 // pred_check_branch
        %495 = sbr.rel (%p493) target = $region76
      $region75: #{actor_forward.1} parent=11 // pred_region
        _
      $region76: #{actor_forward.1} parent=11 // pred_fallthru
        _
      // Predicated region
      $region77: #{actor_forward.1} parent=11 // pred_check
        %p496 = pneg %p407
      $region78: #{actor_forward.1} parent=11 // pred_check_branch
        %498 = sbr.rel (%p496) target = $region80
      $region79: #{actor_forward.1} parent=11 // pred_region
        _
      $region80: #{actor_forward.1} parent=11 // pred_fallthru
        _
    $region12: #{actor_forward.1} parent=5 // pred_fallthru
      _
    %p499 = scmp.lt.s32.totalorder %s24, 2
    // Predicated region
    $region81: #{actor_forward.1} parent=5 // pred_check
      %p500 = pneg %p499
    $region82: #{actor_forward.1} parent=5 // pred_check_branch
      %502 = sbr.rel (%p500) target = $region84
    $region83: #{actor_forward.1} parent=5 // pred_region
      // Predicated region
      $region85: #{actor_forward.1} parent=83 // pred_check
        %p503 = pneg %p44
      $region86: #{actor_forward.1} parent=83 // pred_check_branch
        %505 = sbr.rel (%p503) target = $region88
      $region87: #{actor_forward.1} parent=83 // pred_region
        %p506 = scmp.lt.s32.totalorder %s24, 1
        %s507 = scalar_select %p506, %s24, 1
        %s508 = smul.addr %s507, 8
        %s509 = scalar_lea.vmem %s0, %s508
      $region88: #{actor_forward.1} parent=83 // pred_fallthru
        _
    $region84: #{actor_forward.1} parent=5 // pred_fallthru
      _
    %p510 = scmp.le.s32.totalorder 1, %s24
    %p511 = scmp.lt.s32.totalorder %s24, 3
    %p512 = pnand %p510, %p511
    %p513 = pneg %p512
    // Predicated region
    $region89: #{actor_forward.1} parent=5 // pred_check
      _
    $region90: #{actor_forward.1} parent=5 // pred_check_branch
      %515 = sbr.rel (%p512) target = $region92
    $region91: #{actor_forward.1} parent=5 // pred_region
      %s516 = ssub.s32 %s24, 1
      %p517 = scmp.lt.s32.totalorder %s29, 1
      %s518 = scalar_select %p517, %s29, 1
      %s519 = smul.addr %s518, 8
      %s520 = scalar_lea.vmem %s0, %s519
      %p521 = pneg %p50
      %p522 = pneg %p47
      %p523 = pneg %p71
      %p524 = pneg %p68
      %p525 = pneg %p92
      %p526 = pneg %p89
      %p527 = pneg %p113
      %p528 = pneg %p110
      %p529 = pneg %p134
      %p530 = pneg %p131
      %p531 = pneg %p155
      %p532 = pneg %p152
      %p533 = pneg %p176
      %p534 = pneg %p173
      %p535 = pneg %p197
      %p536 = pneg %p194
      %p537 = pneg %p218
      %p538 = pneg %p215
      %p539 = pneg %p239
      %p540 = pneg %p236
      %p541 = pneg %p260
      %p542 = pneg %p257
      %p543 = pneg %p281
      %p544 = pneg %p278
      %p545 = pneg %p302
      %p546 = pneg %p299
      %p547 = pneg %p323
      %p548 = pneg %p320
      %p549 = pneg %p344
      %p550 = pneg %p341
      %p551 = pneg %p365
      %p552 = pneg %p362
      %p553 = pneg %p386
      %p554 = pneg %p383
      %p555 = pneg %p407
      %p556 = pneg %p404
      %p557 = pneg %p433
      %p558 = pneg %p430
      %p559 = scmp.lt.s32.totalorder %s29, 1
      %s560 = scalar_select %p559, %s29, 1
      %s561 = smul.addr %s560, 8
      %s562 = scalar_lea.vmem %s18, %s561
      %p563 = scmp.lt.s32.totalorder %s29, 1
      %s564 = scalar_select %p563, %s29, 1
      %s565 = smul.addr %s564, 8
      %s566 = scalar_lea.vmem %s0, %s565
      %p567 = scmp.lt.s32.totalorder %s29, 1
      %s568 = scalar_select %p567, %s29, 1
      %s569 = smul.addr %s568, 8
      %s570 = scalar_lea.vmem %s18, %s569
      %v571 = vld [vmem:[%s566] sm:$0xff]
      %v572 = vld [vmem:[%s1] sm:$0xff]
      %v573 = vld [vmem:[%s1 + $0x8] sm:$0xff]
      %v574 = vld [vmem:[%s1 + $0x10] sm:$0xff]
      %v575 = vld [vmem:[%s1 + $0x18] sm:$0xff]
      %v576 = vld [vmem:[%s1 + $0x20] sm:$0xff]
      %v577 = vld [vmem:[%s1 + $0x28] sm:$0xff]
      %v578 = vld [vmem:[%s1 + $0x30] sm:$0xff]
      %v579 = vld [vmem:[%s1 + $0x38] sm:$0xff]
      %v580 = vld [vmem:[%s1 + $0x40] sm:$0xff]
      %v581 = vld [vmem:[%s1 + $0x48] sm:$0xff]
      %v582 = vld [vmem:[%s1 + $0x50] sm:$0xff]
      %v583 = vld [vmem:[%s1 + $0x58] sm:$0xff]
      %v584 = vld [vmem:[%s1 + $0x60] sm:$0xff]
      %v585 = vld [vmem:[%s1 + $0x68] sm:$0xff]
      %v586 = vld [vmem:[%s1 + $0x70] sm:$0xff]
      %v587 = vld [vmem:[%s1 + $0x78] sm:$0xff]
      %v588 = vld [vmem:[%s1 + $0x80] sm:$0xff]
      %v589 = vld [vmem:[%s1 + $0x88] sm:$0xff]
      %v590 = vld [vmem:[%s1 + $0x90] sm:$0xff]
      %v591 = vld [vmem:[%s1 + $0x98] sm:$0xff]
      %v592 = vld [vmem:[%s1 + $0xa0] sm:$0xff]
      %v593 = vld [vmem:[%s1 + $0xa8] sm:$0xff]
      %v594 = vld [vmem:[%s1 + $0xb0] sm:$0xff]
      %v595 = vld [vmem:[%s1 + $0xb8] sm:$0xff]
      %v596 = vld [vmem:[%s1 + $0xc0] sm:$0xff]
      %v597 = vld [vmem:[%s1 + $0xc8] sm:$0xff]
      %v598 = vld [vmem:[%s1 + $0xd0] sm:$0xff]
      %v599 = vld [vmem:[%s1 + $0xd8] sm:$0xff]
      %v600 = vld [vmem:[%s1 + $0xe0] sm:$0xff]
      %v601 = vld [vmem:[%s1 + $0xe8] sm:$0xff]
      %v602 = vld [vmem:[%s1 + $0xf0] sm:$0xff]
      %v603 = vld [vmem:[%s1 + $0xf8] sm:$0xff]
      %v604 = vld [vmem:[%s1 + $0x100] sm:$0xff]
      %v605 = vld [vmem:[%s1 + $0x108] sm:$0xff]
      %v606 = vld [vmem:[%s1 + $0x110] sm:$0xff]
      %v607 = vld [vmem:[%s1 + $0x118] sm:$0xff]
      %v608 = vld [vmem:[%s1 + $0x120] sm:$0xff]
      %v609 = vld [vmem:[%s1 + $0x128] sm:$0xff]
      %v610 = vld [vmem:[%s1 + $0x130] sm:$0xff]
      %v611 = vld [vmem:[%s1 + $0x138] sm:$0xff]
      %v612 = vld [vmem:[%s1 + $0x140] sm:$0xff]
      %v613 = vld [vmem:[%s1 + $0x148] sm:$0xff]
      %v614 = vld [vmem:[%s1 + $0x150] sm:$0xff]
      %v615 = vld [vmem:[%s1 + $0x158] sm:$0xff]
      %v616 = vld [vmem:[%s1 + $0x160] sm:$0xff]
      %v617 = vld [vmem:[%s1 + $0x168] sm:$0xff]
      %v618 = vld [vmem:[%s1 + $0x170] sm:$0xff]
      %v619 = vld [vmem:[%s1 + $0x178] sm:$0xff]
      %v620 = vld [vmem:[%s1 + $0x180] sm:$0xff]
      %v621 = vld [vmem:[%s1 + $0x188] sm:$0xff]
      %v622 = vld [vmem:[%s1 + $0x190] sm:$0xff]
      %v623 = vld [vmem:[%s1 + $0x198] sm:$0xff]
      %v624 = vld [vmem:[%s1 + $0x1a0] sm:$0xff]
      %v625 = vld [vmem:[%s1 + $0x1a8] sm:$0xff]
      %v626 = vld [vmem:[%s1 + $0x1b0] sm:$0xff]
      %v627 = vld [vmem:[%s1 + $0x1b8] sm:$0xff]
      %v628 = vld [vmem:[%s1 + $0x1c0] sm:$0xff]
      %v629 = vld [vmem:[%s1 + $0x1c8] sm:$0xff]
      %v630 = vld [vmem:[%s1 + $0x1d0] sm:$0xff]
      %v631 = vld [vmem:[%s1 + $0x1d8] sm:$0xff]
      %v632 = vld [vmem:[%s1 + $0x1e0] sm:$0xff]
      %v633 = vld [vmem:[%s1 + $0x1e8] sm:$0xff]
      %v634 = vld [vmem:[%s1 + $0x1f0] sm:$0xff]
      %v635 = vld [vmem:[%s1 + $0x1f8] sm:$0xff]
      %v636 = vld [vmem:[%s1 + $0x200] sm:$0xff]
      %v637 = vld [vmem:[%s1 + $0x208] sm:$0xff]
      %v638 = vld [vmem:[%s1 + $0x210] sm:$0xff]
      %v639 = vld [vmem:[%s1 + $0x218] sm:$0xff]
      %v640 = vld [vmem:[%s1 + $0x220] sm:$0xff]
      %v641 = vld [vmem:[%s1 + $0x228] sm:$0xff]
      %v642 = vld [vmem:[%s1 + $0x230] sm:$0xff]
      %v643 = vld [vmem:[%s1 + $0x238] sm:$0xff]
      %v644 = vld [vmem:[%s1 + $0x240] sm:$0xff]
      %v645 = vld [vmem:[%s1 + $0x248] sm:$0xff]
      %v646 = vld [vmem:[%s1 + $0x250] sm:$0xff]
      %v647 = vld [vmem:[%s1 + $0x258] sm:$0xff]
      %v648 = vld [vmem:[%s1 + $0x260] sm:$0xff]
      %v649 = vld [vmem:[%s1 + $0x268] sm:$0xff]
      %v650 = vld [vmem:[%s1 + $0x270] sm:$0xff]
      %v651 = vld [vmem:[%s1 + $0x278] sm:$0xff]
      %v652 = vld [vmem:[%s1 + $0x280] sm:$0xff]
      %v653 = vld [vmem:[%s1 + $0x288] sm:$0xff]
      %v654 = vld [vmem:[%s1 + $0x290] sm:$0xff]
      %v655 = vld [vmem:[%s1 + $0x298] sm:$0xff]
      %v656 = vld [vmem:[%s1 + $0x2a0] sm:$0xff]
      %v657 = vld [vmem:[%s1 + $0x2a8] sm:$0xff]
      %v658 = vld [vmem:[%s1 + $0x2b0] sm:$0xff]
      %v659 = vld [vmem:[%s1 + $0x2b8] sm:$0xff]
      %v660 = vld [vmem:[%s1 + $0x2c0] sm:$0xff]
      %v661 = vld [vmem:[%s1 + $0x2c8] sm:$0xff]
      %v662 = vld [vmem:[%s1 + $0x2d0] sm:$0xff]
      %v663 = vld [vmem:[%s1 + $0x2d8] sm:$0xff]
      %v664 = vld [vmem:[%s1 + $0x2e0] sm:$0xff]
      %v665 = vld [vmem:[%s1 + $0x2e8] sm:$0xff]
      %v666 = vld [vmem:[%s1 + $0x2f0] sm:$0xff]
      %v667 = vld [vmem:[%s1 + $0x2f8] sm:$0xff]
      %v668 = vld [vmem:[%s1 + $0x300] sm:$0xff]
      %v669 = vld [vmem:[%s1 + $0x308] sm:$0xff]
      %v670 = vld [vmem:[%s1 + $0x310] sm:$0xff]
      %v671 = vld [vmem:[%s1 + $0x318] sm:$0xff]
      %v672 = vld [vmem:[%s1 + $0x320] sm:$0xff]
      %v673 = vld [vmem:[%s1 + $0x328] sm:$0xff]
      %v674 = vld [vmem:[%s1 + $0x330] sm:$0xff]
      %v675 = vld [vmem:[%s1 + $0x338] sm:$0xff]
      %v676 = vld [vmem:[%s1 + $0x340] sm:$0xff]
      %v677 = vld [vmem:[%s1 + $0x348] sm:$0xff]
      %v678 = vld [vmem:[%s1 + $0x350] sm:$0xff]
      %v679 = vld [vmem:[%s1 + $0x358] sm:$0xff]
      %v680 = vld [vmem:[%s1 + $0x360] sm:$0xff]
      %v681 = vld [vmem:[%s1 + $0x368] sm:$0xff]
      %v682 = vld [vmem:[%s1 + $0x370] sm:$0xff]
      %v683 = vld [vmem:[%s1 + $0x378] sm:$0xff]
      %v684 = vld [vmem:[%s1 + $0x380] sm:$0xff]
      %v685 = vld [vmem:[%s1 + $0x388] sm:$0xff]
      %v686 = vld [vmem:[%s1 + $0x390] sm:$0xff]
      %v687 = vld [vmem:[%s1 + $0x398] sm:$0xff]
      %v688 = vld [vmem:[%s1 + $0x3a0] sm:$0xff]
      %v689 = vld [vmem:[%s1 + $0x3a8] sm:$0xff]
      %v690 = vld [vmem:[%s1 + $0x3b0] sm:$0xff]
      %v691 = vld [vmem:[%s1 + $0x3b8] sm:$0xff]
      %v692 = vld [vmem:[%s1 + $0x3c0] sm:$0xff]
      %v693 = vld [vmem:[%s1 + $0x3c8] sm:$0xff]
      %v694 = vld [vmem:[%s1 + $0x3d0] sm:$0xff]
      %v695 = vld [vmem:[%s1 + $0x3d8] sm:$0xff]
      %v696 = vld [vmem:[%s1 + $0x3e0] sm:$0xff]
      %v697 = vld [vmem:[%s1 + $0x3e8] sm:$0xff]
      %v698 = vld [vmem:[%s1 + $0x3f0] sm:$0xff]
      %v699 = vld [vmem:[%s1 + $0x3f8] sm:$0xff]
      %v700 = vld [vmem:[%s2] sm:$0xff]
      %v702 = vlaneseq
      %v703 = vshrl.u32 %v702, 7
      %v704 = vsub.s32 0, %v703
      %v705 = vrot.slane %v700, %v704
      %v706 = vlaneseq
      %v707 = vshrl.u32 %v706, 7
      %v708 = vsub.s32 1, %v707
      %v709 = vrot.slane %v700, %v708
      %v710 = vlaneseq
      %v711 = vshrl.u32 %v710, 7
      %v712 = vsub.s32 2, %v711
      %v713 = vrot.slane %v700, %v712
      %v714 = vlaneseq
      %v715 = vshrl.u32 %v714, 7
      %v716 = vsub.s32 3, %v715
      %v717 = vrot.slane %v700, %v716
      %v718 = vlaneseq
      %v719 = vshrl.u32 %v718, 7
      %v720 = vsub.s32 4, %v719
      %v721 = vrot.slane %v700, %v720
      %v722 = vlaneseq
      %v723 = vshrl.u32 %v722, 7
      %v724 = vsub.s32 5, %v723
      %v725 = vrot.slane %v700, %v724
      %v726 = vlaneseq
      %v727 = vshrl.u32 %v726, 7
      %v728 = vsub.s32 6, %v727
      %v729 = vrot.slane %v700, %v728
      %v730 = vlaneseq
      %v731 = vshrl.u32 %v730, 7
      %v732 = vsub.s32 7, %v731
      %v733 = vrot.slane %v700, %v732
      %742 = vmatprep.subr.mxu0 %v573
      %743 = vmatpush1.msra.mxu0 %v572
      %744 = vmatprep.subr.mxu0 %v581
      %745 = vmatpush1.msra.mxu0 %v580
      %746 = vmatprep.subr.mxu0 %v589
      %747 = vmatpush1.msra.mxu0 %v588
      %748 = vmatprep.subr.mxu0 %v597
      %749 = vmatpush1.msra.mxu0 %v596
      %750 = vmatprep.subr.mxu0 %v605
      %751 = vmatpush1.msra.mxu0 %v604
      %752 = vmatprep.subr.mxu0 %v613
      %753 = vmatpush1.msra.mxu0 %v612
      %754 = vmatprep.subr.mxu0 %v621
      %755 = vmatpush1.msra.mxu0 %v620
      %756 = vmatprep.subr.mxu0 %v629
      %757 = vmatpush1.msra.mxu0 %v628
      %758 = vmatprep.subr.mxu0 %v637
      %759 = vmatpush1.msra.mxu0 %v636
      %760 = vmatprep.subr.mxu0 %v645
      %761 = vmatpush1.msra.mxu0 %v644
      %762 = vmatprep.subr.mxu0 %v653
      %763 = vmatpush1.msra.mxu0 %v652
      %764 = vmatprep.subr.mxu0 %v661
      %765 = vmatpush1.msra.mxu0 %v660
      %766 = vmatprep.subr.mxu0 %v669
      %767 = vmatpush1.msra.mxu0 %v668
      %768 = vmatprep.subr.mxu0 %v677
      %769 = vmatpush1.msra.mxu0 %v676
      %770 = vmatprep.subr.mxu0 %v685
      %771 = vmatpush1.msra.mxu0 %v684
      %772 = vmatprep.subr.mxu0 %v693
      %773 = vmatpush1.msra.mxu0 %v692
      %774 = vmatprep.subr.mxu0 0.0
      %775 = vmatpush1.msra.mxu0 0.0
      %776 = vmatprep.subr.mxu0 0.0
      %777 = vmatpush1.msra.mxu0 0.0
      %778 = vmatprep.subr.mxu0 0.0
      %779 = vmatpush1.msra.mxu0 0.0
      %780 = vmatprep.subr.mxu0 0.0
      %781 = vmatpush1.msra.mxu0 0.0
      %782 = vmatprep.subr.mxu0 0.0
      %783 = vmatpush1.msra.mxu0 0.0
      %784 = vmatprep.subr.mxu0 0.0
      %785 = vmatpush1.msra.mxu0 0.0
      %786 = vmatprep.subr.mxu0 0.0
      %787 = vmatpush1.msra.mxu0 0.0
      %788 = vmatprep.subr.mxu0 0.0
      %789 = vmatpush1.msra.mxu0 0.0
      %790 = vmatprep.subr.mxu0 0.0
      %791 = vmatpush1.msra.mxu0 0.0
      %792 = vmatprep.subr.mxu0 0.0
      %793 = vmatpush1.msra.mxu0 0.0
      %794 = vmatprep.subr.mxu0 0.0
      %795 = vmatpush1.msra.mxu0 0.0
      %796 = vmatprep.subr.mxu0 0.0
      %797 = vmatpush1.msra.mxu0 0.0
      %798 = vmatprep.subr.mxu0 0.0
      %799 = vmatpush1.msra.mxu0 0.0
      %800 = vmatprep.subr.mxu0 0.0
      %801 = vmatpush1.msra.mxu0 0.0
      %802 = vmatprep.subr.mxu0 0.0
      %803 = vmatpush1.msra.mxu0 0.0
      %804 = vmatprep.subr.mxu0 0.0
      %805 = vmatpush1.msra.mxu0 0.0
      %806 = vmatprep.mubr.f32.mxu0 0.0
      %807 = vmatmul.mubr.f32.gmra.mrb[0].mxu0 %v571
      %v808 = vpop.f32.mrb[0].mxu0
      %v809 = vadd.f32 %v705, %v808
      %v810 = vpop.f32.mrb[0].mxu0
      %v811 = vadd.f32 %v709, %v810
      %812 = vdwg.mxu0
      %813 = vmatprep.subr.mxu0 %v575
      %814 = vmatpush1.msra.mxu0 %v574
      %815 = vmatprep.subr.mxu0 %v583
      %816 = vmatpush1.msra.mxu0 %v582
      %817 = vmatprep.subr.mxu0 %v591
      %818 = vmatpush1.msra.mxu0 %v590
      %819 = vmatprep.subr.mxu0 %v599
      %820 = vmatpush1.msra.mxu0 %v598
      %821 = vmatprep.subr.mxu0 %v607
      %822 = vmatpush1.msra.mxu0 %v606
      %823 = vmatprep.subr.mxu0 %v615
      %824 = vmatpush1.msra.mxu0 %v614
      %825 = vmatprep.subr.mxu0 %v623
      %826 = vmatpush1.msra.mxu0 %v622
      %827 = vmatprep.subr.mxu0 %v631
      %828 = vmatpush1.msra.mxu0 %v630
      %829 = vmatprep.subr.mxu0 %v639
      %830 = vmatpush1.msra.mxu0 %v638
      %831 = vmatprep.subr.mxu0 %v647
      %832 = vmatpush1.msra.mxu0 %v646
      %833 = vmatprep.subr.mxu0 %v655
      %834 = vmatpush1.msra.mxu0 %v654
      %835 = vmatprep.subr.mxu0 %v663
      %836 = vmatpush1.msra.mxu0 %v662
      %837 = vmatprep.subr.mxu0 %v671
      %838 = vmatpush1.msra.mxu0 %v670
      %839 = vmatprep.subr.mxu0 %v679
      %840 = vmatpush1.msra.mxu0 %v678
      %841 = vmatprep.subr.mxu0 %v687
      %842 = vmatpush1.msra.mxu0 %v686
      %843 = vmatprep.subr.mxu0 %v695
      %844 = vmatpush1.msra.mxu0 %v694
      %845 = vmatprep.subr.mxu0 0.0
      %846 = vmatpush1.msra.mxu0 0.0
      %847 = vmatprep.subr.mxu0 0.0
      %848 = vmatpush1.msra.mxu0 0.0
      %849 = vmatprep.subr.mxu0 0.0
      %850 = vmatpush1.msra.mxu0 0.0
      %851 = vmatprep.subr.mxu0 0.0
      %852 = vmatpush1.msra.mxu0 0.0
      %853 = vmatprep.subr.mxu0 0.0
      %854 = vmatpush1.msra.mxu0 0.0
      %855 = vmatprep.subr.mxu0 0.0
      %856 = vmatpush1.msra.mxu0 0.0
      %857 = vmatprep.subr.mxu0 0.0
      %858 = vmatpush1.msra.mxu0 0.0
      %859 = vmatprep.subr.mxu0 0.0
      %860 = vmatpush1.msra.mxu0 0.0
      %861 = vmatprep.subr.mxu0 0.0
      %862 = vmatpush1.msra.mxu0 0.0
      %863 = vmatprep.subr.mxu0 0.0
      %864 = vmatpush1.msra.mxu0 0.0
      %865 = vmatprep.subr.mxu0 0.0
      %866 = vmatpush1.msra.mxu0 0.0
      %867 = vmatprep.subr.mxu0 0.0
      %868 = vmatpush1.msra.mxu0 0.0
      %869 = vmatprep.subr.mxu0 0.0
      %870 = vmatpush1.msra.mxu0 0.0
      %871 = vmatprep.subr.mxu0 0.0
      %872 = vmatpush1.msra.mxu0 0.0
      %873 = vmatprep.subr.mxu0 0.0
      %874 = vmatpush1.msra.mxu0 0.0
      %875 = vmatprep.subr.mxu0 0.0
      %876 = vmatpush1.msra.mxu0 0.0
      %877 = vmatprep.mubr.f32.mxu0 0.0
      %878 = vmatmul.mubr.f32.gmra.mrb[0].mxu0 %v571
      %v879 = vpop.f32.mrb[0].mxu0
      %v880 = vadd.f32 %v713, %v879
      %v881 = vpop.f32.mrb[0].mxu0
      %v882 = vadd.f32 %v717, %v881
      %883 = vdwg.mxu0
      %884 = vmatprep.subr.mxu0 %v577
      %885 = vmatpush1.msra.mxu0 %v576
      %886 = vmatprep.subr.mxu0 %v585
      %887 = vmatpush1.msra.mxu0 %v584
      %888 = vmatprep.subr.mxu0 %v593
      %889 = vmatpush1.msra.mxu0 %v592
      %890 = vmatprep.subr.mxu0 %v601
      %891 = vmatpush1.msra.mxu0 %v600
      %892 = vmatprep.subr.mxu0 %v609
      %893 = vmatpush1.msra.mxu0 %v608
      %894 = vmatprep.subr.mxu0 %v617
      %895 = vmatpush1.msra.mxu0 %v616
      %896 = vmatprep.subr.mxu0 %v625
      %897 = vmatpush1.msra.mxu0 %v624
      %898 = vmatprep.subr.mxu0 %v633
      %899 = vmatpush1.msra.mxu0 %v632
      %900 = vmatprep.subr.mxu0 %v641
      %901 = vmatpush1.msra.mxu0 %v640
      %902 = vmatprep.subr.mxu0 %v649
      %903 = vmatpush1.msra.mxu0 %v648
      %904 = vmatprep.subr.mxu0 %v657
      %905 = vmatpush1.msra.mxu0 %v656
      %906 = vmatprep.subr.mxu0 %v665
      %907 = vmatpush1.msra.mxu0 %v664
      %908 = vmatprep.subr.mxu0 %v673
      %909 = vmatpush1.msra.mxu0 %v672
      %910 = vmatprep.subr.mxu0 %v681
      %911 = vmatpush1.msra.mxu0 %v680
      %912 = vmatprep.subr.mxu0 %v689
      %913 = vmatpush1.msra.mxu0 %v688
      %914 = vmatprep.subr.mxu0 %v697
      %915 = vmatpush1.msra.mxu0 %v696
      %916 = vmatprep.subr.mxu0 0.0
      %917 = vmatpush1.msra.mxu0 0.0
      %918 = vmatprep.subr.mxu0 0.0
      %919 = vmatpush1.msra.mxu0 0.0
      %920 = vmatprep.subr.mxu0 0.0
      %921 = vmatpush1.msra.mxu0 0.0
      %922 = vmatprep.subr.mxu0 0.0
      %923 = vmatpush1.msra.mxu0 0.0
      %924 = vmatprep.subr.mxu0 0.0
      %925 = vmatpush1.msra.mxu0 0.0
      %926 = vmatprep.subr.mxu0 0.0
      %927 = vmatpush1.msra.mxu0 0.0
      %928 = vmatprep.subr.mxu0 0.0
      %929 = vmatpush1.msra.mxu0 0.0
      %930 = vmatprep.subr.mxu0 0.0
      %931 = vmatpush1.msra.mxu0 0.0
      %932 = vmatprep.subr.mxu0 0.0
      %933 = vmatpush1.msra.mxu0 0.0
      %934 = vmatprep.subr.mxu0 0.0
      %935 = vmatpush1.msra.mxu0 0.0
      %936 = vmatprep.subr.mxu0 0.0
      %937 = vmatpush1.msra.mxu0 0.0
      %938 = vmatprep.subr.mxu0 0.0
      %939 = vmatpush1.msra.mxu0 0.0
      %940 = vmatprep.subr.mxu0 0.0
      %941 = vmatpush1.msra.mxu0 0.0
      %942 = vmatprep.subr.mxu0 0.0
      %943 = vmatpush1.msra.mxu0 0.0
      %944 = vmatprep.subr.mxu0 0.0
      %945 = vmatpush1.msra.mxu0 0.0
      %946 = vmatprep.subr.mxu0 0.0
      %947 = vmatpush1.msra.mxu0 0.0
      %948 = vmatprep.mubr.f32.mxu0 0.0
      %949 = vmatmul.mubr.f32.gmra.mrb[0].mxu0 %v571
      %v950 = vpop.f32.mrb[0].mxu0
      %v951 = vadd.f32 %v721, %v950
      %v952 = vpop.f32.mrb[0].mxu0
      %v953 = vadd.f32 %v725, %v952
      %954 = vdwg.mxu0
      %955 = vmatprep.subr.mxu0 %v579
      %956 = vmatpush1.msra.mxu0 %v578
      %957 = vmatprep.subr.mxu0 %v587
      %958 = vmatpush1.msra.mxu0 %v586
      %959 = vmatprep.subr.mxu0 %v595
      %960 = vmatpush1.msra.mxu0 %v594
      %961 = vmatprep.subr.mxu0 %v603
      %962 = vmatpush1.msra.mxu0 %v602
      %963 = vmatprep.subr.mxu0 %v611
      %964 = vmatpush1.msra.mxu0 %v610
      %965 = vmatprep.subr.mxu0 %v619
      %966 = vmatpush1.msra.mxu0 %v618
      %967 = vmatprep.subr.mxu0 %v627
      %968 = vmatpush1.msra.mxu0 %v626
      %969 = vmatprep.subr.mxu0 %v635
      %970 = vmatpush1.msra.mxu0 %v634
      %971 = vmatprep.subr.mxu0 %v643
      %972 = vmatpush1.msra.mxu0 %v642
      %973 = vmatprep.subr.mxu0 %v651
      %974 = vmatpush1.msra.mxu0 %v650
      %975 = vmatprep.subr.mxu0 %v659
      %976 = vmatpush1.msra.mxu0 %v658
      %977 = vmatprep.subr.mxu0 %v667
      %978 = vmatpush1.msra.mxu0 %v666
      %979 = vmatprep.subr.mxu0 %v675
      %980 = vmatpush1.msra.mxu0 %v674
      %981 = vmatprep.subr.mxu0 %v683
      %982 = vmatpush1.msra.mxu0 %v682
      %983 = vmatprep.subr.mxu0 %v691
      %984 = vmatpush1.msra.mxu0 %v690
      %985 = vmatprep.subr.mxu0 %v699
      %986 = vmatpush1.msra.mxu0 %v698
      %987 = vmatprep.subr.mxu0 0.0
      %988 = vmatpush1.msra.mxu0 0.0
      %989 = vmatprep.subr.mxu0 0.0
      %990 = vmatpush1.msra.mxu0 0.0
      %991 = vmatprep.subr.mxu0 0.0
      %992 = vmatpush1.msra.mxu0 0.0
      %993 = vmatprep.subr.mxu0 0.0
      %994 = vmatpush1.msra.mxu0 0.0
      %995 = vmatprep.subr.mxu0 0.0
      %996 = vmatpush1.msra.mxu0 0.0
      %997 = vmatprep.subr.mxu0 0.0
      %998 = vmatpush1.msra.mxu0 0.0
      %999 = vmatprep.subr.mxu0 0.0
      %1000 = vmatpush1.msra.mxu0 0.0
      %1001 = vmatprep.subr.mxu0 0.0
      %1002 = vmatpush1.msra.mxu0 0.0
      %1003 = vmatprep.subr.mxu0 0.0
      %1004 = vmatpush1.msra.mxu0 0.0
      %1005 = vmatprep.subr.mxu0 0.0
      %1006 = vmatpush1.msra.mxu0 0.0
      %1007 = vmatprep.subr.mxu0 0.0
      %1008 = vmatpush1.msra.mxu0 0.0
      %1009 = vmatprep.subr.mxu0 0.0
      %1010 = vmatpush1.msra.mxu0 0.0
      %1011 = vmatprep.subr.mxu0 0.0
      %1012 = vmatpush1.msra.mxu0 0.0
      %1013 = vmatprep.subr.mxu0 0.0
      %1014 = vmatpush1.msra.mxu0 0.0
      %1015 = vmatprep.subr.mxu0 0.0
      %1016 = vmatpush1.msra.mxu0 0.0
      %1017 = vmatprep.subr.mxu0 0.0
      %1018 = vmatpush1.msra.mxu0 0.0
      %1019 = vmatprep.mubr.f32.mxu0 0.0
      %1020 = vmatmul.mubr.f32.gmra.mrb[0].mxu0 %v571
      %v1021 = vpop.f32.mrb[0].mxu0
      %v1022 = vadd.f32 %v729, %v1021
      %v1023 = vpop.f32.mrb[0].mxu0
      %v1024 = vadd.f32 %v733, %v1023
      %1025 = vdwg.mxu0
      %v1026 = vmax.f32 %v809, 0.0
      %v1027 = vmax.f32 %v811, 0.0
      %v1028 = vmax.f32 %v880, 0.0
      %v1029 = vmax.f32 %v882, 0.0
      %v1030 = vmax.f32 %v951, 0.0
      %v1031 = vmax.f32 %v953, 0.0
      %v1032 = vmax.f32 %v1022, 0.0
      %v1033 = vmax.f32 %v1024, 0.0
      %v1034 = vld [vmem:[%s3] sm:$0xff]
      %v1035 = vld [vmem:[%s3 + $0x8] sm:$0xff]
      %v1036 = vld [vmem:[%s3 + $0x10] sm:$0xff]
      %v1037 = vld [vmem:[%s3 + $0x18] sm:$0xff]
      %v1038 = vld [vmem:[%s3 + $0x20] sm:$0xff]
      %v1039 = vld [vmem:[%s3 + $0x28] sm:$0xff]
      %v1040 = vld [vmem:[%s3 + $0x30] sm:$0xff]
      %v1041 = vld [vmem:[%s3 + $0x38] sm:$0xff]
      %v1042 = vld [vmem:[%s3 + $0x40] sm:$0xff]
      %v1043 = vld [vmem:[%s3 + $0x48] sm:$0xff]
      %v1044 = vld [vmem:[%s3 + $0x50] sm:$0xff]
      %v1045 = vld [vmem:[%s3 + $0x58] sm:$0xff]
      %v1046 = vld [vmem:[%s3 + $0x60] sm:$0xff]
      %v1047 = vld [vmem:[%s3 + $0x68] sm:$0xff]
      %v1048 = vld [vmem:[%s3 + $0x70] sm:$0xff]
      %v1049 = vld [vmem:[%s3 + $0x78] sm:$0xff]
      %v1050 = vld [vmem:[%s3 + $0x80] sm:$0xff]
      %v1051 = vld [vmem:[%s3 + $0x88] sm:$0xff]
      %v1052 = vld [vmem:[%s3 + $0x90] sm:$0xff]
      %v1053 = vld [vmem:[%s3 + $0x98] sm:$0xff]
      %v1054 = vld [vmem:[%s3 + $0xa0] sm:$0xff]
      %v1055 = vld [vmem:[%s3 + $0xa8] sm:$0xff]
      %v1056 = vld [vmem:[%s3 + $0xb0] sm:$0xff]
      %v1057 = vld [vmem:[%s3 + $0xb8] sm:$0xff]
      %v1058 = vld [vmem:[%s3 + $0xc0] sm:$0xff]
      %v1059 = vld [vmem:[%s3 + $0xc8] sm:$0xff]
      %v1060 = vld [vmem:[%s3 + $0xd0] sm:$0xff]
      %v1061 = vld [vmem:[%s3 + $0xd8] sm:$0xff]
      %v1062 = vld [vmem:[%s3 + $0xe0] sm:$0xff]
      %v1063 = vld [vmem:[%s3 + $0xe8] sm:$0xff]
      %v1064 = vld [vmem:[%s3 + $0xf0] sm:$0xff]
      %v1065 = vld [vmem:[%s3 + $0xf8] sm:$0xff]
      %v1066 = vld [vmem:[%s3 + $0x100] sm:$0xff]
      %v1067 = vld [vmem:[%s3 + $0x108] sm:$0xff]
      %v1068 = vld [vmem:[%s3 + $0x110] sm:$0xff]
      %v1069 = vld [vmem:[%s3 + $0x118] sm:$0xff]
      %v1070 = vld [vmem:[%s3 + $0x120] sm:$0xff]
      %v1071 = vld [vmem:[%s3 + $0x128] sm:$0xff]
      %v1072 = vld [vmem:[%s3 + $0x130] sm:$0xff]
      %v1073 = vld [vmem:[%s3 + $0x138] sm:$0xff]
      %v1074 = vld [vmem:[%s3 + $0x140] sm:$0xff]
      %v1075 = vld [vmem:[%s3 + $0x148] sm:$0xff]
      %v1076 = vld [vmem:[%s3 + $0x150] sm:$0xff]
      %v1077 = vld [vmem:[%s3 + $0x158] sm:$0xff]
      %v1078 = vld [vmem:[%s3 + $0x160] sm:$0xff]
      %v1079 = vld [vmem:[%s3 + $0x168] sm:$0xff]
      %v1080 = vld [vmem:[%s3 + $0x170] sm:$0xff]
      %v1081 = vld [vmem:[%s3 + $0x178] sm:$0xff]
      %v1082 = vld [vmem:[%s3 + $0x180] sm:$0xff]
      %v1083 = vld [vmem:[%s3 + $0x188] sm:$0xff]
      %v1084 = vld [vmem:[%s3 + $0x190] sm:$0xff]
      %v1085 = vld [vmem:[%s3 + $0x198] sm:$0xff]
      %v1086 = vld [vmem:[%s3 + $0x1a0] sm:$0xff]
      %v1087 = vld [vmem:[%s3 + $0x1a8] sm:$0xff]
      %v1088 = vld [vmem:[%s3 + $0x1b0] sm:$0xff]
      %v1089 = vld [vmem:[%s3 + $0x1b8] sm:$0xff]
      %v1090 = vld [vmem:[%s3 + $0x1c0] sm:$0xff]
      %v1091 = vld [vmem:[%s3 + $0x1c8] sm:$0xff]
      %v1092 = vld [vmem:[%s3 + $0x1d0] sm:$0xff]
      %v1093 = vld [vmem:[%s3 + $0x1d8] sm:$0xff]
      %v1094 = vld [vmem:[%s3 + $0x1e0] sm:$0xff]
      %v1095 = vld [vmem:[%s3 + $0x1e8] sm:$0xff]
      %v1096 = vld [vmem:[%s3 + $0x1f0] sm:$0xff]
      %v1097 = vld [vmem:[%s3 + $0x1f8] sm:$0xff]
      %v1098 = vld [vmem:[%s3 + $0x200] sm:$0xff]
      %v1099 = vld [vmem:[%s3 + $0x208] sm:$0xff]
      %v1100 = vld [vmem:[%s3 + $0x210] sm:$0xff]
      %v1101 = vld [vmem:[%s3 + $0x218] sm:$0xff]
      %v1102 = vld [vmem:[%s3 + $0x220] sm:$0xff]
      %v1103 = vld [vmem:[%s3 + $0x228] sm:$0xff]
      %v1104 = vld [vmem:[%s3 + $0x230] sm:$0xff]
      %v1105 = vld [vmem:[%s3 + $0x238] sm:$0xff]
      %v1106 = vld [vmem:[%s3 + $0x240] sm:$0xff]
      %v1107 = vld [vmem:[%s3 + $0x248] sm:$0xff]
      %v1108 = vld [vmem:[%s3 + $0x250] sm:$0xff]
      %v1109 = vld [vmem:[%s3 + $0x258] sm:$0xff]
      %v1110 = vld [vmem:[%s3 + $0x260] sm:$0xff]
      %v1111 = vld [vmem:[%s3 + $0x268] sm:$0xff]
      %v1112 = vld [vmem:[%s3 + $0x270] sm:$0xff]
      %v1113 = vld [vmem:[%s3 + $0x278] sm:$0xff]
      %v1114 = vld [vmem:[%s3 + $0x280] sm:$0xff]
      %v1115 = vld [vmem:[%s3 + $0x288] sm:$0xff]
      %v1116 = vld [vmem:[%s3 + $0x290] sm:$0xff]
      %v1117 = vld [vmem:[%s3 + $0x298] sm:$0xff]
      %v1118 = vld [vmem:[%s3 + $0x2a0] sm:$0xff]
      %v1119 = vld [vmem:[%s3 + $0x2a8] sm:$0xff]
      %v1120 = vld [vmem:[%s3 + $0x2b0] sm:$0xff]
      %v1121 = vld [vmem:[%s3 + $0x2b8] sm:$0xff]
      %v1122 = vld [vmem:[%s3 + $0x2c0] sm:$0xff]
      %v1123 = vld [vmem:[%s3 + $0x2c8] sm:$0xff]
      %v1124 = vld [vmem:[%s3 + $0x2d0] sm:$0xff]
      %v1125 = vld [vmem:[%s3 + $0x2d8] sm:$0xff]
      %v1126 = vld [vmem:[%s3 + $0x2e0] sm:$0xff]
      %v1127 = vld [vmem:[%s3 + $0x2e8] sm:$0xff]
      %v1128 = vld [vmem:[%s3 + $0x2f0] sm:$0xff]
      %v1129 = vld [vmem:[%s3 + $0x2f8] sm:$0xff]
      %v1130 = vld [vmem:[%s3 + $0x300] sm:$0xff]
      %v1131 = vld [vmem:[%s3 + $0x308] sm:$0xff]
      %v1132 = vld [vmem:[%s3 + $0x310] sm:$0xff]
      %v1133 = vld [vmem:[%s3 + $0x318] sm:$0xff]
      %v1134 = vld [vmem:[%s3 + $0x320] sm:$0xff]
      %v1135 = vld [vmem:[%s3 + $0x328] sm:$0xff]
      %v1136 = vld [vmem:[%s3 + $0x330] sm:$0xff]
      %v1137 = vld [vmem:[%s3 + $0x338] sm:$0xff]
      %v1138 = vld [vmem:[%s3 + $0x340] sm:$0xff]
      %v1139 = vld [vmem:[%s3 + $0x348] sm:$0xff]
      %v1140 = vld [vmem:[%s3 + $0x350] sm:$0xff]
      %v1141 = vld [vmem:[%s3 + $0x358] sm:$0xff]
      %v1142 = vld [vmem:[%s3 + $0x360] sm:$0xff]
      %v1143 = vld [vmem:[%s3 + $0x368] sm:$0xff]
      %v1144 = vld [vmem:[%s3 + $0x370] sm:$0xff]
      %v1145 = vld [vmem:[%s3 + $0x378] sm:$0xff]
      %v1146 = vld [vmem:[%s3 + $0x380] sm:$0xff]
      %v1147 = vld [vmem:[%s3 + $0x388] sm:$0xff]
      %v1148 = vld [vmem:[%s3 + $0x390] sm:$0xff]
      %v1149 = vld [vmem:[%s3 + $0x398] sm:$0xff]
      %v1150 = vld [vmem:[%s3 + $0x3a0] sm:$0xff]
      %v1151 = vld [vmem:[%s3 + $0x3a8] sm:$0xff]
      %v1152 = vld [vmem:[%s3 + $0x3b0] sm:$0xff]
      %v1153 = vld [vmem:[%s3 + $0x3b8] sm:$0xff]
      %v1154 = vld [vmem:[%s3 + $0x3c0] sm:$0xff]
      %v1155 = vld [vmem:[%s3 + $0x3c8] sm:$0xff]
      %v1156 = vld [vmem:[%s3 + $0x3d0] sm:$0xff]
      %v1157 = vld [vmem:[%s3 + $0x3d8] sm:$0xff]
      %v1158 = vld [vmem:[%s3 + $0x3e0] sm:$0xff]
      %v1159 = vld [vmem:[%s3 + $0x3e8] sm:$0xff]
      %v1160 = vld [vmem:[%s3 + $0x3f0] sm:$0xff]
      %v1161 = vld [vmem:[%s3 + $0x3f8] sm:$0xff]
      %v1162 = vld [vmem:[%s3 + $0x400] sm:$0xff]
      %v1163 = vld [vmem:[%s3 + $0x408] sm:$0xff]
      %v1164 = vld [vmem:[%s3 + $0x410] sm:$0xff]
      %v1165 = vld [vmem:[%s3 + $0x418] sm:$0xff]
      %v1166 = vld [vmem:[%s3 + $0x420] sm:$0xff]
      %v1167 = vld [vmem:[%s3 + $0x428] sm:$0xff]
      %v1168 = vld [vmem:[%s3 + $0x430] sm:$0xff]
      %v1169 = vld [vmem:[%s3 + $0x438] sm:$0xff]
      %v1170 = vld [vmem:[%s3 + $0x440] sm:$0xff]
      %v1171 = vld [vmem:[%s3 + $0x448] sm:$0xff]
      %v1172 = vld [vmem:[%s3 + $0x450] sm:$0xff]
      %v1173 = vld [vmem:[%s3 + $0x458] sm:$0xff]
      %v1174 = vld [vmem:[%s3 + $0x460] sm:$0xff]
      %v1175 = vld [vmem:[%s3 + $0x468] sm:$0xff]
      %v1176 = vld [vmem:[%s3 + $0x470] sm:$0xff]
      %v1177 = vld [vmem:[%s3 + $0x478] sm:$0xff]
      %v1178 = vld [vmem:[%s3 + $0x480] sm:$0xff]
      %v1179 = vld [vmem:[%s3 + $0x488] sm:$0xff]
      %v1180 = vld [vmem:[%s3 + $0x490] sm:$0xff]
      %v1181 = vld [vmem:[%s3 + $0x498] sm:$0xff]
      %v1182 = vld [vmem:[%s3 + $0x4a0] sm:$0xff]
      %v1183 = vld [vmem:[%s3 + $0x4a8] sm:$0xff]
      %v1184 = vld [vmem:[%s3 + $0x4b0] sm:$0xff]
      %v1185 = vld [vmem:[%s3 + $0x4b8] sm:$0xff]
      %v1186 = vld [vmem:[%s3 + $0x4c0] sm:$0xff]
      %v1187 = vld [vmem:[%s3 + $0x4c8] sm:$0xff]
      %v1188 = vld [vmem:[%s3 + $0x4d0] sm:$0xff]
      %v1189 = vld [vmem:[%s3 + $0x4d8] sm:$0xff]
      %v1190 = vld [vmem:[%s3 + $0x4e0] sm:$0xff]
      %v1191 = vld [vmem:[%s3 + $0x4e8] sm:$0xff]
      %v1192 = vld [vmem:[%s3 + $0x4f0] sm:$0xff]
      %v1193 = vld [vmem:[%s3 + $0x4f8] sm:$0xff]
      %v1194 = vld [vmem:[%s3 + $0x500] sm:$0xff]
      %v1195 = vld [vmem:[%s3 + $0x508] sm:$0xff]
      %v1196 = vld [vmem:[%s3 + $0x510] sm:$0xff]
      %v1197 = vld [vmem:[%s3 + $0x518] sm:$0xff]
      %v1198 = vld [vmem:[%s3 + $0x520] sm:$0xff]
      %v1199 = vld [vmem:[%s3 + $0x528] sm:$0xff]
      %v1200 = vld [vmem:[%s3 + $0x530] sm:$0xff]
      %v1201 = vld [vmem:[%s3 + $0x538] sm:$0xff]
      %v1202 = vld [vmem:[%s3 + $0x540] sm:$0xff]
      %v1203 = vld [vmem:[%s3 + $0x548] sm:$0xff]
      %v1204 = vld [vmem:[%s3 + $0x550] sm:$0xff]
      %v1205 = vld [vmem:[%s3 + $0x558] sm:$0xff]
      %v1206 = vld [vmem:[%s3 + $0x560] sm:$0xff]
      %v1207 = vld [vmem:[%s3 + $0x568] sm:$0xff]
      %v1208 = vld [vmem:[%s3 + $0x570] sm:$0xff]
      %v1209 = vld [vmem:[%s3 + $0x578] sm:$0xff]
      %v1210 = vld [vmem:[%s3 + $0x580] sm:$0xff]
      %v1211 = vld [vmem:[%s3 + $0x588] sm:$0xff]
      %v1212 = vld [vmem:[%s3 + $0x590] sm:$0xff]
      %v1213 = vld [vmem:[%s3 + $0x598] sm:$0xff]
      %v1214 = vld [vmem:[%s3 + $0x5a0] sm:$0xff]
      %v1215 = vld [vmem:[%s3 + $0x5a8] sm:$0xff]
      %v1216 = vld [vmem:[%s3 + $0x5b0] sm:$0xff]
      %v1217 = vld [vmem:[%s3 + $0x5b8] sm:$0xff]
      %v1218 = vld [vmem:[%s3 + $0x5c0] sm:$0xff]
      %v1219 = vld [vmem:[%s3 + $0x5c8] sm:$0xff]
      %v1220 = vld [vmem:[%s3 + $0x5d0] sm:$0xff]
      %v1221 = vld [vmem:[%s3 + $0x5d8] sm:$0xff]
      %v1222 = vld [vmem:[%s3 + $0x5e0] sm:$0xff]
      %v1223 = vld [vmem:[%s3 + $0x5e8] sm:$0xff]
      %v1224 = vld [vmem:[%s3 + $0x5f0] sm:$0xff]
      %v1225 = vld [vmem:[%s3 + $0x5f8] sm:$0xff]
      %v1226 = vld [vmem:[%s3 + $0x600] sm:$0xff]
      %v1227 = vld [vmem:[%s3 + $0x608] sm:$0xff]
      %v1228 = vld [vmem:[%s3 + $0x610] sm:$0xff]
      %v1229 = vld [vmem:[%s3 + $0x618] sm:$0xff]
      %v1230 = vld [vmem:[%s3 + $0x620] sm:$0xff]
      %v1231 = vld [vmem:[%s3 + $0x628] sm:$0xff]
      %v1232 = vld [vmem:[%s3 + $0x630] sm:$0xff]
      %v1233 = vld [vmem:[%s3 + $0x638] sm:$0xff]
      %v1234 = vld [vmem:[%s3 + $0x640] sm:$0xff]
      %v1235 = vld [vmem:[%s3 + $0x648] sm:$0xff]
      %v1236 = vld [vmem:[%s3 + $0x650] sm:$0xff]
      %v1237 = vld [vmem:[%s3 + $0x658] sm:$0xff]
      %v1238 = vld [vmem:[%s3 + $0x660] sm:$0xff]
      %v1239 = vld [vmem:[%s3 + $0x668] sm:$0xff]
      %v1240 = vld [vmem:[%s3 + $0x670] sm:$0xff]
      %v1241 = vld [vmem:[%s3 + $0x678] sm:$0xff]
      %v1242 = vld [vmem:[%s3 + $0x680] sm:$0xff]
      %v1243 = vld [vmem:[%s3 + $0x688] sm:$0xff]
      %v1244 = vld [vmem:[%s3 + $0x690] sm:$0xff]
      %v1245 = vld [vmem:[%s3 + $0x698] sm:$0xff]
      %v1246 = vld [vmem:[%s3 + $0x6a0] sm:$0xff]
      %v1247 = vld [vmem:[%s3 + $0x6a8] sm:$0xff]
      %v1248 = vld [vmem:[%s3 + $0x6b0] sm:$0xff]
      %v1249 = vld [vmem:[%s3 + $0x6b8] sm:$0xff]
      %v1250 = vld [vmem:[%s3 + $0x6c0] sm:$0xff]
      %v1251 = vld [vmem:[%s3 + $0x6c8] sm:$0xff]
      %v1252 = vld [vmem:[%s3 + $0x6d0] sm:$0xff]
      %v1253 = vld [vmem:[%s3 + $0x6d8] sm:$0xff]
      %v1254 = vld [vmem:[%s3 + $0x6e0] sm:$0xff]
      %v1255 = vld [vmem:[%s3 + $0x6e8] sm:$0xff]
      %v1256 = vld [vmem:[%s3 + $0x6f0] sm:$0xff]
      %v1257 = vld [vmem:[%s3 + $0x6f8] sm:$0xff]
      %v1258 = vld [vmem:[%s3 + $0x700] sm:$0xff]
      %v1259 = vld [vmem:[%s3 + $0x708] sm:$0xff]
      %v1260 = vld [vmem:[%s3 + $0x710] sm:$0xff]
      %v1261 = vld [vmem:[%s3 + $0x718] sm:$0xff]
      %v1262 = vld [vmem:[%s3 + $0x720] sm:$0xff]
      %v1263 = vld [vmem:[%s3 + $0x728] sm:$0xff]
      %v1264 = vld [vmem:[%s3 + $0x730] sm:$0xff]
      %v1265 = vld [vmem:[%s3 + $0x738] sm:$0xff]
      %v1266 = vld [vmem:[%s3 + $0x740] sm:$0xff]
      %v1267 = vld [vmem:[%s3 + $0x748] sm:$0xff]
      %v1268 = vld [vmem:[%s3 + $0x750] sm:$0xff]
      %v1269 = vld [vmem:[%s3 + $0x758] sm:$0xff]
      %v1270 = vld [vmem:[%s3 + $0x760] sm:$0xff]
      %v1271 = vld [vmem:[%s3 + $0x768] sm:$0xff]
      %v1272 = vld [vmem:[%s3 + $0x770] sm:$0xff]
      %v1273 = vld [vmem:[%s3 + $0x778] sm:$0xff]
      %v1274 = vld [vmem:[%s3 + $0x780] sm:$0xff]
      %v1275 = vld [vmem:[%s3 + $0x788] sm:$0xff]
      %v1276 = vld [vmem:[%s3 + $0x790] sm:$0xff]
      %v1277 = vld [vmem:[%s3 + $0x798] sm:$0xff]
      %v1278 = vld [vmem:[%s3 + $0x7a0] sm:$0xff]
      %v1279 = vld [vmem:[%s3 + $0x7a8] sm:$0xff]
      %v1280 = vld [vmem:[%s3 + $0x7b0] sm:$0xff]
      %v1281 = vld [vmem:[%s3 + $0x7b8] sm:$0xff]
      %v1282 = vld [vmem:[%s3 + $0x7c0] sm:$0xff]
      %v1283 = vld [vmem:[%s3 + $0x7c8] sm:$0xff]
      %v1284 = vld [vmem:[%s3 + $0x7d0] sm:$0xff]
      %v1285 = vld [vmem:[%s3 + $0x7d8] sm:$0xff]
      %v1286 = vld [vmem:[%s3 + $0x7e0] sm:$0xff]
      %v1287 = vld [vmem:[%s3 + $0x7e8] sm:$0xff]
      %v1288 = vld [vmem:[%s3 + $0x7f0] sm:$0xff]
      %v1289 = vld [vmem:[%s3 + $0x7f8] sm:$0xff]
      %v1290 = vld [vmem:[%s3 + $0x800] sm:$0xff]
      %v1291 = vld [vmem:[%s3 + $0x808] sm:$0xff]
      %v1292 = vld [vmem:[%s3 + $0x810] sm:$0xff]
      %v1293 = vld [vmem:[%s3 + $0x818] sm:$0xff]
      %v1294 = vld [vmem:[%s3 + $0x820] sm:$0xff]
      %v1295 = vld [vmem:[%s3 + $0x828] sm:$0xff]
      %v1296 = vld [vmem:[%s3 + $0x830] sm:$0xff]
      %v1297 = vld [vmem:[%s3 + $0x838] sm:$0xff]
      %v1298 = vld [vmem:[%s3 + $0x840] sm:$0xff]
      %v1299 = vld [vmem:[%s3 + $0x848] sm:$0xff]
      %v1300 = vld [vmem:[%s3 + $0x850] sm:$0xff]
      %v1301 = vld [vmem:[%s3 + $0x858] sm:$0xff]
      %v1302 = vld [vmem:[%s3 + $0x860] sm:$0xff]
      %v1303 = vld [vmem:[%s3 + $0x868] sm:$0xff]
      %v1304 = vld [vmem:[%s3 + $0x870] sm:$0xff]
      %v1305 = vld [vmem:[%s3 + $0x878] sm:$0xff]
      %v1306 = vld [vmem:[%s3 + $0x880] sm:$0xff]
      %v1307 = vld [vmem:[%s3 + $0x888] sm:$0xff]
      %v1308 = vld [vmem:[%s3 + $0x890] sm:$0xff]
      %v1309 = vld [vmem:[%s3 + $0x898] sm:$0xff]
      %v1310 = vld [vmem:[%s3 + $0x8a0] sm:$0xff]
      %v1311 = vld [vmem:[%s3 + $0x8a8] sm:$0xff]
      %v1312 = vld [vmem:[%s3 + $0x8b0] sm:$0xff]
      %v1313 = vld [vmem:[%s3 + $0x8b8] sm:$0xff]
      %v1314 = vld [vmem:[%s3 + $0x8c0] sm:$0xff]
      %v1315 = vld [vmem:[%s3 + $0x8c8] sm:$0xff]
      %v1316 = vld [vmem:[%s3 + $0x8d0] sm:$0xff]
      %v1317 = vld [vmem:[%s3 + $0x8d8] sm:$0xff]
      %v1318 = vld [vmem:[%s3 + $0x8e0] sm:$0xff]
      %v1319 = vld [vmem:[%s3 + $0x8e8] sm:$0xff]
      %v1320 = vld [vmem:[%s3 + $0x8f0] sm:$0xff]
      %v1321 = vld [vmem:[%s3 + $0x8f8] sm:$0xff]
      %v1322 = vld [vmem:[%s3 + $0x900] sm:$0xff]
      %v1323 = vld [vmem:[%s3 + $0x908] sm:$0xff]
      %v1324 = vld [vmem:[%s3 + $0x910] sm:$0xff]
      %v1325 = vld [vmem:[%s3 + $0x918] sm:$0xff]
      %v1326 = vld [vmem:[%s3 + $0x920] sm:$0xff]
      %v1327 = vld [vmem:[%s3 + $0x928] sm:$0xff]
      %v1328 = vld [vmem:[%s3 + $0x930] sm:$0xff]
      %v1329 = vld [vmem:[%s3 + $0x938] sm:$0xff]
      %v1330 = vld [vmem:[%s3 + $0x940] sm:$0xff]
      %v1331 = vld [vmem:[%s3 + $0x948] sm:$0xff]
      %v1332 = vld [vmem:[%s3 + $0x950] sm:$0xff]
      %v1333 = vld [vmem:[%s3 + $0x958] sm:$0xff]
      %v1334 = vld [vmem:[%s3 + $0x960] sm:$0xff]
      %v1335 = vld [vmem:[%s3 + $0x968] sm:$0xff]
      %v1336 = vld [vmem:[%s3 + $0x970] sm:$0xff]
      %v1337 = vld [vmem:[%s3 + $0x978] sm:$0xff]
      %v1338 = vld [vmem:[%s3 + $0x980] sm:$0xff]
      %v1339 = vld [vmem:[%s3 + $0x988] sm:$0xff]
      %v1340 = vld [vmem:[%s3 + $0x990] sm:$0xff]
      %v1341 = vld [vmem:[%s3 + $0x998] sm:$0xff]
      %v1342 = vld [vmem:[%s3 + $0x9a0] sm:$0xff]
      %v1343 = vld [vmem:[%s3 + $0x9a8] sm:$0xff]
      %v1344 = vld [vmem:[%s3 + $0x9b0] sm:$0xff]
      %v1345 = vld [vmem:[%s3 + $0x9b8] sm:$0xff]
      %v1346 = vld [vmem:[%s3 + $0x9c0] sm:$0xff]
      %v1347 = vld [vmem:[%s3 + $0x9c8] sm:$0xff]
      %v1348 = vld [vmem:[%s3 + $0x9d0] sm:$0xff]
      %v1349 = vld [vmem:[%s3 + $0x9d8] sm:$0xff]
      %v1350 = vld [vmem:[%s3 + $0x9e0] sm:$0xff]
      %v1351 = vld [vmem:[%s3 + $0x9e8] sm:$0xff]
      %v1352 = vld [vmem:[%s3 + $0x9f0] sm:$0xff]
      %v1353 = vld [vmem:[%s3 + $0x9f8] sm:$0xff]
      %v1354 = vld [vmem:[%s3 + $0xa00] sm:$0xff]
      %v1355 = vld [vmem:[%s3 + $0xa08] sm:$0xff]
      %v1356 = vld [vmem:[%s3 + $0xa10] sm:$0xff]
      %v1357 = vld [vmem:[%s3 + $0xa18] sm:$0xff]
      %v1358 = vld [vmem:[%s3 + $0xa20] sm:$0xff]
      %v1359 = vld [vmem:[%s3 + $0xa28] sm:$0xff]
      %v1360 = vld [vmem:[%s3 + $0xa30] sm:$0xff]
      %v1361 = vld [vmem:[%s3 + $0xa38] sm:$0xff]
      %v1362 = vld [vmem:[%s3 + $0xa40] sm:$0xff]
      %v1363 = vld [vmem:[%s3 + $0xa48] sm:$0xff]
      %v1364 = vld [vmem:[%s3 + $0xa50] sm:$0xff]
      %v1365 = vld [vmem:[%s3 + $0xa58] sm:$0xff]
      %v1366 = vld [vmem:[%s3 + $0xa60] sm:$0xff]
      %v1367 = vld [vmem:[%s3 + $0xa68] sm:$0xff]
      %v1368 = vld [vmem:[%s3 + $0xa70] sm:$0xff]
      %v1369 = vld [vmem:[%s3 + $0xa78] sm:$0xff]
      %v1370 = vld [vmem:[%s3 + $0xa80] sm:$0xff]
      %v1371 = vld [vmem:[%s3 + $0xa88] sm:$0xff]
      %v1372 = vld [vmem:[%s3 + $0xa90] sm:$0xff]
      %v1373 = vld [vmem:[%s3 + $0xa98] sm:$0xff]
      %v1374 = vld [vmem:[%s3 + $0xaa0] sm:$0xff]
      %v1375 = vld [vmem:[%s3 + $0xaa8] sm:$0xff]
      %v1376 = vld [vmem:[%s3 + $0xab0] sm:$0xff]
      %v1377 = vld [vmem:[%s3 + $0xab8] sm:$0xff]
      %v1378 = vld [vmem:[%s3 + $0xac0] sm:$0xff]
      %v1379 = vld [vmem:[%s3 + $0xac8] sm:$0xff]
      %v1380 = vld [vmem:[%s3 + $0xad0] sm:$0xff]
      %v1381 = vld [vmem:[%s3 + $0xad8] sm:$0xff]
      %v1382 = vld [vmem:[%s3 + $0xae0] sm:$0xff]
      %v1383 = vld [vmem:[%s3 + $0xae8] sm:$0xff]
      %v1384 = vld [vmem:[%s3 + $0xaf0] sm:$0xff]
      %v1385 = vld [vmem:[%s3 + $0xaf8] sm:$0xff]
      %v1386 = vld [vmem:[%s3 + $0xb00] sm:$0xff]
      %v1387 = vld [vmem:[%s3 + $0xb08] sm:$0xff]
      %v1388 = vld [vmem:[%s3 + $0xb10] sm:$0xff]
      %v1389 = vld [vmem:[%s3 + $0xb18] sm:$0xff]
      %v1390 = vld [vmem:[%s3 + $0xb20] sm:$0xff]
      %v1391 = vld [vmem:[%s3 + $0xb28] sm:$0xff]
      %v1392 = vld [vmem:[%s3 + $0xb30] sm:$0xff]
      %v1393 = vld [vmem:[%s3 + $0xb38] sm:$0xff]
      %v1394 = vld [vmem:[%s3 + $0xb40] sm:$0xff]
      %v1395 = vld [vmem:[%s3 + $0xb48] sm:$0xff]
      %v1396 = vld [vmem:[%s3 + $0xb50] sm:$0xff]
      %v1397 = vld [vmem:[%s3 + $0xb58] sm:$0xff]
      %v1398 = vld [vmem:[%s3 + $0xb60] sm:$0xff]
      %v1399 = vld [vmem:[%s3 + $0xb68] sm:$0xff]
      %v1400 = vld [vmem:[%s3 + $0xb70] sm:$0xff]
      %v1401 = vld [vmem:[%s3 + $0xb78] sm:$0xff]
      %v1402 = vld [vmem:[%s3 + $0xb80] sm:$0xff]
      %v1403 = vld [vmem:[%s3 + $0xb88] sm:$0xff]
      %v1404 = vld [vmem:[%s3 + $0xb90] sm:$0xff]
      %v1405 = vld [vmem:[%s3 + $0xb98] sm:$0xff]
      %v1406 = vld [vmem:[%s3 + $0xba0] sm:$0xff]
      %v1407 = vld [vmem:[%s3 + $0xba8] sm:$0xff]
      %v1408 = vld [vmem:[%s3 + $0xbb0] sm:$0xff]
      %v1409 = vld [vmem:[%s3 + $0xbb8] sm:$0xff]
      %v1410 = vld [vmem:[%s3 + $0xbc0] sm:$0xff]
      %v1411 = vld [vmem:[%s3 + $0xbc8] sm:$0xff]
      %v1412 = vld [vmem:[%s3 + $0xbd0] sm:$0xff]
      %v1413 = vld [vmem:[%s3 + $0xbd8] sm:$0xff]
      %v1414 = vld [vmem:[%s3 + $0xbe0] sm:$0xff]
      %v1415 = vld [vmem:[%s3 + $0xbe8] sm:$0xff]
      %v1416 = vld [vmem:[%s3 + $0xbf0] sm:$0xff]
      %v1417 = vld [vmem:[%s3 + $0xbf8] sm:$0xff]
      %v1418 = vld [vmem:[%s3 + $0xc00] sm:$0xff]
      %v1419 = vld [vmem:[%s3 + $0xc08] sm:$0xff]
      %v1420 = vld [vmem:[%s3 + $0xc10] sm:$0xff]
      %v1421 = vld [vmem:[%s3 + $0xc18] sm:$0xff]
      %v1422 = vld [vmem:[%s3 + $0xc20] sm:$0xff]
      %v1423 = vld [vmem:[%s3 + $0xc28] sm:$0xff]
      %v1424 = vld [vmem:[%s3 + $0xc30] sm:$0xff]
      %v1425 = vld [vmem:[%s3 + $0xc38] sm:$0xff]
      %v1426 = vld [vmem:[%s3 + $0xc40] sm:$0xff]
      %v1427 = vld [vmem:[%s3 + $0xc48] sm:$0xff]
      %v1428 = vld [vmem:[%s3 + $0xc50] sm:$0xff]
      %v1429 = vld [vmem:[%s3 + $0xc58] sm:$0xff]
      %v1430 = vld [vmem:[%s3 + $0xc60] sm:$0xff]
      %v1431 = vld [vmem:[%s3 + $0xc68] sm:$0xff]
      %v1432 = vld [vmem:[%s3 + $0xc70] sm:$0xff]
      %v1433 = vld [vmem:[%s3 + $0xc78] sm:$0xff]
      %v1434 = vld [vmem:[%s3 + $0xc80] sm:$0xff]
      %v1435 = vld [vmem:[%s3 + $0xc88] sm:$0xff]
      %v1436 = vld [vmem:[%s3 + $0xc90] sm:$0xff]
      %v1437 = vld [vmem:[%s3 + $0xc98] sm:$0xff]
      %v1438 = vld [vmem:[%s3 + $0xca0] sm:$0xff]
      %v1439 = vld [vmem:[%s3 + $0xca8] sm:$0xff]
      %v1440 = vld [vmem:[%s3 + $0xcb0] sm:$0xff]
      %v1441 = vld [vmem:[%s3 + $0xcb8] sm:$0xff]
      %v1442 = vld [vmem:[%s3 + $0xcc0] sm:$0xff]
      %v1443 = vld [vmem:[%s3 + $0xcc8] sm:$0xff]
      %v1444 = vld [vmem:[%s3 + $0xcd0] sm:$0xff]
      %v1445 = vld [vmem:[%s3 + $0xcd8] sm:$0xff]
      %v1446 = vld [vmem:[%s3 + $0xce0] sm:$0xff]
      %v1447 = vld [vmem:[%s3 + $0xce8] sm:$0xff]
      %v1448 = vld [vmem:[%s3 + $0xcf0] sm:$0xff]
      %v1449 = vld [vmem:[%s3 + $0xcf8] sm:$0xff]
      %v1450 = vld [vmem:[%s3 + $0xd00] sm:$0xff]
      %v1451 = vld [vmem:[%s3 + $0xd08] sm:$0xff]
      %v1452 = vld [vmem:[%s3 + $0xd10] sm:$0xff]
      %v1453 = vld [vmem:[%s3 + $0xd18] sm:$0xff]
      %v1454 = vld [vmem:[%s3 + $0xd20] sm:$0xff]
      %v1455 = vld [vmem:[%s3 + $0xd28] sm:$0xff]
      %v1456 = vld [vmem:[%s3 + $0xd30] sm:$0xff]
      %v1457 = vld [vmem:[%s3 + $0xd38] sm:$0xff]
      %v1458 = vld [vmem:[%s3 + $0xd40] sm:$0xff]
      %v1459 = vld [vmem:[%s3 + $0xd48] sm:$0xff]
      %v1460 = vld [vmem:[%s3 + $0xd50] sm:$0xff]
      %v1461 = vld [vmem:[%s3 + $0xd58] sm:$0xff]
      %v1462 = vld [vmem:[%s3 + $0xd60] sm:$0xff]
      %v1463 = vld [vmem:[%s3 + $0xd68] sm:$0xff]
      %v1464 = vld [vmem:[%s3 + $0xd70] sm:$0xff]
      %v1465 = vld [vmem:[%s3 + $0xd78] sm:$0xff]
      %v1466 = vld [vmem:[%s3 + $0xd80] sm:$0xff]
      %v1467 = vld [vmem:[%s3 + $0xd88] sm:$0xff]
      %v1468 = vld [vmem:[%s3 + $0xd90] sm:$0xff]
      %v1469 = vld [vmem:[%s3 + $0xd98] sm:$0xff]
      %v1470 = vld [vmem:[%s3 + $0xda0] sm:$0xff]
      %v1471 = vld [vmem:[%s3 + $0xda8] sm:$0xff]
      %v1472 = vld [vmem:[%s3 + $0xdb0] sm:$0xff]
      %v1473 = vld [vmem:[%s3 + $0xdb8] sm:$0xff]
      %v1474 = vld [vmem:[%s3 + $0xdc0] sm:$0xff]
      %v1475 = vld [vmem:[%s3 + $0xdc8] sm:$0xff]
      %v1476 = vld [vmem:[%s3 + $0xdd0] sm:$0xff]
      %v1477 = vld [vmem:[%s3 + $0xdd8] sm:$0xff]
      %v1478 = vld [vmem:[%s3 + $0xde0] sm:$0xff]
      %v1479 = vld [vmem:[%s3 + $0xde8] sm:$0xff]
      %v1480 = vld [vmem:[%s3 + $0xdf0] sm:$0xff]
      %v1481 = vld [vmem:[%s3 + $0xdf8] sm:$0xff]
      %v1482 = vld [vmem:[%s3 + $0xe00] sm:$0xff]
      %v1483 = vld [vmem:[%s3 + $0xe08] sm:$0xff]
      %v1484 = vld [vmem:[%s3 + $0xe10] sm:$0xff]
      %v1485 = vld [vmem:[%s3 + $0xe18] sm:$0xff]
      %v1486 = vld [vmem:[%s3 + $0xe20] sm:$0xff]
      %v1487 = vld [vmem:[%s3 + $0xe28] sm:$0xff]
      %v1488 = vld [vmem:[%s3 + $0xe30] sm:$0xff]
      %v1489 = vld [vmem:[%s3 + $0xe38] sm:$0xff]
      %v1490 = vld [vmem:[%s3 + $0xe40] sm:$0xff]
      %v1491 = vld [vmem:[%s3 + $0xe48] sm:$0xff]
      %v1492 = vld [vmem:[%s3 + $0xe50] sm:$0xff]
      %v1493 = vld [vmem:[%s3 + $0xe58] sm:$0xff]
      %v1494 = vld [vmem:[%s3 + $0xe60] sm:$0xff]
      %v1495 = vld [vmem:[%s3 + $0xe68] sm:$0xff]
      %v1496 = vld [vmem:[%s3 + $0xe70] sm:$0xff]
      %v1497 = vld [vmem:[%s3 + $0xe78] sm:$0xff]
      %v1498 = vld [vmem:[%s3 + $0xe80] sm:$0xff]
      %v1499 = vld [vmem:[%s3 + $0xe88] sm:$0xff]
      %v1500 = vld [vmem:[%s3 + $0xe90] sm:$0xff]
      %v1501 = vld [vmem:[%s3 + $0xe98] sm:$0xff]
      %v1502 = vld [vmem:[%s3 + $0xea0] sm:$0xff]
      %v1503 = vld [vmem:[%s3 + $0xea8] sm:$0xff]
      %v1504 = vld [vmem:[%s3 + $0xeb0] sm:$0xff]
      %v1505 = vld [vmem:[%s3 + $0xeb8] sm:$0xff]
      %v1506 = vld [vmem:[%s3 + $0xec0] sm:$0xff]
      %v1507 = vld [vmem:[%s3 + $0xec8] sm:$0xff]
      %v1508 = vld [vmem:[%s3 + $0xed0] sm:$0xff]
      %v1509 = vld [vmem:[%s3 + $0xed8] sm:$0xff]
      %v1510 = vld [vmem:[%s3 + $0xee0] sm:$0xff]
      %v1511 = vld [vmem:[%s3 + $0xee8] sm:$0xff]
      %v1512 = vld [vmem:[%s3 + $0xef0] sm:$0xff]
      %v1513 = vld [vmem:[%s3 + $0xef8] sm:$0xff]
      %v1514 = vld [vmem:[%s3 + $0xf00] sm:$0xff]
      %v1515 = vld [vmem:[%s3 + $0xf08] sm:$0xff]
      %v1516 = vld [vmem:[%s3 + $0xf10] sm:$0xff]
      %v1517 = vld [vmem:[%s3 + $0xf18] sm:$0xff]
      %v1518 = vld [vmem:[%s3 + $0xf20] sm:$0xff]
      %v1519 = vld [vmem:[%s3 + $0xf28] sm:$0xff]
      %v1520 = vld [vmem:[%s3 + $0xf30] sm:$0xff]
      %v1521 = vld [vmem:[%s3 + $0xf38] sm:$0xff]
      %v1522 = vld [vmem:[%s3 + $0xf40] sm:$0xff]
      %v1523 = vld [vmem:[%s3 + $0xf48] sm:$0xff]
      %v1524 = vld [vmem:[%s3 + $0xf50] sm:$0xff]
      %v1525 = vld [vmem:[%s3 + $0xf58] sm:$0xff]
      %v1526 = vld [vmem:[%s3 + $0xf60] sm:$0xff]
      %v1527 = vld [vmem:[%s3 + $0xf68] sm:$0xff]
      %v1528 = vld [vmem:[%s3 + $0xf70] sm:$0xff]
      %v1529 = vld [vmem:[%s3 + $0xf78] sm:$0xff]
      %v1530 = vld [vmem:[%s3 + $0xf80] sm:$0xff]
      %v1531 = vld [vmem:[%s3 + $0xf88] sm:$0xff]
      %v1532 = vld [vmem:[%s3 + $0xf90] sm:$0xff]
      %v1533 = vld [vmem:[%s3 + $0xf98] sm:$0xff]
      %v1534 = vld [vmem:[%s3 + $0xfa0] sm:$0xff]
      %v1535 = vld [vmem:[%s3 + $0xfa8] sm:$0xff]
      %v1536 = vld [vmem:[%s3 + $0xfb0] sm:$0xff]
      %v1537 = vld [vmem:[%s3 + $0xfb8] sm:$0xff]
      %v1538 = vld [vmem:[%s3 + $0xfc0] sm:$0xff]
      %v1539 = vld [vmem:[%s3 + $0xfc8] sm:$0xff]
      %v1540 = vld [vmem:[%s3 + $0xfd0] sm:$0xff]
      %v1541 = vld [vmem:[%s3 + $0xfd8] sm:$0xff]
      %v1542 = vld [vmem:[%s3 + $0xfe0] sm:$0xff]
      %v1543 = vld [vmem:[%s3 + $0xfe8] sm:$0xff]
      %v1544 = vld [vmem:[%s3 + $0xff0] sm:$0xff]
      %v1545 = vld [vmem:[%s3 + $0xff8] sm:$0xff]
      %v1546 = vld [vmem:[%s3 + $0x1000] sm:$0xff]
      %v1547 = vld [vmem:[%s3 + $0x1008] sm:$0xff]
      %v1548 = vld [vmem:[%s3 + $0x1010] sm:$0xff]
      %v1549 = vld [vmem:[%s3 + $0x1018] sm:$0xff]
      %v1550 = vld [vmem:[%s3 + $0x1020] sm:$0xff]
      %v1551 = vld [vmem:[%s3 + $0x1028] sm:$0xff]
      %v1552 = vld [vmem:[%s3 + $0x1030] sm:$0xff]
      %v1553 = vld [vmem:[%s3 + $0x1038] sm:$0xff]
      %v1554 = vld [vmem:[%s3 + $0x1040] sm:$0xff]
      %v1555 = vld [vmem:[%s3 + $0x1048] sm:$0xff]
      %v1556 = vld [vmem:[%s3 + $0x1050] sm:$0xff]
      %v1557 = vld [vmem:[%s3 + $0x1058] sm:$0xff]
      %v1558 = vld [vmem:[%s3 + $0x1060] sm:$0xff]
      %v1559 = vld [vmem:[%s3 + $0x1068] sm:$0xff]
      %v1560 = vld [vmem:[%s3 + $0x1070] sm:$0xff]
      %v1561 = vld [vmem:[%s3 + $0x1078] sm:$0xff]
      %v1562 = vld [vmem:[%s3 + $0x1080] sm:$0xff]
      %v1563 = vld [vmem:[%s3 + $0x1088] sm:$0xff]
      %v1564 = vld [vmem:[%s3 + $0x1090] sm:$0xff]
      %v1565 = vld [vmem:[%s3 + $0x1098] sm:$0xff]
      %v1566 = vld [vmem:[%s3 + $0x10a0] sm:$0xff]
      %v1567 = vld [vmem:[%s3 + $0x10a8] sm:$0xff]
      %v1568 = vld [vmem:[%s3 + $0x10b0] sm:$0xff]
      %v1569 = vld [vmem:[%s3 + $0x10b8] sm:$0xff]
      %v1570 = vld [vmem:[%s3 + $0x10c0] sm:$0xff]
      %v1571 = vld [vmem:[%s3 + $0x10c8] sm:$0xff]
      %v1572 = vld [vmem:[%s3 + $0x10d0] sm:$0xff]
      %v1573 = vld [vmem:[%s3 + $0x10d8] sm:$0xff]
      %v1574 = vld [vmem:[%s3 + $0x10e0] sm:$0xff]
      %v1575 = vld [vmem:[%s3 + $0x10e8] sm:$0xff]
      %v1576 = vld [vmem:[%s3 + $0x10f0] sm:$0xff]
      %v1577 = vld [vmem:[%s3 + $0x10f8] sm:$0xff]
      %v1578 = vld [vmem:[%s3 + $0x1100] sm:$0xff]
      %v1579 = vld [vmem:[%s3 + $0x1108] sm:$0xff]
      %v1580 = vld [vmem:[%s3 + $0x1110] sm:$0xff]
      %v1581 = vld [vmem:[%s3 + $0x1118] sm:$0xff]
      %v1582 = vld [vmem:[%s3 + $0x1120] sm:$0xff]
      %v1583 = vld [vmem:[%s3 + $0x1128] sm:$0xff]
      %v1584 = vld [vmem:[%s3 + $0x1130] sm:$0xff]
      %v1585 = vld [vmem:[%s3 + $0x1138] sm:$0xff]
      %v1586 = vld [vmem:[%s3 + $0x1140] sm:$0xff]
      %v1587 = vld [vmem:[%s3 + $0x1148] sm:$0xff]
      %v1588 = vld [vmem:[%s3 + $0x1150] sm:$0xff]
      %v1589 = vld [vmem:[%s3 + $0x1158] sm:$0xff]
      %v1590 = vld [vmem:[%s3 + $0x1160] sm:$0xff]
      %v1591 = vld [vmem:[%s3 + $0x1168] sm:$0xff]
      %v1592 = vld [vmem:[%s3 + $0x1170] sm:$0xff]
      %v1593 = vld [vmem:[%s3 + $0x1178] sm:$0xff]
      %v1594 = vld [vmem:[%s3 + $0x1180] sm:$0xff]
      %v1595 = vld [vmem:[%s3 + $0x1188] sm:$0xff]
      %v1596 = vld [vmem:[%s3 + $0x1190] sm:$0xff]
      %v1597 = vld [vmem:[%s3 + $0x1198] sm:$0xff]
      %v1598 = vld [vmem:[%s3 + $0x11a0] sm:$0xff]
      %v1599 = vld [vmem:[%s3 + $0x11a8] sm:$0xff]
      %v1600 = vld [vmem:[%s3 + $0x11b0] sm:$0xff]
      %v1601 = vld [vmem:[%s3 + $0x11b8] sm:$0xff]
      %v1602 = vld [vmem:[%s3 + $0x11c0] sm:$0xff]
      %v1603 = vld [vmem:[%s3 + $0x11c8] sm:$0xff]
      %v1604 = vld [vmem:[%s3 + $0x11d0] sm:$0xff]
      %v1605 = vld [vmem:[%s3 + $0x11d8] sm:$0xff]
      %v1606 = vld [vmem:[%s3 + $0x11e0] sm:$0xff]
      %v1607 = vld [vmem:[%s3 + $0x11e8] sm:$0xff]
      %v1608 = vld [vmem:[%s3 + $0x11f0] sm:$0xff]
      %v1609 = vld [vmem:[%s3 + $0x11f8] sm:$0xff]
      %v1610 = vld [vmem:[%s3 + $0x1200] sm:$0xff]
      %v1611 = vld [vmem:[%s3 + $0x1208] sm:$0xff]
      %v1612 = vld [vmem:[%s3 + $0x1210] sm:$0xff]
      %v1613 = vld [vmem:[%s3 + $0x1218] sm:$0xff]
      %v1614 = vld [vmem:[%s3 + $0x1220] sm:$0xff]
      %v1615 = vld [vmem:[%s3 + $0x1228] sm:$0xff]
      %v1616 = vld [vmem:[%s3 + $0x1230] sm:$0xff]
      %v1617 = vld [vmem:[%s3 + $0x1238] sm:$0xff]
      %v1618 = vld [vmem:[%s3 + $0x1240] sm:$0xff]
      %v1619 = vld [vmem:[%s3 + $0x1248] sm:$0xff]
      %v1620 = vld [vmem:[%s3 + $0x1250] sm:$0xff]
      %v1621 = vld [vmem:[%s3 + $0x1258] sm:$0xff]
      %v1622 = vld [vmem:[%s3 + $0x1260] sm:$0xff]
      %v1623 = vld [vmem:[%s3 + $0x1268] sm:$0xff]
      %v1624 = vld [vmem:[%s3 + $0x1270] sm:$0xff]
      %v1625 = vld [vmem:[%s3 + $0x1278] sm:$0xff]
      %v1626 = vld [vmem:[%s3 + $0x1280] sm:$0xff]
      %v1627 = vld [vmem:[%s3 + $0x1288] sm:$0xff]
      %v1628 = vld [vmem:[%s3 + $0x1290] sm:$0xff]
      %v1629 = vld [vmem:[%s3 + $0x1298] sm:$0xff]
      %v1630 = vld [vmem:[%s3 + $0x12a0] sm:$0xff]
      %v1631 = vld [vmem:[%s3 + $0x12a8] sm:$0xff]
      %v1632 = vld [vmem:[%s3 + $0x12b0] sm:$0xff]
      %v1633 = vld [vmem:[%s3 + $0x12b8] sm:$0xff]
      %v1634 = vld [vmem:[%s3 + $0x12c0] sm:$0xff]
      %v1635 = vld [vmem:[%s3 + $0x12c8] sm:$0xff]
      %v1636 = vld [vmem:[%s3 + $0x12d0] sm:$0xff]
      %v1637 = vld [vmem:[%s3 + $0x12d8] sm:$0xff]
      %v1638 = vld [vmem:[%s3 + $0x12e0] sm:$0xff]
      %v1639 = vld [vmem:[%s3 + $0x12e8] sm:$0xff]
      %v1640 = vld [vmem:[%s3 + $0x12f0] sm:$0xff]
      %v1641 = vld [vmem:[%s3 + $0x12f8] sm:$0xff]
      %v1642 = vld [vmem:[%s3 + $0x1300] sm:$0xff]
      %v1643 = vld [vmem:[%s3 + $0x1308] sm:$0xff]
      %v1644 = vld [vmem:[%s3 + $0x1310] sm:$0xff]
      %v1645 = vld [vmem:[%s3 + $0x1318] sm:$0xff]
      %v1646 = vld [vmem:[%s3 + $0x1320] sm:$0xff]
      %v1647 = vld [vmem:[%s3 + $0x1328] sm:$0xff]
      %v1648 = vld [vmem:[%s3 + $0x1330] sm:$0xff]
      %v1649 = vld [vmem:[%s3 + $0x1338] sm:$0xff]
      %v1650 = vld [vmem:[%s3 + $0x1340] sm:$0xff]
      %v1651 = vld [vmem:[%s3 + $0x1348] sm:$0xff]
      %v1652 = vld [vmem:[%s3 + $0x1350] sm:$0xff]
      %v1653 = vld [vmem:[%s3 + $0x1358] sm:$0xff]
      %v1654 = vld [vmem:[%s3 + $0x1360] sm:$0xff]
      %v1655 = vld [vmem:[%s3 + $0x1368] sm:$0xff]
      %v1656 = vld [vmem:[%s3 + $0x1370] sm:$0xff]
      %v1657 = vld [vmem:[%s3 + $0x1378] sm:$0xff]
      %v1658 = vld [vmem:[%s3 + $0x1380] sm:$0xff]
      %v1659 = vld [vmem:[%s3 + $0x1388] sm:$0xff]
      %v1660 = vld [vmem:[%s3 + $0x1390] sm:$0xff]
      %v1661 = vld [vmem:[%s3 + $0x1398] sm:$0xff]
      %v1662 = vld [vmem:[%s3 + $0x13a0] sm:$0xff]
      %v1663 = vld [vmem:[%s3 + $0x13a8] sm:$0xff]
      %v1664 = vld [vmem:[%s3 + $0x13b0] sm:$0xff]
      %v1665 = vld [vmem:[%s3 + $0x13b8] sm:$0xff]
      %v1666 = vld [vmem:[%s3 + $0x13c0] sm:$0xff]
      %v1667 = vld [vmem:[%s3 + $0x13c8] sm:$0xff]
      %v1668 = vld [vmem:[%s3 + $0x13d0] sm:$0xff]
      %v1669 = vld [vmem:[%s3 + $0x13d8] sm:$0xff]
      %v1670 = vld [vmem:[%s3 + $0x13e0] sm:$0xff]
      %v1671 = vld [vmem:[%s3 + $0x13e8] sm:$0xff]
      %v1672 = vld [vmem:[%s3 + $0x13f0] sm:$0xff]
      %v1673 = vld [vmem:[%s3 + $0x13f8] sm:$0xff]
      %v1674 = vld [vmem:[%s3 + $0x1400] sm:$0xff]
      %v1675 = vld [vmem:[%s3 + $0x1408] sm:$0xff]
      %v1676 = vld [vmem:[%s3 + $0x1410] sm:$0xff]
      %v1677 = vld [vmem:[%s3 + $0x1418] sm:$0xff]
      %v1678 = vld [vmem:[%s3 + $0x1420] sm:$0xff]
      %v1679 = vld [vmem:[%s3 + $0x1428] sm:$0xff]
      %v1680 = vld [vmem:[%s3 + $0x1430] sm:$0xff]
      %v1681 = vld [vmem:[%s3 + $0x1438] sm:$0xff]
      %v1682 = vld [vmem:[%s3 + $0x1440] sm:$0xff]
      %v1683 = vld [vmem:[%s3 + $0x1448] sm:$0xff]
      %v1684 = vld [vmem:[%s3 + $0x1450] sm:$0xff]
      %v1685 = vld [vmem:[%s3 + $0x1458] sm:$0xff]
      %v1686 = vld [vmem:[%s3 + $0x1460] sm:$0xff]
      %v1687 = vld [vmem:[%s3 + $0x1468] sm:$0xff]
      %v1688 = vld [vmem:[%s3 + $0x1470] sm:$0xff]
      %v1689 = vld [vmem:[%s3 + $0x1478] sm:$0xff]
      %v1690 = vld [vmem:[%s3 + $0x1480] sm:$0xff]
      %v1691 = vld [vmem:[%s3 + $0x1488] sm:$0xff]
      %v1692 = vld [vmem:[%s3 + $0x1490] sm:$0xff]
      %v1693 = vld [vmem:[%s3 + $0x1498] sm:$0xff]
      %v1694 = vld [vmem:[%s3 + $0x14a0] sm:$0xff]
      %v1695 = vld [vmem:[%s3 + $0x14a8] sm:$0xff]
      %v1696 = vld [vmem:[%s3 + $0x14b0] sm:$0xff]
      %v1697 = vld [vmem:[%s3 + $0x14b8] sm:$0xff]
      %v1698 = vld [vmem:[%s3 + $0x14c0] sm:$0xff]
      %v1699 = vld [vmem:[%s3 + $0x14c8] sm:$0xff]
      %v1700 = vld [vmem:[%s3 + $0x14d0] sm:$0xff]
      %v1701 = vld [vmem:[%s3 + $0x14d8] sm:$0xff]
      %v1702 = vld [vmem:[%s3 + $0x14e0] sm:$0xff]
      %v1703 = vld [vmem:[%s3 + $0x14e8] sm:$0xff]
      %v1704 = vld [vmem:[%s3 + $0x14f0] sm:$0xff]
      %v1705 = vld [vmem:[%s3 + $0x14f8] sm:$0xff]
      %v1706 = vld [vmem:[%s3 + $0x1500] sm:$0xff]
      %v1707 = vld [vmem:[%s3 + $0x1508] sm:$0xff]
      %v1708 = vld [vmem:[%s3 + $0x1510] sm:$0xff]
      %v1709 = vld [vmem:[%s3 + $0x1518] sm:$0xff]
      %v1710 = vld [vmem:[%s3 + $0x1520] sm:$0xff]
      %v1711 = vld [vmem:[%s3 + $0x1528] sm:$0xff]
      %v1712 = vld [vmem:[%s3 + $0x1530] sm:$0xff]
      %v1713 = vld [vmem:[%s3 + $0x1538] sm:$0xff]
      %v1714 = vld [vmem:[%s3 + $0x1540] sm:$0xff]
      %v1715 = vld [vmem:[%s3 + $0x1548] sm:$0xff]
      %v1716 = vld [vmem:[%s3 + $0x1550] sm:$0xff]
      %v1717 = vld [vmem:[%s3 + $0x1558] sm:$0xff]
      %v1718 = vld [vmem:[%s3 + $0x1560] sm:$0xff]
      %v1719 = vld [vmem:[%s3 + $0x1568] sm:$0xff]
      %v1720 = vld [vmem:[%s3 + $0x1570] sm:$0xff]
      %v1721 = vld [vmem:[%s3 + $0x1578] sm:$0xff]
      %v1722 = vld [vmem:[%s3 + $0x1580] sm:$0xff]
      %v1723 = vld [vmem:[%s3 + $0x1588] sm:$0xff]
      %v1724 = vld [vmem:[%s3 + $0x1590] sm:$0xff]
      %v1725 = vld [vmem:[%s3 + $0x1598] sm:$0xff]
      %v1726 = vld [vmem:[%s3 + $0x15a0] sm:$0xff]
      %v1727 = vld [vmem:[%s3 + $0x15a8] sm:$0xff]
      %v1728 = vld [vmem:[%s3 + $0x15b0] sm:$0xff]
      %v1729 = vld [vmem:[%s3 + $0x15b8] sm:$0xff]
      %v1730 = vld [vmem:[%s3 + $0x15c0] sm:$0xff]
      %v1731 = vld [vmem:[%s3 + $0x15c8] sm:$0xff]
      %v1732 = vld [vmem:[%s3 + $0x15d0] sm:$0xff]
      %v1733 = vld [vmem:[%s3 + $0x15d8] sm:$0xff]
      %v1734 = vld [vmem:[%s3 + $0x15e0] sm:$0xff]
      %v1735 = vld [vmem:[%s3 + $0x15e8] sm:$0xff]
      %v1736 = vld [vmem:[%s3 + $0x15f0] sm:$0xff]
      %v1737 = vld [vmem:[%s3 + $0x15f8] sm:$0xff]
      %v1738 = vld [vmem:[%s3 + $0x1600] sm:$0xff]
      %v1739 = vld [vmem:[%s3 + $0x1608] sm:$0xff]
      %v1740 = vld [vmem:[%s3 + $0x1610] sm:$0xff]
      %v1741 = vld [vmem:[%s3 + $0x1618] sm:$0xff]
      %v1742 = vld [vmem:[%s3 + $0x1620] sm:$0xff]
      %v1743 = vld [vmem:[%s3 + $0x1628] sm:$0xff]
      %v1744 = vld [vmem:[%s3 + $0x1630] sm:$0xff]
      %v1745 = vld [vmem:[%s3 + $0x1638] sm:$0xff]
      %v1746 = vld [vmem:[%s3 + $0x1640] sm:$0xff]
      %v1747 = vld [vmem:[%s3 + $0x1648] sm:$0xff]
      %v1748 = vld [vmem:[%s3 + $0x1650] sm:$0xff]
      %v1749 = vld [vmem:[%s3 + $0x1658] sm:$0xff]
      %v1750 = vld [vmem:[%s3 + $0x1660] sm:$0xff]
      %v1751 = vld [vmem:[%s3 + $0x1668] sm:$0xff]
      %v1752 = vld [vmem:[%s3 + $0x1670] sm:$0xff]
      %v1753 = vld [vmem:[%s3 + $0x1678] sm:$0xff]
      %v1754 = vld [vmem:[%s3 + $0x1680] sm:$0xff]
      %v1755 = vld [vmem:[%s3 + $0x1688] sm:$0xff]
      %v1756 = vld [vmem:[%s3 + $0x1690] sm:$0xff]
      %v1757 = vld [vmem:[%s3 + $0x1698] sm:$0xff]
      %v1758 = vld [vmem:[%s3 + $0x16a0] sm:$0xff]
      %v1759 = vld [vmem:[%s3 + $0x16a8] sm:$0xff]
      %v1760 = vld [vmem:[%s3 + $0x16b0] sm:$0xff]
      %v1761 = vld [vmem:[%s3 + $0x16b8] sm:$0xff]
      %v1762 = vld [vmem:[%s3 + $0x16c0] sm:$0xff]
      %v1763 = vld [vmem:[%s3 + $0x16c8] sm:$0xff]
      %v1764 = vld [vmem:[%s3 + $0x16d0] sm:$0xff]
      %v1765 = vld [vmem:[%s3 + $0x16d8] sm:$0xff]
      %v1766 = vld [vmem:[%s3 + $0x16e0] sm:$0xff]
      %v1767 = vld [vmem:[%s3 + $0x16e8] sm:$0xff]
      %v1768 = vld [vmem:[%s3 + $0x16f0] sm:$0xff]
      %v1769 = vld [vmem:[%s3 + $0x16f8] sm:$0xff]
      %v1770 = vld [vmem:[%s3 + $0x1700] sm:$0xff]
      %v1771 = vld [vmem:[%s3 + $0x1708] sm:$0xff]
      %v1772 = vld [vmem:[%s3 + $0x1710] sm:$0xff]
      %v1773 = vld [vmem:[%s3 + $0x1718] sm:$0xff]
      %v1774 = vld [vmem:[%s3 + $0x1720] sm:$0xff]
      %v1775 = vld [vmem:[%s3 + $0x1728] sm:$0xff]
      %v1776 = vld [vmem:[%s3 + $0x1730] sm:$0xff]
      %v1777 = vld [vmem:[%s3 + $0x1738] sm:$0xff]
      %v1778 = vld [vmem:[%s3 + $0x1740] sm:$0xff]
      %v1779 = vld [vmem:[%s3 + $0x1748] sm:$0xff]
      %v1780 = vld [vmem:[%s3 + $0x1750] sm:$0xff]
      %v1781 = vld [vmem:[%s3 + $0x1758] sm:$0xff]
      %v1782 = vld [vmem:[%s3 + $0x1760] sm:$0xff]
      %v1783 = vld [vmem:[%s3 + $0x1768] sm:$0xff]
      %v1784 = vld [vmem:[%s3 + $0x1770] sm:$0xff]
      %v1785 = vld [vmem:[%s3 + $0x1778] sm:$0xff]
      %v1786 = vld [vmem:[%s3 + $0x1780] sm:$0xff]
      %v1787 = vld [vmem:[%s3 + $0x1788] sm:$0xff]
      %v1788 = vld [vmem:[%s3 + $0x1790] sm:$0xff]
      %v1789 = vld [vmem:[%s3 + $0x1798] sm:$0xff]
      %v1790 = vld [vmem:[%s3 + $0x17a0] sm:$0xff]
      %v1791 = vld [vmem:[%s3 + $0x17a8] sm:$0xff]
      %v1792 = vld [vmem:[%s3 + $0x17b0] sm:$0xff]
      %v1793 = vld [vmem:[%s3 + $0x17b8] sm:$0xff]
      %v1794 = vld [vmem:[%s3 + $0x17c0] sm:$0xff]
      %v1795 = vld [vmem:[%s3 + $0x17c8] sm:$0xff]
      %v1796 = vld [vmem:[%s3 + $0x17d0] sm:$0xff]
      %v1797 = vld [vmem:[%s3 + $0x17d8] sm:$0xff]
      %v1798 = vld [vmem:[%s3 + $0x17e0] sm:$0xff]
      %v1799 = vld [vmem:[%s3 + $0x17e8] sm:$0xff]
      %v1800 = vld [vmem:[%s3 + $0x17f0] sm:$0xff]
      %v1801 = vld [vmem:[%s3 + $0x17f8] sm:$0xff]
      %v1802 = vld [vmem:[%s3 + $0x1800] sm:$0xff]
      %v1803 = vld [vmem:[%s3 + $0x1808] sm:$0xff]
      %v1804 = vld [vmem:[%s3 + $0x1810] sm:$0xff]
      %v1805 = vld [vmem:[%s3 + $0x1818] sm:$0xff]
      %v1806 = vld [vmem:[%s3 + $0x1820] sm:$0xff]
      %v1807 = vld [vmem:[%s3 + $0x1828] sm:$0xff]
      %v1808 = vld [vmem:[%s3 + $0x1830] sm:$0xff]
      %v1809 = vld [vmem:[%s3 + $0x1838] sm:$0xff]
      %v1810 = vld [vmem:[%s3 + $0x1840] sm:$0xff]
      %v1811 = vld [vmem:[%s3 + $0x1848] sm:$0xff]
      %v1812 = vld [vmem:[%s3 + $0x1850] sm:$0xff]
      %v1813 = vld [vmem:[%s3 + $0x1858] sm:$0xff]
      %v1814 = vld [vmem:[%s3 + $0x1860] sm:$0xff]
      %v1815 = vld [vmem:[%s3 + $0x1868] sm:$0xff]
      %v1816 = vld [vmem:[%s3 + $0x1870] sm:$0xff]
      %v1817 = vld [vmem:[%s3 + $0x1878] sm:$0xff]
      %v1818 = vld [vmem:[%s3 + $0x1880] sm:$0xff]
      %v1819 = vld [vmem:[%s3 + $0x1888] sm:$0xff]
      %v1820 = vld [vmem:[%s3 + $0x1890] sm:$0xff]
      %v1821 = vld [vmem:[%s3 + $0x1898] sm:$0xff]
      %v1822 = vld [vmem:[%s3 + $0x18a0] sm:$0xff]
      %v1823 = vld [vmem:[%s3 + $0x18a8] sm:$0xff]
      %v1824 = vld [vmem:[%s3 + $0x18b0] sm:$0xff]
      %v1825 = vld [vmem:[%s3 + $0x18b8] sm:$0xff]
      %v1826 = vld [vmem:[%s3 + $0x18c0] sm:$0xff]
      %v1827 = vld [vmem:[%s3 + $0x18c8] sm:$0xff]
      %v1828 = vld [vmem:[%s3 + $0x18d0] sm:$0xff]
      %v1829 = vld [vmem:[%s3 + $0x18d8] sm:$0xff]
      %v1830 = vld [vmem:[%s3 + $0x18e0] sm:$0xff]
      %v1831 = vld [vmem:[%s3 + $0x18e8] sm:$0xff]
      %v1832 = vld [vmem:[%s3 + $0x18f0] sm:$0xff]
      %v1833 = vld [vmem:[%s3 + $0x18f8] sm:$0xff]
      %v1834 = vld [vmem:[%s3 + $0x1900] sm:$0xff]
      %v1835 = vld [vmem:[%s3 + $0x1908] sm:$0xff]
      %v1836 = vld [vmem:[%s3 + $0x1910] sm:$0xff]
      %v1837 = vld [vmem:[%s3 + $0x1918] sm:$0xff]
      %v1838 = vld [vmem:[%s3 + $0x1920] sm:$0xff]
      %v1839 = vld [vmem:[%s3 + $0x1928] sm:$0xff]
      %v1840 = vld [vmem:[%s3 + $0x1930] sm:$0xff]
      %v1841 = vld [vmem:[%s3 + $0x1938] sm:$0xff]
      %v1842 = vld [vmem:[%s3 + $0x1940] sm:$0xff]
      %v1843 = vld [vmem:[%s3 + $0x1948] sm:$0xff]
      %v1844 = vld [vmem:[%s3 + $0x1950] sm:$0xff]
      %v1845 = vld [vmem:[%s3 + $0x1958] sm:$0xff]
      %v1846 = vld [vmem:[%s3 + $0x1960] sm:$0xff]
      %v1847 = vld [vmem:[%s3 + $0x1968] sm:$0xff]
      %v1848 = vld [vmem:[%s3 + $0x1970] sm:$0xff]
      %v1849 = vld [vmem:[%s3 + $0x1978] sm:$0xff]
      %v1850 = vld [vmem:[%s3 + $0x1980] sm:$0xff]
      %v1851 = vld [vmem:[%s3 + $0x1988] sm:$0xff]
      %v1852 = vld [vmem:[%s3 + $0x1990] sm:$0xff]
      %v1853 = vld [vmem:[%s3 + $0x1998] sm:$0xff]
      %v1854 = vld [vmem:[%s3 + $0x19a0] sm:$0xff]
      %v1855 = vld [vmem:[%s3 + $0x19a8] sm:$0xff]
      %v1856 = vld [vmem:[%s3 + $0x19b0] sm:$0xff]
      %v1857 = vld [vmem:[%s3 + $0x19b8] sm:$0xff]
      %v1858 = vld [vmem:[%s3 + $0x19c0] sm:$0xff]
      %v1859 = vld [vmem:[%s3 + $0x19c8] sm:$0xff]
      %v1860 = vld [vmem:[%s3 + $0x19d0] sm:$0xff]
      %v1861 = vld [vmem:[%s3 + $0x19d8] sm:$0xff]
      %v1862 = vld [vmem:[%s3 + $0x19e0] sm:$0xff]
      %v1863 = vld [vmem:[%s3 + $0x19e8] sm:$0xff]
      %v1864 = vld [vmem:[%s3 + $0x19f0] sm:$0xff]
      %v1865 = vld [vmem:[%s3 + $0x19f8] sm:$0xff]
      %v1866 = vld [vmem:[%s3 + $0x1a00] sm:$0xff]
      %v1867 = vld [vmem:[%s3 + $0x1a08] sm:$0xff]
      %v1868 = vld [vmem:[%s3 + $0x1a10] sm:$0xff]
      %v1869 = vld [vmem:[%s3 + $0x1a18] sm:$0xff]
      %v1870 = vld [vmem:[%s3 + $0x1a20] sm:$0xff]
      %v1871 = vld [vmem:[%s3 + $0x1a28] sm:$0xff]
      %v1872 = vld [vmem:[%s3 + $0x1a30] sm:$0xff]
      %v1873 = vld [vmem:[%s3 + $0x1a38] sm:$0xff]
      %v1874 = vld [vmem:[%s3 + $0x1a40] sm:$0xff]
      %v1875 = vld [vmem:[%s3 + $0x1a48] sm:$0xff]
      %v1876 = vld [vmem:[%s3 + $0x1a50] sm:$0xff]
      %v1877 = vld [vmem:[%s3 + $0x1a58] sm:$0xff]
      %v1878 = vld [vmem:[%s3 + $0x1a60] sm:$0xff]
      %v1879 = vld [vmem:[%s3 + $0x1a68] sm:$0xff]
      %v1880 = vld [vmem:[%s3 + $0x1a70] sm:$0xff]
      %v1881 = vld [vmem:[%s3 + $0x1a78] sm:$0xff]
      %v1882 = vld [vmem:[%s3 + $0x1a80] sm:$0xff]
      %v1883 = vld [vmem:[%s3 + $0x1a88] sm:$0xff]
      %v1884 = vld [vmem:[%s3 + $0x1a90] sm:$0xff]
      %v1885 = vld [vmem:[%s3 + $0x1a98] sm:$0xff]
      %v1886 = vld [vmem:[%s3 + $0x1aa0] sm:$0xff]
      %v1887 = vld [vmem:[%s3 + $0x1aa8] sm:$0xff]
      %v1888 = vld [vmem:[%s3 + $0x1ab0] sm:$0xff]
      %v1889 = vld [vmem:[%s3 + $0x1ab8] sm:$0xff]
      %v1890 = vld [vmem:[%s3 + $0x1ac0] sm:$0xff]
      %v1891 = vld [vmem:[%s3 + $0x1ac8] sm:$0xff]
      %v1892 = vld [vmem:[%s3 + $0x1ad0] sm:$0xff]
      %v1893 = vld [vmem:[%s3 + $0x1ad8] sm:$0xff]
      %v1894 = vld [vmem:[%s3 + $0x1ae0] sm:$0xff]
      %v1895 = vld [vmem:[%s3 + $0x1ae8] sm:$0xff]
      %v1896 = vld [vmem:[%s3 + $0x1af0] sm:$0xff]
      %v1897 = vld [vmem:[%s3 + $0x1af8] sm:$0xff]
      %v1898 = vld [vmem:[%s3 + $0x1b00] sm:$0xff]
      %v1899 = vld [vmem:[%s3 + $0x1b08] sm:$0xff]
      %v1900 = vld [vmem:[%s3 + $0x1b10] sm:$0xff]
      %v1901 = vld [vmem:[%s3 + $0x1b18] sm:$0xff]
      %v1902 = vld [vmem:[%s3 + $0x1b20] sm:$0xff]
      %v1903 = vld [vmem:[%s3 + $0x1b28] sm:$0xff]
      %v1904 = vld [vmem:[%s3 + $0x1b30] sm:$0xff]
      %v1905 = vld [vmem:[%s3 + $0x1b38] sm:$0xff]
      %v1906 = vld [vmem:[%s3 + $0x1b40] sm:$0xff]
      %v1907 = vld [vmem:[%s3 + $0x1b48] sm:$0xff]
      %v1908 = vld [vmem:[%s3 + $0x1b50] sm:$0xff]
      %v1909 = vld [vmem:[%s3 + $0x1b58] sm:$0xff]
      %v1910 = vld [vmem:[%s3 + $0x1b60] sm:$0xff]
      %v1911 = vld [vmem:[%s3 + $0x1b68] sm:$0xff]
      %v1912 = vld [vmem:[%s3 + $0x1b70] sm:$0xff]
      %v1913 = vld [vmem:[%s3 + $0x1b78] sm:$0xff]
      %v1914 = vld [vmem:[%s3 + $0x1b80] sm:$0xff]
      %v1915 = vld [vmem:[%s3 + $0x1b88] sm:$0xff]
      %v1916 = vld [vmem:[%s3 + $0x1b90] sm:$0xff]
      %v1917 = vld [vmem:[%s3 + $0x1b98] sm:$0xff]
      %v1918 = vld [vmem:[%s3 + $0x1ba0] sm:$0xff]
      %v1919 = vld [vmem:[%s3 + $0x1ba8] sm:$0xff]
      %v1920 = vld [vmem:[%s3 + $0x1bb0] sm:$0xff]
      %v1921 = vld [vmem:[%s3 + $0x1bb8] sm:$0xff]
      %v1922 = vld [vmem:[%s3 + $0x1bc0] sm:$0xff]
      %v1923 = vld [vmem:[%s3 + $0x1bc8] sm:$0xff]
      %v1924 = vld [vmem:[%s3 + $0x1bd0] sm:$0xff]
      %v1925 = vld [vmem:[%s3 + $0x1bd8] sm:$0xff]
      %v1926 = vld [vmem:[%s3 + $0x1be0] sm:$0xff]
      %v1927 = vld [vmem:[%s3 + $0x1be8] sm:$0xff]
      %v1928 = vld [vmem:[%s3 + $0x1bf0] sm:$0xff]
      %v1929 = vld [vmem:[%s3 + $0x1bf8] sm:$0xff]
      %v1930 = vld [vmem:[%s3 + $0x1c00] sm:$0xff]
      %v1931 = vld [vmem:[%s3 + $0x1c08] sm:$0xff]
      %v1932 = vld [vmem:[%s3 + $0x1c10] sm:$0xff]
      %v1933 = vld [vmem:[%s3 + $0x1c18] sm:$0xff]
      %v1934 = vld [vmem:[%s3 + $0x1c20] sm:$0xff]
      %v1935 = vld [vmem:[%s3 + $0x1c28] sm:$0xff]
      %v1936 = vld [vmem:[%s3 + $0x1c30] sm:$0xff]
      %v1937 = vld [vmem:[%s3 + $0x1c38] sm:$0xff]
      %v1938 = vld [vmem:[%s3 + $0x1c40] sm:$0xff]
      %v1939 = vld [vmem:[%s3 + $0x1c48] sm:$0xff]
      %v1940 = vld [vmem:[%s3 + $0x1c50] sm:$0xff]
      %v1941 = vld [vmem:[%s3 + $0x1c58] sm:$0xff]
      %v1942 = vld [vmem:[%s3 + $0x1c60] sm:$0xff]
      %v1943 = vld [vmem:[%s3 + $0x1c68] sm:$0xff]
      %v1944 = vld [vmem:[%s3 + $0x1c70] sm:$0xff]
      %v1945 = vld [vmem:[%s3 + $0x1c78] sm:$0xff]
      %v1946 = vld [vmem:[%s3 + $0x1c80] sm:$0xff]
      %v1947 = vld [vmem:[%s3 + $0x1c88] sm:$0xff]
      %v1948 = vld [vmem:[%s3 + $0x1c90] sm:$0xff]
      %v1949 = vld [vmem:[%s3 + $0x1c98] sm:$0xff]
      %v1950 = vld [vmem:[%s3 + $0x1ca0] sm:$0xff]
      %v1951 = vld [vmem:[%s3 + $0x1ca8] sm:$0xff]
      %v1952 = vld [vmem:[%s3 + $0x1cb0] sm:$0xff]
      %v1953 = vld [vmem:[%s3 + $0x1cb8] sm:$0xff]
      %v1954 = vld [vmem:[%s3 + $0x1cc0] sm:$0xff]
      %v1955 = vld [vmem:[%s3 + $0x1cc8] sm:$0xff]
      %v1956 = vld [vmem:[%s3 + $0x1cd0] sm:$0xff]
      %v1957 = vld [vmem:[%s3 + $0x1cd8] sm:$0xff]
      %v1958 = vld [vmem:[%s3 + $0x1ce0] sm:$0xff]
      %v1959 = vld [vmem:[%s3 + $0x1ce8] sm:$0xff]
      %v1960 = vld [vmem:[%s3 + $0x1cf0] sm:$0xff]
      %v1961 = vld [vmem:[%s3 + $0x1cf8] sm:$0xff]
      %v1962 = vld [vmem:[%s3 + $0x1d00] sm:$0xff]
      %v1963 = vld [vmem:[%s3 + $0x1d08] sm:$0xff]
      %v1964 = vld [vmem:[%s3 + $0x1d10] sm:$0xff]
      %v1965 = vld [vmem:[%s3 + $0x1d18] sm:$0xff]
      %v1966 = vld [vmem:[%s3 + $0x1d20] sm:$0xff]
      %v1967 = vld [vmem:[%s3 + $0x1d28] sm:$0xff]
      %v1968 = vld [vmem:[%s3 + $0x1d30] sm:$0xff]
      %v1969 = vld [vmem:[%s3 + $0x1d38] sm:$0xff]
      %v1970 = vld [vmem:[%s3 + $0x1d40] sm:$0xff]
      %v1971 = vld [vmem:[%s3 + $0x1d48] sm:$0xff]
      %v1972 = vld [vmem:[%s3 + $0x1d50] sm:$0xff]
      %v1973 = vld [vmem:[%s3 + $0x1d58] sm:$0xff]
      %v1974 = vld [vmem:[%s3 + $0x1d60] sm:$0xff]
      %v1975 = vld [vmem:[%s3 + $0x1d68] sm:$0xff]
      %v1976 = vld [vmem:[%s3 + $0x1d70] sm:$0xff]
      %v1977 = vld [vmem:[%s3 + $0x1d78] sm:$0xff]
      %v1978 = vld [vmem:[%s3 + $0x1d80] sm:$0xff]
      %v1979 = vld [vmem:[%s3 + $0x1d88] sm:$0xff]
      %v1980 = vld [vmem:[%s3 + $0x1d90] sm:$0xff]
      %v1981 = vld [vmem:[%s3 + $0x1d98] sm:$0xff]
      %v1982 = vld [vmem:[%s3 + $0x1da0] sm:$0xff]
      %v1983 = vld [vmem:[%s3 + $0x1da8] sm:$0xff]
      %v1984 = vld [vmem:[%s3 + $0x1db0] sm:$0xff]
      %v1985 = vld [vmem:[%s3 + $0x1db8] sm:$0xff]
      %v1986 = vld [vmem:[%s3 + $0x1dc0] sm:$0xff]
      %v1987 = vld [vmem:[%s3 + $0x1dc8] sm:$0xff]
      %v1988 = vld [vmem:[%s3 + $0x1dd0] sm:$0xff]
      %v1989 = vld [vmem:[%s3 + $0x1dd8] sm:$0xff]
      %v1990 = vld [vmem:[%s3 + $0x1de0] sm:$0xff]
      %v1991 = vld [vmem:[%s3 + $0x1de8] sm:$0xff]
      %v1992 = vld [vmem:[%s3 + $0x1df0] sm:$0xff]
      %v1993 = vld [vmem:[%s3 + $0x1df8] sm:$0xff]
      %v1994 = vld [vmem:[%s3 + $0x1e00] sm:$0xff]
      %v1995 = vld [vmem:[%s3 + $0x1e08] sm:$0xff]
      %v1996 = vld [vmem:[%s3 + $0x1e10] sm:$0xff]
      %v1997 = vld [vmem:[%s3 + $0x1e18] sm:$0xff]
      %v1998 = vld [vmem:[%s3 + $0x1e20] sm:$0xff]
      %v1999 = vld [vmem:[%s3 + $0x1e28] sm:$0xff]
      %v2000 = vld [vmem:[%s3 + $0x1e30] sm:$0xff]
      %v2001 = vld [vmem:[%s3 + $0x1e38] sm:$0xff]
      %v2002 = vld [vmem:[%s3 + $0x1e40] sm:$0xff]
      %v2003 = vld [vmem:[%s3 + $0x1e48] sm:$0xff]
      %v2004 = vld [vmem:[%s3 + $0x1e50] sm:$0xff]
      %v2005 = vld [vmem:[%s3 + $0x1e58] sm:$0xff]
      %v2006 = vld [vmem:[%s3 + $0x1e60] sm:$0xff]
      %v2007 = vld [vmem:[%s3 + $0x1e68] sm:$0xff]
      %v2008 = vld [vmem:[%s3 + $0x1e70] sm:$0xff]
      %v2009 = vld [vmem:[%s3 + $0x1e78] sm:$0xff]
      %v2010 = vld [vmem:[%s3 + $0x1e80] sm:$0xff]
      %v2011 = vld [vmem:[%s3 + $0x1e88] sm:$0xff]
      %v2012 = vld [vmem:[%s3 + $0x1e90] sm:$0xff]
      %v2013 = vld [vmem:[%s3 + $0x1e98] sm:$0xff]
      %v2014 = vld [vmem:[%s3 + $0x1ea0] sm:$0xff]
      %v2015 = vld [vmem:[%s3 + $0x1ea8] sm:$0xff]
      %v2016 = vld [vmem:[%s3 + $0x1eb0] sm:$0xff]
      %v2017 = vld [vmem:[%s3 + $0x1eb8] sm:$0xff]
      %v2018 = vld [vmem:[%s3 + $0x1ec0] sm:$0xff]
      %v2019 = vld [vmem:[%s3 + $0x1ec8] sm:$0xff]
      %v2020 = vld [vmem:[%s3 + $0x1ed0] sm:$0xff]
      %v2021 = vld [vmem:[%s3 + $0x1ed8] sm:$0xff]
      %v2022 = vld [vmem:[%s3 + $0x1ee0] sm:$0xff]
      %v2023 = vld [vmem:[%s3 + $0x1ee8] sm:$0xff]
      %v2024 = vld [vmem:[%s3 + $0x1ef0] sm:$0xff]
      %v2025 = vld [vmem:[%s3 + $0x1ef8] sm:$0xff]
      %v2026 = vld [vmem:[%s3 + $0x1f00] sm:$0xff]
      %v2027 = vld [vmem:[%s3 + $0x1f08] sm:$0xff]
      %v2028 = vld [vmem:[%s3 + $0x1f10] sm:$0xff]
      %v2029 = vld [vmem:[%s3 + $0x1f18] sm:$0xff]
      %v2030 = vld [vmem:[%s3 + $0x1f20] sm:$0xff]
      %v2031 = vld [vmem:[%s3 + $0x1f28] sm:$0xff]
      %v2032 = vld [vmem:[%s3 + $0x1f30] sm:$0xff]
      %v2033 = vld [vmem:[%s3 + $0x1f38] sm:$0xff]
      %v2034 = vld [vmem:[%s3 + $0x1f40] sm:$0xff]
      %v2035 = vld [vmem:[%s3 + $0x1f48] sm:$0xff]
      %v2036 = vld [vmem:[%s3 + $0x1f50] sm:$0xff]
      %v2037 = vld [vmem:[%s3 + $0x1f58] sm:$0xff]
      %v2038 = vld [vmem:[%s3 + $0x1f60] sm:$0xff]
      %v2039 = vld [vmem:[%s3 + $0x1f68] sm:$0xff]
      %v2040 = vld [vmem:[%s3 + $0x1f70] sm:$0xff]
      %v2041 = vld [vmem:[%s3 + $0x1f78] sm:$0xff]
      %v2042 = vld [vmem:[%s3 + $0x1f80] sm:$0xff]
      %v2043 = vld [vmem:[%s3 + $0x1f88] sm:$0xff]
      %v2044 = vld [vmem:[%s3 + $0x1f90] sm:$0xff]
      %v2045 = vld [vmem:[%s3 + $0x1f98] sm:$0xff]
      %v2046 = vld [vmem:[%s3 + $0x1fa0] sm:$0xff]
      %v2047 = vld [vmem:[%s3 + $0x1fa8] sm:$0xff]
      %v2048 = vld [vmem:[%s3 + $0x1fb0] sm:$0xff]
      %v2049 = vld [vmem:[%s3 + $0x1fb8] sm:$0xff]
      %v2050 = vld [vmem:[%s3 + $0x1fc0] sm:$0xff]
      %v2051 = vld [vmem:[%s3 + $0x1fc8] sm:$0xff]
      %v2052 = vld [vmem:[%s3 + $0x1fd0] sm:$0xff]
      %v2053 = vld [vmem:[%s3 + $0x1fd8] sm:$0xff]
      %v2054 = vld [vmem:[%s3 + $0x1fe0] sm:$0xff]
      %v2055 = vld [vmem:[%s3 + $0x1fe8] sm:$0xff]
      %v2056 = vld [vmem:[%s3 + $0x1ff0] sm:$0xff]
      %v2057 = vld [vmem:[%s3 + $0x1ff8] sm:$0xff]
      %v2058 = vld [vmem:[%s4] sm:$0xff]
      %v2060 = vlaneseq
      %v2061 = vshrl.u32 %v2060, 7
      %v2062 = vsub.s32 0, %v2061
      %v2063 = vrot.slane %v2058, %v2062
      %v2064 = vlaneseq
      %v2065 = vshrl.u32 %v2064, 7
      %v2066 = vsub.s32 1, %v2065
      %v2067 = vrot.slane %v2058, %v2066
      %v2068 = vlaneseq
      %v2069 = vshrl.u32 %v2068, 7
      %v2070 = vsub.s32 2, %v2069
      %v2071 = vrot.slane %v2058, %v2070
      %v2072 = vlaneseq
      %v2073 = vshrl.u32 %v2072, 7
      %v2074 = vsub.s32 3, %v2073
      %v2075 = vrot.slane %v2058, %v2074
      %v2076 = vlaneseq
      %v2077 = vshrl.u32 %v2076, 7
      %v2078 = vsub.s32 4, %v2077
      %v2079 = vrot.slane %v2058, %v2078
      %v2080 = vlaneseq
      %v2081 = vshrl.u32 %v2080, 7
      %v2082 = vsub.s32 5, %v2081
      %v2083 = vrot.slane %v2058, %v2082
      %v2084 = vlaneseq
      %v2085 = vshrl.u32 %v2084, 7
      %v2086 = vsub.s32 6, %v2085
      %v2087 = vrot.slane %v2058, %v2086
      %v2088 = vlaneseq
      %v2089 = vshrl.u32 %v2088, 7
      %v2090 = vsub.s32 7, %v2089
      %v2091 = vrot.slane %v2058, %v2090
      %2100 = vmatprep.subr.mxu0 %v1035
      %2101 = vmatpush1.msra.mxu0 %v1034
      %2102 = vmatprep.subr.mxu0 %v1043
      %2103 = vmatpush1.msra.mxu0 %v1042
      %2104 = vmatprep.subr.mxu0 %v1051
      %2105 = vmatpush1.msra.mxu0 %v1050
      %2106 = vmatprep.subr.mxu0 %v1059
      %2107 = vmatpush1.msra.mxu0 %v1058
      %2108 = vmatprep.subr.mxu0 %v1067
      %2109 = vmatpush1.msra.mxu0 %v1066
      %2110 = vmatprep.subr.mxu0 %v1075
      %2111 = vmatpush1.msra.mxu0 %v1074
      %2112 = vmatprep.subr.mxu0 %v1083
      %2113 = vmatpush1.msra.mxu0 %v1082
      %2114 = vmatprep.subr.mxu0 %v1091
      %2115 = vmatpush1.msra.mxu0 %v1090
      %2116 = vmatprep.subr.mxu0 %v1099
      %2117 = vmatpush1.msra.mxu0 %v1098
      %2118 = vmatprep.subr.mxu0 %v1107
      %2119 = vmatpush1.msra.mxu0 %v1106
      %2120 = vmatprep.subr.mxu0 %v1115
      %2121 = vmatpush1.msra.mxu0 %v1114
      %2122 = vmatprep.subr.mxu0 %v1123
      %2123 = vmatpush1.msra.mxu0 %v1122
      %2124 = vmatprep.subr.mxu0 %v1131
      %2125 = vmatpush1.msra.mxu0 %v1130
      %2126 = vmatprep.subr.mxu0 %v1139
      %2127 = vmatpush1.msra.mxu0 %v1138
      %2128 = vmatprep.subr.mxu0 %v1147
      %2129 = vmatpush1.msra.mxu0 %v1146
      %2130 = vmatprep.subr.mxu0 %v1155
      %2131 = vmatpush1.msra.mxu0 %v1154
      %2132 = vmatprep.subr.mxu0 %v1163
      %2133 = vmatpush1.msra.mxu0 %v1162
      %2134 = vmatprep.subr.mxu0 %v1171
      %2135 = vmatpush1.msra.mxu0 %v1170
      %2136 = vmatprep.subr.mxu0 %v1179
      %2137 = vmatpush1.msra.mxu0 %v1178
      %2138 = vmatprep.subr.mxu0 %v1187
      %2139 = vmatpush1.msra.mxu0 %v1186
      %2140 = vmatprep.subr.mxu0 %v1195
      %2141 = vmatpush1.msra.mxu0 %v1194
      %2142 = vmatprep.subr.mxu0 %v1203
      %2143 = vmatpush1.msra.mxu0 %v1202
      %2144 = vmatprep.subr.mxu0 %v1211
      %2145 = vmatpush1.msra.mxu0 %v1210
      %2146 = vmatprep.subr.mxu0 %v1219
      %2147 = vmatpush1.msra.mxu0 %v1218
      %2148 = vmatprep.subr.mxu0 %v1227
      %2149 = vmatpush1.msra.mxu0 %v1226
      %2150 = vmatprep.subr.mxu0 %v1235
      %2151 = vmatpush1.msra.mxu0 %v1234
      %2152 = vmatprep.subr.mxu0 %v1243
      %2153 = vmatpush1.msra.mxu0 %v1242
      %2154 = vmatprep.subr.mxu0 %v1251
      %2155 = vmatpush1.msra.mxu0 %v1250
      %2156 = vmatprep.subr.mxu0 %v1259
      %2157 = vmatpush1.msra.mxu0 %v1258
      %2158 = vmatprep.subr.mxu0 %v1267
      %2159 = vmatpush1.msra.mxu0 %v1266
      %2160 = vmatprep.subr.mxu0 %v1275
      %2161 = vmatpush1.msra.mxu0 %v1274
      %2162 = vmatprep.subr.mxu0 %v1283
      %2163 = vmatpush1.msra.mxu0 %v1282
      %2164 = vmatprep.mubr.f32.mxu0 %v1027
      %2165 = vmatmul.mubr.f32.gmra.mrb[0].mxu0 %v1026
      %v2166 = vpop.f32.mrb[0].mxu0
      %v2167 = vadd.f32 %v2063, %v2166
      %v2168 = vpop.f32.mrb[0].mxu0
      %v2169 = vadd.f32 %v2067, %v2168
      %2170 = vdwg.mxu0
      %2171 = vmatprep.subr.mxu0 %v1291
      %2172 = vmatpush1.msra.mxu0 %v1290
      %2173 = vmatprep.subr.mxu0 %v1299
      %2174 = vmatpush1.msra.mxu0 %v1298
      %2175 = vmatprep.subr.mxu0 %v1307
      %2176 = vmatpush1.msra.mxu0 %v1306
      %2177 = vmatprep.subr.mxu0 %v1315
      %2178 = vmatpush1.msra.mxu0 %v1314
      %2179 = vmatprep.subr.mxu0 %v1323
      %2180 = vmatpush1.msra.mxu0 %v1322
      %2181 = vmatprep.subr.mxu0 %v1331
      %2182 = vmatpush1.msra.mxu0 %v1330
      %2183 = vmatprep.subr.mxu0 %v1339
      %2184 = vmatpush1.msra.mxu0 %v1338
      %2185 = vmatprep.subr.mxu0 %v1347
      %2186 = vmatpush1.msra.mxu0 %v1346
      %2187 = vmatprep.subr.mxu0 %v1355
      %2188 = vmatpush1.msra.mxu0 %v1354
      %2189 = vmatprep.subr.mxu0 %v1363
      %2190 = vmatpush1.msra.mxu0 %v1362
      %2191 = vmatprep.subr.mxu0 %v1371
      %2192 = vmatpush1.msra.mxu0 %v1370
      %2193 = vmatprep.subr.mxu0 %v1379
      %2194 = vmatpush1.msra.mxu0 %v1378
      %2195 = vmatprep.subr.mxu0 %v1387
      %2196 = vmatpush1.msra.mxu0 %v1386
      %2197 = vmatprep.subr.mxu0 %v1395
      %2198 = vmatpush1.msra.mxu0 %v1394
      %2199 = vmatprep.subr.mxu0 %v1403
      %2200 = vmatpush1.msra.mxu0 %v1402
      %2201 = vmatprep.subr.mxu0 %v1411
      %2202 = vmatpush1.msra.mxu0 %v1410
      %2203 = vmatprep.subr.mxu0 %v1419
      %2204 = vmatpush1.msra.mxu0 %v1418
      %2205 = vmatprep.subr.mxu0 %v1427
      %2206 = vmatpush1.msra.mxu0 %v1426
      %2207 = vmatprep.subr.mxu0 %v1435
      %2208 = vmatpush1.msra.mxu0 %v1434
      %2209 = vmatprep.subr.mxu0 %v1443
      %2210 = vmatpush1.msra.mxu0 %v1442
      %2211 = vmatprep.subr.mxu0 %v1451
      %2212 = vmatpush1.msra.mxu0 %v1450
      %2213 = vmatprep.subr.mxu0 %v1459
      %2214 = vmatpush1.msra.mxu0 %v1458
      %2215 = vmatprep.subr.mxu0 %v1467
      %2216 = vmatpush1.msra.mxu0 %v1466
      %2217 = vmatprep.subr.mxu0 %v1475
      %2218 = vmatpush1.msra.mxu0 %v1474
      %2219 = vmatprep.subr.mxu0 %v1483
      %2220 = vmatpush1.msra.mxu0 %v1482
      %2221 = vmatprep.subr.mxu0 %v1491
      %2222 = vmatpush1.msra.mxu0 %v1490
      %2223 = vmatprep.subr.mxu0 %v1499
      %2224 = vmatpush1.msra.mxu0 %v1498
      %2225 = vmatprep.subr.mxu0 %v1507
      %2226 = vmatpush1.msra.mxu0 %v1506
      %2227 = vmatprep.subr.mxu0 %v1515
      %2228 = vmatpush1.msra.mxu0 %v1514
      %2229 = vmatprep.subr.mxu0 %v1523
      %2230 = vmatpush1.msra.mxu0 %v1522
      %2231 = vmatprep.subr.mxu0 %v1531
      %2232 = vmatpush1.msra.mxu0 %v1530
      %2233 = vmatprep.subr.mxu0 %v1539
      %2234 = vmatpush1.msra.mxu0 %v1538
      %2235 = vmatprep.mubr.f32.mxu0 %v1029
      %2236 = vmatmul.mubr.f32.gmra.mrb[0].mxu0 %v1028
      %v2237 = vpop.f32.mrb[0].mxu0
      %v2238 = vadd.f32 %v2167, %v2237
      %v2239 = vpop.f32.mrb[0].mxu0
      %v2240 = vadd.f32 %v2169, %v2239
      %2241 = vdwg.mxu0
      %2242 = vmatprep.subr.mxu0 %v1547
      %2243 = vmatpush1.msra.mxu0 %v1546
      %2244 = vmatprep.subr.mxu0 %v1555
      %2245 = vmatpush1.msra.mxu0 %v1554
      %2246 = vmatprep.subr.mxu0 %v1563
      %2247 = vmatpush1.msra.mxu0 %v1562
      %2248 = vmatprep.subr.mxu0 %v1571
      %2249 = vmatpush1.msra.mxu0 %v1570
      %2250 = vmatprep.subr.mxu0 %v1579
      %2251 = vmatpush1.msra.mxu0 %v1578
      %2252 = vmatprep.subr.mxu0 %v1587
      %2253 = vmatpush1.msra.mxu0 %v1586
      %2254 = vmatprep.subr.mxu0 %v1595
      %2255 = vmatpush1.msra.mxu0 %v1594
      %2256 = vmatprep.subr.mxu0 %v1603
      %2257 = vmatpush1.msra.mxu0 %v1602
      %2258 = vmatprep.subr.mxu0 %v1611
      %2259 = vmatpush1.msra.mxu0 %v1610
      %2260 = vmatprep.subr.mxu0 %v1619
      %2261 = vmatpush1.msra.mxu0 %v1618
      %2262 = vmatprep.subr.mxu0 %v1627
      %2263 = vmatpush1.msra.mxu0 %v1626
      %2264 = vmatprep.subr.mxu0 %v1635
      %2265 = vmatpush1.msra.mxu0 %v1634
      %2266 = vmatprep.subr.mxu0 %v1643
      %2267 = vmatpush1.msra.mxu0 %v1642
      %2268 = vmatprep.subr.mxu0 %v1651
      %2269 = vmatpush1.msra.mxu0 %v1650
      %2270 = vmatprep.subr.mxu0 %v1659
      %2271 = vmatpush1.msra.mxu0 %v1658
      %2272 = vmatprep.subr.mxu0 %v1667
      %2273 = vmatpush1.msra.mxu0 %v1666
      %2274 = vmatprep.subr.mxu0 %v1675
      %2275 = vmatpush1.msra.mxu0 %v1674
      %2276 = vmatprep.subr.mxu0 %v1683
      %2277 = vmatpush1.msra.mxu0 %v1682
      %2278 = vmatprep.subr.mxu0 %v1691
      %2279 = vmatpush1.msra.mxu0 %v1690
      %2280 = vmatprep.subr.mxu0 %v1699
      %2281 = vmatpush1.msra.mxu0 %v1698
      %2282 = vmatprep.subr.mxu0 %v1707
      %2283 = vmatpush1.msra.mxu0 %v1706
      %2284 = vmatprep.subr.mxu0 %v1715
      %2285 = vmatpush1.msra.mxu0 %v1714
      %2286 = vmatprep.subr.mxu0 %v1723
      %2287 = vmatpush1.msra.mxu0 %v1722
      %2288 = vmatprep.subr.mxu0 %v1731
      %2289 = vmatpush1.msra.mxu0 %v1730
      %2290 = vmatprep.subr.mxu0 %v1739
      %2291 = vmatpush1.msra.mxu0 %v1738
      %2292 = vmatprep.subr.mxu0 %v1747
      %2293 = vmatpush1.msra.mxu0 %v1746
      %2294 = vmatprep.subr.mxu0 %v1755
      %2295 = vmatpush1.msra.mxu0 %v1754
      %2296 = vmatprep.subr.mxu0 %v1763
      %2297 = vmatpush1.msra.mxu0 %v1762
      %2298 = vmatprep.subr.mxu0 %v1771
      %2299 = vmatpush1.msra.mxu0 %v1770
      %2300 = vmatprep.subr.mxu0 %v1779
      %2301 = vmatpush1.msra.mxu0 %v1778
      %2302 = vmatprep.subr.mxu0 %v1787
      %2303 = vmatpush1.msra.mxu0 %v1786
      %2304 = vmatprep.subr.mxu0 %v1795
      %2305 = vmatpush1.msra.mxu0 %v1794
      %2306 = vmatprep.mubr.f32.mxu0 %v1031
      %2307 = vmatmul.mubr.f32.gmra.mrb[0].mxu0 %v1030
      %v2308 = vpop.f32.mrb[0].mxu0
      %v2309 = vadd.f32 %v2238, %v2308
      %v2310 = vpop.f32.mrb[0].mxu0
      %v2311 = vadd.f32 %v2240, %v2310
      %2312 = vdwg.mxu0
      %2313 = vmatprep.subr.mxu0 %v1803
      %2314 = vmatpush1.msra.mxu0 %v1802
      %2315 = vmatprep.subr.mxu0 %v1811
      %2316 = vmatpush1.msra.mxu0 %v1810
      %2317 = vmatprep.subr.mxu0 %v1819
      %2318 = vmatpush1.msra.mxu0 %v1818
      %2319 = vmatprep.subr.mxu0 %v1827
      %2320 = vmatpush1.msra.mxu0 %v1826
      %2321 = vmatprep.subr.mxu0 %v1835
      %2322 = vmatpush1.msra.mxu0 %v1834
      %2323 = vmatprep.subr.mxu0 %v1843
      %2324 = vmatpush1.msra.mxu0 %v1842
      %2325 = vmatprep.subr.mxu0 %v1851
      %2326 = vmatpush1.msra.mxu0 %v1850
      %2327 = vmatprep.subr.mxu0 %v1859
      %2328 = vmatpush1.msra.mxu0 %v1858
      %2329 = vmatprep.subr.mxu0 %v1867
      %2330 = vmatpush1.msra.mxu0 %v1866
      %2331 = vmatprep.subr.mxu0 %v1875
      %2332 = vmatpush1.msra.mxu0 %v1874
      %2333 = vmatprep.subr.mxu0 %v1883
      %2334 = vmatpush1.msra.mxu0 %v1882
      %2335 = vmatprep.subr.mxu0 %v1891
      %2336 = vmatpush1.msra.mxu0 %v1890
      %2337 = vmatprep.subr.mxu0 %v1899
      %2338 = vmatpush1.msra.mxu0 %v1898
      %2339 = vmatprep.subr.mxu0 %v1907
      %2340 = vmatpush1.msra.mxu0 %v1906
      %2341 = vmatprep.subr.mxu0 %v1915
      %2342 = vmatpush1.msra.mxu0 %v1914
      %2343 = vmatprep.subr.mxu0 %v1923
      %2344 = vmatpush1.msra.mxu0 %v1922
      %2345 = vmatprep.subr.mxu0 %v1931
      %2346 = vmatpush1.msra.mxu0 %v1930
      %2347 = vmatprep.subr.mxu0 %v1939
      %2348 = vmatpush1.msra.mxu0 %v1938
      %2349 = vmatprep.subr.mxu0 %v1947
      %2350 = vmatpush1.msra.mxu0 %v1946
      %2351 = vmatprep.subr.mxu0 %v1955
      %2352 = vmatpush1.msra.mxu0 %v1954
      %2353 = vmatprep.subr.mxu0 %v1963
      %2354 = vmatpush1.msra.mxu0 %v1962
      %2355 = vmatprep.subr.mxu0 %v1971
      %2356 = vmatpush1.msra.mxu0 %v1970
      %2357 = vmatprep.subr.mxu0 %v1979
      %2358 = vmatpush1.msra.mxu0 %v1978
      %2359 = vmatprep.subr.mxu0 %v1987
      %2360 = vmatpush1.msra.mxu0 %v1986
      %2361 = vmatprep.subr.mxu0 %v1995
      %2362 = vmatpush1.msra.mxu0 %v1994
      %2363 = vmatprep.subr.mxu0 %v2003
      %2364 = vmatpush1.msra.mxu0 %v2002
      %2365 = vmatprep.subr.mxu0 %v2011
      %2366 = vmatpush1.msra.mxu0 %v2010
      %2367 = vmatprep.subr.mxu0 %v2019
      %2368 = vmatpush1.msra.mxu0 %v2018
      %2369 = vmatprep.subr.mxu0 %v2027
      %2370 = vmatpush1.msra.mxu0 %v2026
      %2371 = vmatprep.subr.mxu0 %v2035
      %2372 = vmatpush1.msra.mxu0 %v2034
      %2373 = vmatprep.subr.mxu0 %v2043
      %2374 = vmatpush1.msra.mxu0 %v2042
      %2375 = vmatprep.subr.mxu0 %v2051
      %2376 = vmatpush1.msra.mxu0 %v2050
      %2377 = vmatprep.mubr.f32.mxu0 %v1033
      %2378 = vmatmul.mubr.f32.gmra.mrb[0].mxu0 %v1032
      %v2379 = vpop.f32.mrb[0].mxu0
      %v2380 = vadd.f32 %v2309, %v2379
      %v2381 = vpop.f32.mrb[0].mxu0
      %v2382 = vadd.f32 %v2311, %v2381
      %2383 = vdwg.mxu0
      %2384 = vmatprep.subr.mxu0 %v1037
      %2385 = vmatpush1.msra.mxu0 %v1036
      %2386 = vmatprep.subr.mxu0 %v1045
      %2387 = vmatpush1.msra.mxu0 %v1044
      %2388 = vmatprep.subr.mxu0 %v1053
      %2389 = vmatpush1.msra.mxu0 %v1052
      %2390 = vmatprep.subr.mxu0 %v1061
      %2391 = vmatpush1.msra.mxu0 %v1060
      %2392 = vmatprep.subr.mxu0 %v1069
      %2393 = vmatpush1.msra.mxu0 %v1068
      %2394 = vmatprep.subr.mxu0 %v1077
      %2395 = vmatpush1.msra.mxu0 %v1076
      %2396 = vmatprep.subr.mxu0 %v1085
      %2397 = vmatpush1.msra.mxu0 %v1084
      %2398 = vmatprep.subr.mxu0 %v1093
      %2399 = vmatpush1.msra.mxu0 %v1092
      %2400 = vmatprep.subr.mxu0 %v1101
      %2401 = vmatpush1.msra.mxu0 %v1100
      %2402 = vmatprep.subr.mxu0 %v1109
      %2403 = vmatpush1.msra.mxu0 %v1108
      %2404 = vmatprep.subr.mxu0 %v1117
      %2405 = vmatpush1.msra.mxu0 %v1116
      %2406 = vmatprep.subr.mxu0 %v1125
      %2407 = vmatpush1.msra.mxu0 %v1124
      %2408 = vmatprep.subr.mxu0 %v1133
      %2409 = vmatpush1.msra.mxu0 %v1132
      %2410 = vmatprep.subr.mxu0 %v1141
      %2411 = vmatpush1.msra.mxu0 %v1140
      %2412 = vmatprep.subr.mxu0 %v1149
      %2413 = vmatpush1.msra.mxu0 %v1148
      %2414 = vmatprep.subr.mxu0 %v1157
      %2415 = vmatpush1.msra.mxu0 %v1156
      %2416 = vmatprep.subr.mxu0 %v1165
      %2417 = vmatpush1.msra.mxu0 %v1164
      %2418 = vmatprep.subr.mxu0 %v1173
      %2419 = vmatpush1.msra.mxu0 %v1172
      %2420 = vmatprep.subr.mxu0 %v1181
      %2421 = vmatpush1.msra.mxu0 %v1180
      %2422 = vmatprep.subr.mxu0 %v1189
      %2423 = vmatpush1.msra.mxu0 %v1188
      %2424 = vmatprep.subr.mxu0 %v1197
      %2425 = vmatpush1.msra.mxu0 %v1196
      %2426 = vmatprep.subr.mxu0 %v1205
      %2427 = vmatpush1.msra.mxu0 %v1204
      %2428 = vmatprep.subr.mxu0 %v1213
      %2429 = vmatpush1.msra.mxu0 %v1212
      %2430 = vmatprep.subr.mxu0 %v1221
      %2431 = vmatpush1.msra.mxu0 %v1220
      %2432 = vmatprep.subr.mxu0 %v1229
      %2433 = vmatpush1.msra.mxu0 %v1228
      %2434 = vmatprep.subr.mxu0 %v1237
      %2435 = vmatpush1.msra.mxu0 %v1236
      %2436 = vmatprep.subr.mxu0 %v1245
      %2437 = vmatpush1.msra.mxu0 %v1244
      %2438 = vmatprep.subr.mxu0 %v1253
      %2439 = vmatpush1.msra.mxu0 %v1252
      %2440 = vmatprep.subr.mxu0 %v1261
      %2441 = vmatpush1.msra.mxu0 %v1260
      %2442 = vmatprep.subr.mxu0 %v1269
      %2443 = vmatpush1.msra.mxu0 %v1268
      %2444 = vmatprep.subr.mxu0 %v1277
      %2445 = vmatpush1.msra.mxu0 %v1276
      %2446 = vmatprep.subr.mxu0 %v1285
      %2447 = vmatpush1.msra.mxu0 %v1284
      %2448 = vmatprep.mubr.f32.mxu0 %v1027
      %2449 = vmatmul.mubr.f32.gmra.mrb[0].mxu0 %v1026
      %v2450 = vpop.f32.mrb[0].mxu0
      %v2451 = vadd.f32 %v2071, %v2450
      %v2452 = vpop.f32.mrb[0].mxu0
      %v2453 = vadd.f32 %v2075, %v2452
      %2454 = vdwg.mxu0
      %2455 = vmatprep.subr.mxu0 %v1293
      %2456 = vmatpush1.msra.mxu0 %v1292
      %2457 = vmatprep.subr.mxu0 %v1301
      %2458 = vmatpush1.msra.mxu0 %v1300
      %2459 = vmatprep.subr.mxu0 %v1309
      %2460 = vmatpush1.msra.mxu0 %v1308
      %2461 = vmatprep.subr.mxu0 %v1317
      %2462 = vmatpush1.msra.mxu0 %v1316
      %2463 = vmatprep.subr.mxu0 %v1325
      %2464 = vmatpush1.msra.mxu0 %v1324
      %2465 = vmatprep.subr.mxu0 %v1333
      %2466 = vmatpush1.msra.mxu0 %v1332
      %2467 = vmatprep.subr.mxu0 %v1341
      %2468 = vmatpush1.msra.mxu0 %v1340
      %2469 = vmatprep.subr.mxu0 %v1349
      %2470 = vmatpush1.msra.mxu0 %v1348
      %2471 = vmatprep.subr.mxu0 %v1357
      %2472 = vmatpush1.msra.mxu0 %v1356
      %2473 = vmatprep.subr.mxu0 %v1365
      %2474 = vmatpush1.msra.mxu0 %v1364
      %2475 = vmatprep.subr.mxu0 %v1373
      %2476 = vmatpush1.msra.mxu0 %v1372
      %2477 = vmatprep.subr.mxu0 %v1381
      %2478 = vmatpush1.msra.mxu0 %v1380
      %2479 = vmatprep.subr.mxu0 %v1389
      %2480 = vmatpush1.msra.mxu0 %v1388
      %2481 = vmatprep.subr.mxu0 %v1397
      %2482 = vmatpush1.msra.mxu0 %v1396
      %2483 = vmatprep.subr.mxu0 %v1405
      %2484 = vmatpush1.msra.mxu0 %v1404
      %2485 = vmatprep.subr.mxu0 %v1413
      %2486 = vmatpush1.msra.mxu0 %v1412
      %2487 = vmatprep.subr.mxu0 %v1421
      %2488 = vmatpush1.msra.mxu0 %v1420
      %2489 = vmatprep.subr.mxu0 %v1429
      %2490 = vmatpush1.msra.mxu0 %v1428
      %2491 = vmatprep.subr.mxu0 %v1437
      %2492 = vmatpush1.msra.mxu0 %v1436
      %2493 = vmatprep.subr.mxu0 %v1445
      %2494 = vmatpush1.msra.mxu0 %v1444
      %2495 = vmatprep.subr.mxu0 %v1453
      %2496 = vmatpush1.msra.mxu0 %v1452
      %2497 = vmatprep.subr.mxu0 %v1461
      %2498 = vmatpush1.msra.mxu0 %v1460
      %2499 = vmatprep.subr.mxu0 %v1469
      %2500 = vmatpush1.msra.mxu0 %v1468
      %2501 = vmatprep.subr.mxu0 %v1477
      %2502 = vmatpush1.msra.mxu0 %v1476
      %2503 = vmatprep.subr.mxu0 %v1485
      %2504 = vmatpush1.msra.mxu0 %v1484
      %2505 = vmatprep.subr.mxu0 %v1493
      %2506 = vmatpush1.msra.mxu0 %v1492
      %2507 = vmatprep.subr.mxu0 %v1501
      %2508 = vmatpush1.msra.mxu0 %v1500
      %2509 = vmatprep.subr.mxu0 %v1509
      %2510 = vmatpush1.msra.mxu0 %v1508
      %2511 = vmatprep.subr.mxu0 %v1517
      %2512 = vmatpush1.msra.mxu0 %v1516
      %2513 = vmatprep.subr.mxu0 %v1525
      %2514 = vmatpush1.msra.mxu0 %v1524
      %2515 = vmatprep.subr.mxu0 %v1533
      %2516 = vmatpush1.msra.mxu0 %v1532
      %2517 = vmatprep.subr.mxu0 %v1541
      %2518 = vmatpush1.msra.mxu0 %v1540
      %2519 = vmatprep.mubr.f32.mxu0 %v1029
      %2520 = vmatmul.mubr.f32.gmra.mrb[0].mxu0 %v1028
      %v2521 = vpop.f32.mrb[0].mxu0
      %v2522 = vadd.f32 %v2451, %v2521
      %v2523 = vpop.f32.mrb[0].mxu0
      %v2524 = vadd.f32 %v2453, %v2523
      %2525 = vdwg.mxu0
      %2526 = vmatprep.subr.mxu0 %v1549
      %2527 = vmatpush1.msra.mxu0 %v1548
      %2528 = vmatprep.subr.mxu0 %v1557
      %2529 = vmatpush1.msra.mxu0 %v1556
      %2530 = vmatprep.subr.mxu0 %v1565
      %2531 = vmatpush1.msra.mxu0 %v1564
      %2532 = vmatprep.subr.mxu0 %v1573
      %2533 = vmatpush1.msra.mxu0 %v1572
      %2534 = vmatprep.subr.mxu0 %v1581
      %2535 = vmatpush1.msra.mxu0 %v1580
      %2536 = vmatprep.subr.mxu0 %v1589
      %2537 = vmatpush1.msra.mxu0 %v1588
      %2538 = vmatprep.subr.mxu0 %v1597
      %2539 = vmatpush1.msra.mxu0 %v1596
      %2540 = vmatprep.subr.mxu0 %v1605
      %2541 = vmatpush1.msra.mxu0 %v1604
      %2542 = vmatprep.subr.mxu0 %v1613
      %2543 = vmatpush1.msra.mxu0 %v1612
      %2544 = vmatprep.subr.mxu0 %v1621
      %2545 = vmatpush1.msra.mxu0 %v1620
      %2546 = vmatprep.subr.mxu0 %v1629
      %2547 = vmatpush1.msra.mxu0 %v1628
      %2548 = vmatprep.subr.mxu0 %v1637
      %2549 = vmatpush1.msra.mxu0 %v1636
      %2550 = vmatprep.subr.mxu0 %v1645
      %2551 = vmatpush1.msra.mxu0 %v1644
      %2552 = vmatprep.subr.mxu0 %v1653
      %2553 = vmatpush1.msra.mxu0 %v1652
      %2554 = vmatprep.subr.mxu0 %v1661
      %2555 = vmatpush1.msra.mxu0 %v1660
      %2556 = vmatprep.subr.mxu0 %v1669
      %2557 = vmatpush1.msra.mxu0 %v1668
      %2558 = vmatprep.subr.mxu0 %v1677
      %2559 = vmatpush1.msra.mxu0 %v1676
      %2560 = vmatprep.subr.mxu0 %v1685
      %2561 = vmatpush1.msra.mxu0 %v1684
      %2562 = vmatprep.subr.mxu0 %v1693
      %2563 = vmatpush1.msra.mxu0 %v1692
      %2564 = vmatprep.subr.mxu0 %v1701
      %2565 = vmatpush1.msra.mxu0 %v1700
      %2566 = vmatprep.subr.mxu0 %v1709
      %2567 = vmatpush1.msra.mxu0 %v1708
      %2568 = vmatprep.subr.mxu0 %v1717
      %2569 = vmatpush1.msra.mxu0 %v1716
      %2570 = vmatprep.subr.mxu0 %v1725
      %2571 = vmatpush1.msra.mxu0 %v1724
      %2572 = vmatprep.subr.mxu0 %v1733
      %2573 = vmatpush1.msra.mxu0 %v1732
      %2574 = vmatprep.subr.mxu0 %v1741
      %2575 = vmatpush1.msra.mxu0 %v1740
      %2576 = vmatprep.subr.mxu0 %v1749
      %2577 = vmatpush1.msra.mxu0 %v1748
      %2578 = vmatprep.subr.mxu0 %v1757
      %2579 = vmatpush1.msra.mxu0 %v1756
      %2580 = vmatprep.subr.mxu0 %v1765
      %2581 = vmatpush1.msra.mxu0 %v1764
      %2582 = vmatprep.subr.mxu0 %v1773
      %2583 = vmatpush1.msra.mxu0 %v1772
      %2584 = vmatprep.subr.mxu0 %v1781
      %2585 = vmatpush1.msra.mxu0 %v1780
      %2586 = vmatprep.subr.mxu0 %v1789
      %2587 = vmatpush1.msra.mxu0 %v1788
      %2588 = vmatprep.subr.mxu0 %v1797
      %2589 = vmatpush1.msra.mxu0 %v1796
      %2590 = vmatprep.mubr.f32.mxu0 %v1031
      %2591 = vmatmul.mubr.f32.gmra.mrb[0].mxu0 %v1030
      %v2592 = vpop.f32.mrb[0].mxu0
      %v2593 = vadd.f32 %v2522, %v2592
      %v2594 = vpop.f32.mrb[0].mxu0
      %v2595 = vadd.f32 %v2524, %v2594
      %2596 = vdwg.mxu0
      %2597 = vmatprep.subr.mxu0 %v1805
      %2598 = vmatpush1.msra.mxu0 %v1804
      %2599 = vmatprep.subr.mxu0 %v1813
      %2600 = vmatpush1.msra.mxu0 %v1812
      %2601 = vmatprep.subr.mxu0 %v1821
      %2602 = vmatpush1.msra.mxu0 %v1820
      %2603 = vmatprep.subr.mxu0 %v1829
      %2604 = vmatpush1.msra.mxu0 %v1828
      %2605 = vmatprep.subr.mxu0 %v1837
      %2606 = vmatpush1.msra.mxu0 %v1836
      %2607 = vmatprep.subr.mxu0 %v1845
      %2608 = vmatpush1.msra.mxu0 %v1844
      %2609 = vmatprep.subr.mxu0 %v1853
      %2610 = vmatpush1.msra.mxu0 %v1852
      %2611 = vmatprep.subr.mxu0 %v1861
      %2612 = vmatpush1.msra.mxu0 %v1860
      %2613 = vmatprep.subr.mxu0 %v1869
      %2614 = vmatpush1.msra.mxu0 %v1868
      %2615 = vmatprep.subr.mxu0 %v1877
      %2616 = vmatpush1.msra.mxu0 %v1876
      %2617 = vmatprep.subr.mxu0 %v1885
      %2618 = vmatpush1.msra.mxu0 %v1884
      %2619 = vmatprep.subr.mxu0 %v1893
      %2620 = vmatpush1.msra.mxu0 %v1892
      %2621 = vmatprep.subr.mxu0 %v1901
      %2622 = vmatpush1.msra.mxu0 %v1900
      %2623 = vmatprep.subr.mxu0 %v1909
      %2624 = vmatpush1.msra.mxu0 %v1908
      %2625 = vmatprep.subr.mxu0 %v1917
      %2626 = vmatpush1.msra.mxu0 %v1916
      %2627 = vmatprep.subr.mxu0 %v1925
      %2628 = vmatpush1.msra.mxu0 %v1924
      %2629 = vmatprep.subr.mxu0 %v1933
      %2630 = vmatpush1.msra.mxu0 %v1932
      %2631 = vmatprep.subr.mxu0 %v1941
      %2632 = vmatpush1.msra.mxu0 %v1940
      %2633 = vmatprep.subr.mxu0 %v1949
      %2634 = vmatpush1.msra.mxu0 %v1948
      %2635 = vmatprep.subr.mxu0 %v1957
      %2636 = vmatpush1.msra.mxu0 %v1956
      %2637 = vmatprep.subr.mxu0 %v1965
      %2638 = vmatpush1.msra.mxu0 %v1964
      %2639 = vmatprep.subr.mxu0 %v1973
      %2640 = vmatpush1.msra.mxu0 %v1972
      %2641 = vmatprep.subr.mxu0 %v1981
      %2642 = vmatpush1.msra.mxu0 %v1980
      %2643 = vmatprep.subr.mxu0 %v1989
      %2644 = vmatpush1.msra.mxu0 %v1988
      %2645 = vmatprep.subr.mxu0 %v1997
      %2646 = vmatpush1.msra.mxu0 %v1996
      %2647 = vmatprep.subr.mxu0 %v2005
      %2648 = vmatpush1.msra.mxu0 %v2004
      %2649 = vmatprep.subr.mxu0 %v2013
      %2650 = vmatpush1.msra.mxu0 %v2012
      %2651 = vmatprep.subr.mxu0 %v2021
      %2652 = vmatpush1.msra.mxu0 %v2020
      %2653 = vmatprep.subr.mxu0 %v2029
      %2654 = vmatpush1.msra.mxu0 %v2028
      %2655 = vmatprep.subr.mxu0 %v2037
      %2656 = vmatpush1.msra.mxu0 %v2036
      %2657 = vmatprep.subr.mxu0 %v2045
      %2658 = vmatpush1.msra.mxu0 %v2044
      %2659 = vmatprep.subr.mxu0 %v2053
      %2660 = vmatpush1.msra.mxu0 %v2052
      %2661 = vmatprep.mubr.f32.mxu0 %v1033
      %2662 = vmatmul.mubr.f32.gmra.mrb[0].mxu0 %v1032
      %v2663 = vpop.f32.mrb[0].mxu0
      %v2664 = vadd.f32 %v2593, %v2663
      %v2665 = vpop.f32.mrb[0].mxu0
      %v2666 = vadd.f32 %v2595, %v2665
      %2667 = vdwg.mxu0
      %2668 = vmatprep.subr.mxu0 %v1039
      %2669 = vmatpush1.msra.mxu0 %v1038
      %2670 = vmatprep.subr.mxu0 %v1047
      %2671 = vmatpush1.msra.mxu0 %v1046
      %2672 = vmatprep.subr.mxu0 %v1055
      %2673 = vmatpush1.msra.mxu0 %v1054
      %2674 = vmatprep.subr.mxu0 %v1063
      %2675 = vmatpush1.msra.mxu0 %v1062
      %2676 = vmatprep.subr.mxu0 %v1071
      %2677 = vmatpush1.msra.mxu0 %v1070
      %2678 = vmatprep.subr.mxu0 %v1079
      %2679 = vmatpush1.msra.mxu0 %v1078
      %2680 = vmatprep.subr.mxu0 %v1087
      %2681 = vmatpush1.msra.mxu0 %v1086
      %2682 = vmatprep.subr.mxu0 %v1095
      %2683 = vmatpush1.msra.mxu0 %v1094
      %2684 = vmatprep.subr.mxu0 %v1103
      %2685 = vmatpush1.msra.mxu0 %v1102
      %2686 = vmatprep.subr.mxu0 %v1111
      %2687 = vmatpush1.msra.mxu0 %v1110
      %2688 = vmatprep.subr.mxu0 %v1119
      %2689 = vmatpush1.msra.mxu0 %v1118
      %2690 = vmatprep.subr.mxu0 %v1127
      %2691 = vmatpush1.msra.mxu0 %v1126
      %2692 = vmatprep.subr.mxu0 %v1135
      %2693 = vmatpush1.msra.mxu0 %v1134
      %2694 = vmatprep.subr.mxu0 %v1143
      %2695 = vmatpush1.msra.mxu0 %v1142
      %2696 = vmatprep.subr.mxu0 %v1151
      %2697 = vmatpush1.msra.mxu0 %v1150
      %2698 = vmatprep.subr.mxu0 %v1159
      %2699 = vmatpush1.msra.mxu0 %v1158
      %2700 = vmatprep.subr.mxu0 %v1167
      %2701 = vmatpush1.msra.mxu0 %v1166
      %2702 = vmatprep.subr.mxu0 %v1175
      %2703 = vmatpush1.msra.mxu0 %v1174
      %2704 = vmatprep.subr.mxu0 %v1183
      %2705 = vmatpush1.msra.mxu0 %v1182
      %2706 = vmatprep.subr.mxu0 %v1191
      %2707 = vmatpush1.msra.mxu0 %v1190
      %2708 = vmatprep.subr.mxu0 %v1199
      %2709 = vmatpush1.msra.mxu0 %v1198
      %2710 = vmatprep.subr.mxu0 %v1207
      %2711 = vmatpush1.msra.mxu0 %v1206
      %2712 = vmatprep.subr.mxu0 %v1215
      %2713 = vmatpush1.msra.mxu0 %v1214
      %2714 = vmatprep.subr.mxu0 %v1223
      %2715 = vmatpush1.msra.mxu0 %v1222
      %2716 = vmatprep.subr.mxu0 %v1231
      %2717 = vmatpush1.msra.mxu0 %v1230
      %2718 = vmatprep.subr.mxu0 %v1239
      %2719 = vmatpush1.msra.mxu0 %v1238
      %2720 = vmatprep.subr.mxu0 %v1247
      %2721 = vmatpush1.msra.mxu0 %v1246
      %2722 = vmatprep.subr.mxu0 %v1255
      %2723 = vmatpush1.msra.mxu0 %v1254
      %2724 = vmatprep.subr.mxu0 %v1263
      %2725 = vmatpush1.msra.mxu0 %v1262
      %2726 = vmatprep.subr.mxu0 %v1271
      %2727 = vmatpush1.msra.mxu0 %v1270
      %2728 = vmatprep.subr.mxu0 %v1279
      %2729 = vmatpush1.msra.mxu0 %v1278
      %2730 = vmatprep.subr.mxu0 %v1287
      %2731 = vmatpush1.msra.mxu0 %v1286
      %2732 = vmatprep.mubr.f32.mxu0 %v1027
      %2733 = vmatmul.mubr.f32.gmra.mrb[0].mxu0 %v1026
      %v2734 = vpop.f32.mrb[0].mxu0
      %v2735 = vadd.f32 %v2079, %v2734
      %v2736 = vpop.f32.mrb[0].mxu0
      %v2737 = vadd.f32 %v2083, %v2736
      %2738 = vdwg.mxu0
      %2739 = vmatprep.subr.mxu0 %v1295
      %2740 = vmatpush1.msra.mxu0 %v1294
      %2741 = vmatprep.subr.mxu0 %v1303
      %2742 = vmatpush1.msra.mxu0 %v1302
      %2743 = vmatprep.subr.mxu0 %v1311
      %2744 = vmatpush1.msra.mxu0 %v1310
      %2745 = vmatprep.subr.mxu0 %v1319
      %2746 = vmatpush1.msra.mxu0 %v1318
      %2747 = vmatprep.subr.mxu0 %v1327
      %2748 = vmatpush1.msra.mxu0 %v1326
      %2749 = vmatprep.subr.mxu0 %v1335
      %2750 = vmatpush1.msra.mxu0 %v1334
      %2751 = vmatprep.subr.mxu0 %v1343
      %2752 = vmatpush1.msra.mxu0 %v1342
      %2753 = vmatprep.subr.mxu0 %v1351
      %2754 = vmatpush1.msra.mxu0 %v1350
      %2755 = vmatprep.subr.mxu0 %v1359
      %2756 = vmatpush1.msra.mxu0 %v1358
      %2757 = vmatprep.subr.mxu0 %v1367
      %2758 = vmatpush1.msra.mxu0 %v1366
      %2759 = vmatprep.subr.mxu0 %v1375
      %2760 = vmatpush1.msra.mxu0 %v1374
      %2761 = vmatprep.subr.mxu0 %v1383
      %2762 = vmatpush1.msra.mxu0 %v1382
      %2763 = vmatprep.subr.mxu0 %v1391
      %2764 = vmatpush1.msra.mxu0 %v1390
      %2765 = vmatprep.subr.mxu0 %v1399
      %2766 = vmatpush1.msra.mxu0 %v1398
      %2767 = vmatprep.subr.mxu0 %v1407
      %2768 = vmatpush1.msra.mxu0 %v1406
      %2769 = vmatprep.subr.mxu0 %v1415
      %2770 = vmatpush1.msra.mxu0 %v1414
      %2771 = vmatprep.subr.mxu0 %v1423
      %2772 = vmatpush1.msra.mxu0 %v1422
      %2773 = vmatprep.subr.mxu0 %v1431
      %2774 = vmatpush1.msra.mxu0 %v1430
      %2775 = vmatprep.subr.mxu0 %v1439
      %2776 = vmatpush1.msra.mxu0 %v1438
      %2777 = vmatprep.subr.mxu0 %v1447
      %2778 = vmatpush1.msra.mxu0 %v1446
      %2779 = vmatprep.subr.mxu0 %v1455
      %2780 = vmatpush1.msra.mxu0 %v1454
      %2781 = vmatprep.subr.mxu0 %v1463
      %2782 = vmatpush1.msra.mxu0 %v1462
      %2783 = vmatprep.subr.mxu0 %v1471
      %2784 = vmatpush1.msra.mxu0 %v1470
      %2785 = vmatprep.subr.mxu0 %v1479
      %2786 = vmatpush1.msra.mxu0 %v1478
      %2787 = vmatprep.subr.mxu0 %v1487
      %2788 = vmatpush1.msra.mxu0 %v1486
      %2789 = vmatprep.subr.mxu0 %v1495
      %2790 = vmatpush1.msra.mxu0 %v1494
      %2791 = vmatprep.subr.mxu0 %v1503
      %2792 = vmatpush1.msra.mxu0 %v1502
      %2793 = vmatprep.subr.mxu0 %v1511
      %2794 = vmatpush1.msra.mxu0 %v1510
      %2795 = vmatprep.subr.mxu0 %v1519
      %2796 = vmatpush1.msra.mxu0 %v1518
      %2797 = vmatprep.subr.mxu0 %v1527
      %2798 = vmatpush1.msra.mxu0 %v1526
      %2799 = vmatprep.subr.mxu0 %v1535
      %2800 = vmatpush1.msra.mxu0 %v1534
      %2801 = vmatprep.subr.mxu0 %v1543
      %2802 = vmatpush1.msra.mxu0 %v1542
      %2803 = vmatprep.mubr.f32.mxu0 %v1029
      %2804 = vmatmul.mubr.f32.gmra.mrb[0].mxu0 %v1028
      %v2805 = vpop.f32.mrb[0].mxu0
      %v2806 = vadd.f32 %v2735, %v2805
      %v2807 = vpop.f32.mrb[0].mxu0
      %v2808 = vadd.f32 %v2737, %v2807
      %2809 = vdwg.mxu0
      %2810 = vmatprep.subr.mxu0 %v1551
      %2811 = vmatpush1.msra.mxu0 %v1550
      %2812 = vmatprep.subr.mxu0 %v1559
      %2813 = vmatpush1.msra.mxu0 %v1558
      %2814 = vmatprep.subr.mxu0 %v1567
      %2815 = vmatpush1.msra.mxu0 %v1566
      %2816 = vmatprep.subr.mxu0 %v1575
      %2817 = vmatpush1.msra.mxu0 %v1574
      %2818 = vmatprep.subr.mxu0 %v1583
      %2819 = vmatpush1.msra.mxu0 %v1582
      %2820 = vmatprep.subr.mxu0 %v1591
      %2821 = vmatpush1.msra.mxu0 %v1590
      %2822 = vmatprep.subr.mxu0 %v1599
      %2823 = vmatpush1.msra.mxu0 %v1598
      %2824 = vmatprep.subr.mxu0 %v1607
      %2825 = vmatpush1.msra.mxu0 %v1606
      %2826 = vmatprep.subr.mxu0 %v1615
      %2827 = vmatpush1.msra.mxu0 %v1614
      %2828 = vmatprep.subr.mxu0 %v1623
      %2829 = vmatpush1.msra.mxu0 %v1622
      %2830 = vmatprep.subr.mxu0 %v1631
      %2831 = vmatpush1.msra.mxu0 %v1630
      %2832 = vmatprep.subr.mxu0 %v1639
      %2833 = vmatpush1.msra.mxu0 %v1638
      %2834 = vmatprep.subr.mxu0 %v1647
      %2835 = vmatpush1.msra.mxu0 %v1646
      %2836 = vmatprep.subr.mxu0 %v1655
      %2837 = vmatpush1.msra.mxu0 %v1654
      %2838 = vmatprep.subr.mxu0 %v1663
      %2839 = vmatpush1.msra.mxu0 %v1662
      %2840 = vmatprep.subr.mxu0 %v1671
      %2841 = vmatpush1.msra.mxu0 %v1670
      %2842 = vmatprep.subr.mxu0 %v1679
      %2843 = vmatpush1.msra.mxu0 %v1678
      %2844 = vmatprep.subr.mxu0 %v1687
      %2845 = vmatpush1.msra.mxu0 %v1686
      %2846 = vmatprep.subr.mxu0 %v1695
      %2847 = vmatpush1.msra.mxu0 %v1694
      %2848 = vmatprep.subr.mxu0 %v1703
      %2849 = vmatpush1.msra.mxu0 %v1702
      %2850 = vmatprep.subr.mxu0 %v1711
      %2851 = vmatpush1.msra.mxu0 %v1710
      %2852 = vmatprep.subr.mxu0 %v1719
      %2853 = vmatpush1.msra.mxu0 %v1718
      %2854 = vmatprep.subr.mxu0 %v1727
      %2855 = vmatpush1.msra.mxu0 %v1726
      %2856 = vmatprep.subr.mxu0 %v1735
      %2857 = vmatpush1.msra.mxu0 %v1734
      %2858 = vmatprep.subr.mxu0 %v1743
      %2859 = vmatpush1.msra.mxu0 %v1742
      %2860 = vmatprep.subr.mxu0 %v1751
      %2861 = vmatpush1.msra.mxu0 %v1750
      %2862 = vmatprep.subr.mxu0 %v1759
      %2863 = vmatpush1.msra.mxu0 %v1758
      %2864 = vmatprep.subr.mxu0 %v1767
      %2865 = vmatpush1.msra.mxu0 %v1766
      %2866 = vmatprep.subr.mxu0 %v1775
      %2867 = vmatpush1.msra.mxu0 %v1774
      %2868 = vmatprep.subr.mxu0 %v1783
      %2869 = vmatpush1.msra.mxu0 %v1782
      %2870 = vmatprep.subr.mxu0 %v1791
      %2871 = vmatpush1.msra.mxu0 %v1790
      %2872 = vmatprep.subr.mxu0 %v1799
      %2873 = vmatpush1.msra.mxu0 %v1798
      %2874 = vmatprep.mubr.f32.mxu0 %v1031
      %2875 = vmatmul.mubr.f32.gmra.mrb[0].mxu0 %v1030
      %v2876 = vpop.f32.mrb[0].mxu0
      %v2877 = vadd.f32 %v2806, %v2876
      %v2878 = vpop.f32.mrb[0].mxu0
      %v2879 = vadd.f32 %v2808, %v2878
      %2880 = vdwg.mxu0
      %2881 = vmatprep.subr.mxu0 %v1807
      %2882 = vmatpush1.msra.mxu0 %v1806
      %2883 = vmatprep.subr.mxu0 %v1815
      %2884 = vmatpush1.msra.mxu0 %v1814
      %2885 = vmatprep.subr.mxu0 %v1823
      %2886 = vmatpush1.msra.mxu0 %v1822
      %2887 = vmatprep.subr.mxu0 %v1831
      %2888 = vmatpush1.msra.mxu0 %v1830
      %2889 = vmatprep.subr.mxu0 %v1839
      %2890 = vmatpush1.msra.mxu0 %v1838
      %2891 = vmatprep.subr.mxu0 %v1847
      %2892 = vmatpush1.msra.mxu0 %v1846
      %2893 = vmatprep.subr.mxu0 %v1855
      %2894 = vmatpush1.msra.mxu0 %v1854
      %2895 = vmatprep.subr.mxu0 %v1863
      %2896 = vmatpush1.msra.mxu0 %v1862
      %2897 = vmatprep.subr.mxu0 %v1871
      %2898 = vmatpush1.msra.mxu0 %v1870
      %2899 = vmatprep.subr.mxu0 %v1879
      %2900 = vmatpush1.msra.mxu0 %v1878
      %2901 = vmatprep.subr.mxu0 %v1887
      %2902 = vmatpush1.msra.mxu0 %v1886
      %2903 = vmatprep.subr.mxu0 %v1895
      %2904 = vmatpush1.msra.mxu0 %v1894
      %2905 = vmatprep.subr.mxu0 %v1903
      %2906 = vmatpush1.msra.mxu0 %v1902
      %2907 = vmatprep.subr.mxu0 %v1911
      %2908 = vmatpush1.msra.mxu0 %v1910
      %2909 = vmatprep.subr.mxu0 %v1919
      %2910 = vmatpush1.msra.mxu0 %v1918
      %2911 = vmatprep.subr.mxu0 %v1927
      %2912 = vmatpush1.msra.mxu0 %v1926
      %2913 = vmatprep.subr.mxu0 %v1935
      %2914 = vmatpush1.msra.mxu0 %v1934
      %2915 = vmatprep.subr.mxu0 %v1943
      %2916 = vmatpush1.msra.mxu0 %v1942
      %2917 = vmatprep.subr.mxu0 %v1951
      %2918 = vmatpush1.msra.mxu0 %v1950
      %2919 = vmatprep.subr.mxu0 %v1959
      %2920 = vmatpush1.msra.mxu0 %v1958
      %2921 = vmatprep.subr.mxu0 %v1967
      %2922 = vmatpush1.msra.mxu0 %v1966
      %2923 = vmatprep.subr.mxu0 %v1975
      %2924 = vmatpush1.msra.mxu0 %v1974
      %2925 = vmatprep.subr.mxu0 %v1983
      %2926 = vmatpush1.msra.mxu0 %v1982
      %2927 = vmatprep.subr.mxu0 %v1991
      %2928 = vmatpush1.msra.mxu0 %v1990
      %2929 = vmatprep.subr.mxu0 %v1999
      %2930 = vmatpush1.msra.mxu0 %v1998
      %2931 = vmatprep.subr.mxu0 %v2007
      %2932 = vmatpush1.msra.mxu0 %v2006
      %2933 = vmatprep.subr.mxu0 %v2015
      %2934 = vmatpush1.msra.mxu0 %v2014
      %2935 = vmatprep.subr.mxu0 %v2023
      %2936 = vmatpush1.msra.mxu0 %v2022
      %2937 = vmatprep.subr.mxu0 %v2031
      %2938 = vmatpush1.msra.mxu0 %v2030
      %2939 = vmatprep.subr.mxu0 %v2039
      %2940 = vmatpush1.msra.mxu0 %v2038
      %2941 = vmatprep.subr.mxu0 %v2047
      %2942 = vmatpush1.msra.mxu0 %v2046
      %2943 = vmatprep.subr.mxu0 %v2055
      %2944 = vmatpush1.msra.mxu0 %v2054
      %2945 = vmatprep.mubr.f32.mxu0 %v1033
      %2946 = vmatmul.mubr.f32.gmra.mrb[0].mxu0 %v1032
      %v2947 = vpop.f32.mrb[0].mxu0
      %v2948 = vadd.f32 %v2877, %v2947
      %v2949 = vpop.f32.mrb[0].mxu0
      %v2950 = vadd.f32 %v2879, %v2949
      %2951 = vdwg.mxu0
      %2952 = vmatprep.subr.mxu0 %v1041
      %2953 = vmatpush1.msra.mxu0 %v1040
      %2954 = vmatprep.subr.mxu0 %v1049
      %2955 = vmatpush1.msra.mxu0 %v1048
      %2956 = vmatprep.subr.mxu0 %v1057
      %2957 = vmatpush1.msra.mxu0 %v1056
      %2958 = vmatprep.subr.mxu0 %v1065
      %2959 = vmatpush1.msra.mxu0 %v1064
      %2960 = vmatprep.subr.mxu0 %v1073
      %2961 = vmatpush1.msra.mxu0 %v1072
      %2962 = vmatprep.subr.mxu0 %v1081
      %2963 = vmatpush1.msra.mxu0 %v1080
      %2964 = vmatprep.subr.mxu0 %v1089
      %2965 = vmatpush1.msra.mxu0 %v1088
      %2966 = vmatprep.subr.mxu0 %v1097
      %2967 = vmatpush1.msra.mxu0 %v1096
      %2968 = vmatprep.subr.mxu0 %v1105
      %2969 = vmatpush1.msra.mxu0 %v1104
      %2970 = vmatprep.subr.mxu0 %v1113
      %2971 = vmatpush1.msra.mxu0 %v1112
      %2972 = vmatprep.subr.mxu0 %v1121
      %2973 = vmatpush1.msra.mxu0 %v1120
      %2974 = vmatprep.subr.mxu0 %v1129
      %2975 = vmatpush1.msra.mxu0 %v1128
      %2976 = vmatprep.subr.mxu0 %v1137
      %2977 = vmatpush1.msra.mxu0 %v1136
      %2978 = vmatprep.subr.mxu0 %v1145
      %2979 = vmatpush1.msra.mxu0 %v1144
      %2980 = vmatprep.subr.mxu0 %v1153
      %2981 = vmatpush1.msra.mxu0 %v1152
      %2982 = vmatprep.subr.mxu0 %v1161
      %2983 = vmatpush1.msra.mxu0 %v1160
      %2984 = vmatprep.subr.mxu0 %v1169
      %2985 = vmatpush1.msra.mxu0 %v1168
      %2986 = vmatprep.subr.mxu0 %v1177
      %2987 = vmatpush1.msra.mxu0 %v1176
      %2988 = vmatprep.subr.mxu0 %v1185
      %2989 = vmatpush1.msra.mxu0 %v1184
      %2990 = vmatprep.subr.mxu0 %v1193
      %2991 = vmatpush1.msra.mxu0 %v1192
      %2992 = vmatprep.subr.mxu0 %v1201
      %2993 = vmatpush1.msra.mxu0 %v1200
      %2994 = vmatprep.subr.mxu0 %v1209
      %2995 = vmatpush1.msra.mxu0 %v1208
      %2996 = vmatprep.subr.mxu0 %v1217
      %2997 = vmatpush1.msra.mxu0 %v1216
      %2998 = vmatprep.subr.mxu0 %v1225
      %2999 = vmatpush1.msra.mxu0 %v1224
      %3000 = vmatprep.subr.mxu0 %v1233
      %3001 = vmatpush1.msra.mxu0 %v1232
      %3002 = vmatprep.subr.mxu0 %v1241
      %3003 = vmatpush1.msra.mxu0 %v1240
      %3004 = vmatprep.subr.mxu0 %v1249
      %3005 = vmatpush1.msra.mxu0 %v1248
      %3006 = vmatprep.subr.mxu0 %v1257
      %3007 = vmatpush1.msra.mxu0 %v1256
      %3008 = vmatprep.subr.mxu0 %v1265
      %3009 = vmatpush1.msra.mxu0 %v1264
      %3010 = vmatprep.subr.mxu0 %v1273
      %3011 = vmatpush1.msra.mxu0 %v1272
      %3012 = vmatprep.subr.mxu0 %v1281
      %3013 = vmatpush1.msra.mxu0 %v1280
      %3014 = vmatprep.subr.mxu0 %v1289
      %3015 = vmatpush1.msra.mxu0 %v1288
      %3016 = vmatprep.mubr.f32.mxu0 %v1027
      %3017 = vmatmul.mubr.f32.gmra.mrb[0].mxu0 %v1026
      %v3018 = vpop.f32.mrb[0].mxu0
      %v3019 = vadd.f32 %v2087, %v3018
      %v3020 = vpop.f32.mrb[0].mxu0
      %v3021 = vadd.f32 %v2091, %v3020
      %3022 = vdwg.mxu0
      %3023 = vmatprep.subr.mxu0 %v1297
      %3024 = vmatpush1.msra.mxu0 %v1296
      %3025 = vmatprep.subr.mxu0 %v1305
      %3026 = vmatpush1.msra.mxu0 %v1304
      %3027 = vmatprep.subr.mxu0 %v1313
      %3028 = vmatpush1.msra.mxu0 %v1312
      %3029 = vmatprep.subr.mxu0 %v1321
      %3030 = vmatpush1.msra.mxu0 %v1320
      %3031 = vmatprep.subr.mxu0 %v1329
      %3032 = vmatpush1.msra.mxu0 %v1328
      %3033 = vmatprep.subr.mxu0 %v1337
      %3034 = vmatpush1.msra.mxu0 %v1336
      %3035 = vmatprep.subr.mxu0 %v1345
      %3036 = vmatpush1.msra.mxu0 %v1344
      %3037 = vmatprep.subr.mxu0 %v1353
      %3038 = vmatpush1.msra.mxu0 %v1352
      %3039 = vmatprep.subr.mxu0 %v1361
      %3040 = vmatpush1.msra.mxu0 %v1360
      %3041 = vmatprep.subr.mxu0 %v1369
      %3042 = vmatpush1.msra.mxu0 %v1368
      %3043 = vmatprep.subr.mxu0 %v1377
      %3044 = vmatpush1.msra.mxu0 %v1376
      %3045 = vmatprep.subr.mxu0 %v1385
      %3046 = vmatpush1.msra.mxu0 %v1384
      %3047 = vmatprep.subr.mxu0 %v1393
      %3048 = vmatpush1.msra.mxu0 %v1392
      %3049 = vmatprep.subr.mxu0 %v1401
      %3050 = vmatpush1.msra.mxu0 %v1400
      %3051 = vmatprep.subr.mxu0 %v1409
      %3052 = vmatpush1.msra.mxu0 %v1408
      %3053 = vmatprep.subr.mxu0 %v1417
      %3054 = vmatpush1.msra.mxu0 %v1416
      %3055 = vmatprep.subr.mxu0 %v1425
      %3056 = vmatpush1.msra.mxu0 %v1424
      %3057 = vmatprep.subr.mxu0 %v1433
      %3058 = vmatpush1.msra.mxu0 %v1432
      %3059 = vmatprep.subr.mxu0 %v1441
      %3060 = vmatpush1.msra.mxu0 %v1440
      %3061 = vmatprep.subr.mxu0 %v1449
      %3062 = vmatpush1.msra.mxu0 %v1448
      %3063 = vmatprep.subr.mxu0 %v1457
      %3064 = vmatpush1.msra.mxu0 %v1456
      %3065 = vmatprep.subr.mxu0 %v1465
      %3066 = vmatpush1.msra.mxu0 %v1464
      %3067 = vmatprep.subr.mxu0 %v1473
      %3068 = vmatpush1.msra.mxu0 %v1472
      %3069 = vmatprep.subr.mxu0 %v1481
      %3070 = vmatpush1.msra.mxu0 %v1480
      %3071 = vmatprep.subr.mxu0 %v1489
      %3072 = vmatpush1.msra.mxu0 %v1488
      %3073 = vmatprep.subr.mxu0 %v1497
      %3074 = vmatpush1.msra.mxu0 %v1496
      %3075 = vmatprep.subr.mxu0 %v1505
      %3076 = vmatpush1.msra.mxu0 %v1504
      %3077 = vmatprep.subr.mxu0 %v1513
      %3078 = vmatpush1.msra.mxu0 %v1512
      %3079 = vmatprep.subr.mxu0 %v1521
      %3080 = vmatpush1.msra.mxu0 %v1520
      %3081 = vmatprep.subr.mxu0 %v1529
      %3082 = vmatpush1.msra.mxu0 %v1528
      %3083 = vmatprep.subr.mxu0 %v1537
      %3084 = vmatpush1.msra.mxu0 %v1536
      %3085 = vmatprep.subr.mxu0 %v1545
      %3086 = vmatpush1.msra.mxu0 %v1544
      %3087 = vmatprep.mubr.f32.mxu0 %v1029
      %3088 = vmatmul.mubr.f32.gmra.mrb[0].mxu0 %v1028
      %v3089 = vpop.f32.mrb[0].mxu0
      %v3090 = vadd.f32 %v3019, %v3089
      %v3091 = vpop.f32.mrb[0].mxu0
      %v3092 = vadd.f32 %v3021, %v3091
      %3093 = vdwg.mxu0
      %3094 = vmatprep.subr.mxu0 %v1553
      %3095 = vmatpush1.msra.mxu0 %v1552
      %3096 = vmatprep.subr.mxu0 %v1561
      %3097 = vmatpush1.msra.mxu0 %v1560
      %3098 = vmatprep.subr.mxu0 %v1569
      %3099 = vmatpush1.msra.mxu0 %v1568
      %3100 = vmatprep.subr.mxu0 %v1577
      %3101 = vmatpush1.msra.mxu0 %v1576
      %3102 = vmatprep.subr.mxu0 %v1585
      %3103 = vmatpush1.msra.mxu0 %v1584
      %3104 = vmatprep.subr.mxu0 %v1593
      %3105 = vmatpush1.msra.mxu0 %v1592
      %3106 = vmatprep.subr.mxu0 %v1601
      %3107 = vmatpush1.msra.mxu0 %v1600
      %3108 = vmatprep.subr.mxu0 %v1609
      %3109 = vmatpush1.msra.mxu0 %v1608
      %3110 = vmatprep.subr.mxu0 %v1617
      %3111 = vmatpush1.msra.mxu0 %v1616
      %3112 = vmatprep.subr.mxu0 %v1625
      %3113 = vmatpush1.msra.mxu0 %v1624
      %3114 = vmatprep.subr.mxu0 %v1633
      %3115 = vmatpush1.msra.mxu0 %v1632
      %3116 = vmatprep.subr.mxu0 %v1641
      %3117 = vmatpush1.msra.mxu0 %v1640
      %3118 = vmatprep.subr.mxu0 %v1649
      %3119 = vmatpush1.msra.mxu0 %v1648
      %3120 = vmatprep.subr.mxu0 %v1657
      %3121 = vmatpush1.msra.mxu0 %v1656
      %3122 = vmatprep.subr.mxu0 %v1665
      %3123 = vmatpush1.msra.mxu0 %v1664
      %3124 = vmatprep.subr.mxu0 %v1673
      %3125 = vmatpush1.msra.mxu0 %v1672
      %3126 = vmatprep.subr.mxu0 %v1681
      %3127 = vmatpush1.msra.mxu0 %v1680
      %3128 = vmatprep.subr.mxu0 %v1689
      %3129 = vmatpush1.msra.mxu0 %v1688
      %3130 = vmatprep.subr.mxu0 %v1697
      %3131 = vmatpush1.msra.mxu0 %v1696
      %3132 = vmatprep.subr.mxu0 %v1705
      %3133 = vmatpush1.msra.mxu0 %v1704
      %3134 = vmatprep.subr.mxu0 %v1713
      %3135 = vmatpush1.msra.mxu0 %v1712
      %3136 = vmatprep.subr.mxu0 %v1721
      %3137 = vmatpush1.msra.mxu0 %v1720
      %3138 = vmatprep.subr.mxu0 %v1729
      %3139 = vmatpush1.msra.mxu0 %v1728
      %3140 = vmatprep.subr.mxu0 %v1737
      %3141 = vmatpush1.msra.mxu0 %v1736
      %3142 = vmatprep.subr.mxu0 %v1745
      %3143 = vmatpush1.msra.mxu0 %v1744
      %3144 = vmatprep.subr.mxu0 %v1753
      %3145 = vmatpush1.msra.mxu0 %v1752
      %3146 = vmatprep.subr.mxu0 %v1761
      %3147 = vmatpush1.msra.mxu0 %v1760
      %3148 = vmatprep.subr.mxu0 %v1769
      %3149 = vmatpush1.msra.mxu0 %v1768
      %3150 = vmatprep.subr.mxu0 %v1777
      %3151 = vmatpush1.msra.mxu0 %v1776
      %3152 = vmatprep.subr.mxu0 %v1785
      %3153 = vmatpush1.msra.mxu0 %v1784
      %3154 = vmatprep.subr.mxu0 %v1793
      %3155 = vmatpush1.msra.mxu0 %v1792
      %3156 = vmatprep.subr.mxu0 %v1801
      %3157 = vmatpush1.msra.mxu0 %v1800
      %3158 = vmatprep.mubr.f32.mxu0 %v1031
      %3159 = vmatmul.mubr.f32.gmra.mrb[0].mxu0 %v1030
      %v3160 = vpop.f32.mrb[0].mxu0
      %v3161 = vadd.f32 %v3090, %v3160
      %v3162 = vpop.f32.mrb[0].mxu0
      %v3163 = vadd.f32 %v3092, %v3162
      %3164 = vdwg.mxu0
      %3165 = vmatprep.subr.mxu0 %v1809
      %3166 = vmatpush1.msra.mxu0 %v1808
      %3167 = vmatprep.subr.mxu0 %v1817
      %3168 = vmatpush1.msra.mxu0 %v1816
      %3169 = vmatprep.subr.mxu0 %v1825
      %3170 = vmatpush1.msra.mxu0 %v1824
      %3171 = vmatprep.subr.mxu0 %v1833
      %3172 = vmatpush1.msra.mxu0 %v1832
      %3173 = vmatprep.subr.mxu0 %v1841
      %3174 = vmatpush1.msra.mxu0 %v1840
      %3175 = vmatprep.subr.mxu0 %v1849
      %3176 = vmatpush1.msra.mxu0 %v1848
      %3177 = vmatprep.subr.mxu0 %v1857
      %3178 = vmatpush1.msra.mxu0 %v1856
      %3179 = vmatprep.subr.mxu0 %v1865
      %3180 = vmatpush1.msra.mxu0 %v1864
      %3181 = vmatprep.subr.mxu0 %v1873
      %3182 = vmatpush1.msra.mxu0 %v1872
      %3183 = vmatprep.subr.mxu0 %v1881
      %3184 = vmatpush1.msra.mxu0 %v1880
      %3185 = vmatprep.subr.mxu0 %v1889
      %3186 = vmatpush1.msra.mxu0 %v1888
      %3187 = vmatprep.subr.mxu0 %v1897
      %3188 = vmatpush1.msra.mxu0 %v1896
      %3189 = vmatprep.subr.mxu0 %v1905
      %3190 = vmatpush1.msra.mxu0 %v1904
      %3191 = vmatprep.subr.mxu0 %v1913
      %3192 = vmatpush1.msra.mxu0 %v1912
      %3193 = vmatprep.subr.mxu0 %v1921
      %3194 = vmatpush1.msra.mxu0 %v1920
      %3195 = vmatprep.subr.mxu0 %v1929
      %3196 = vmatpush1.msra.mxu0 %v1928
      %3197 = vmatprep.subr.mxu0 %v1937
      %3198 = vmatpush1.msra.mxu0 %v1936
      %3199 = vmatprep.subr.mxu0 %v1945
      %3200 = vmatpush1.msra.mxu0 %v1944
      %3201 = vmatprep.subr.mxu0 %v1953
      %3202 = vmatpush1.msra.mxu0 %v1952
      %3203 = vmatprep.subr.mxu0 %v1961
      %3204 = vmatpush1.msra.mxu0 %v1960
      %3205 = vmatprep.subr.mxu0 %v1969
      %3206 = vmatpush1.msra.mxu0 %v1968
      %3207 = vmatprep.subr.mxu0 %v1977
      %3208 = vmatpush1.msra.mxu0 %v1976
      %3209 = vmatprep.subr.mxu0 %v1985
      %3210 = vmatpush1.msra.mxu0 %v1984
      %3211 = vmatprep.subr.mxu0 %v1993
      %3212 = vmatpush1.msra.mxu0 %v1992
      %3213 = vmatprep.subr.mxu0 %v2001
      %3214 = vmatpush1.msra.mxu0 %v2000
      %3215 = vmatprep.subr.mxu0 %v2009
      %3216 = vmatpush1.msra.mxu0 %v2008
      %3217 = vmatprep.subr.mxu0 %v2017
      %3218 = vmatpush1.msra.mxu0 %v2016
      %3219 = vmatprep.subr.mxu0 %v2025
      %3220 = vmatpush1.msra.mxu0 %v2024
      %3221 = vmatprep.subr.mxu0 %v2033
      %3222 = vmatpush1.msra.mxu0 %v2032
      %3223 = vmatprep.subr.mxu0 %v2041
      %3224 = vmatpush1.msra.mxu0 %v2040
      %3225 = vmatprep.subr.mxu0 %v2049
      %3226 = vmatpush1.msra.mxu0 %v2048
      %3227 = vmatprep.subr.mxu0 %v2057
      %3228 = vmatpush1.msra.mxu0 %v2056
      %3229 = vmatprep.mubr.f32.mxu0 %v1033
      %3230 = vmatmul.mubr.f32.gmra.mrb[0].mxu0 %v1032
      %v3231 = vpop.f32.mrb[0].mxu0
      %v3232 = vadd.f32 %v3161, %v3231
      %v3233 = vpop.f32.mrb[0].mxu0
      %v3234 = vadd.f32 %v3163, %v3233
      %3235 = vdwg.mxu0
      %v3236 = vmax.f32 %v2380, 0.0
      %v3237 = vmax.f32 %v2382, 0.0
      %v3238 = vmax.f32 %v2664, 0.0
      %v3239 = vmax.f32 %v2666, 0.0
      %v3240 = vmax.f32 %v2948, 0.0
      %v3241 = vmax.f32 %v2950, 0.0
      %v3242 = vmax.f32 %v3232, 0.0
      %v3243 = vmax.f32 %v3234, 0.0
      %v3244 = vld [vmem:[%s17] sm:$0xf]
      %v3245 = vld [vmem:[%s5] sm:$0xff]
      %v3246 = vld [vmem:[%s5 + $0x8] sm:$0xff]
      %v3247 = vld [vmem:[%s5 + $0x10] sm:$0xff]
      %v3248 = vld [vmem:[%s5 + $0x18] sm:$0xff]
      %v3249 = vld [vmem:[%s5 + $0x20] sm:$0xff]
      %v3250 = vld [vmem:[%s5 + $0x28] sm:$0xff]
      %v3251 = vld [vmem:[%s5 + $0x30] sm:$0xff]
      %v3252 = vld [vmem:[%s5 + $0x38] sm:$0xff]
      %v3253 = vld [vmem:[%s5 + $0x40] sm:$0xff]
      %v3254 = vld [vmem:[%s5 + $0x48] sm:$0xff]
      %v3255 = vld [vmem:[%s5 + $0x50] sm:$0xff]
      %v3256 = vld [vmem:[%s5 + $0x58] sm:$0xff]
      %v3257 = vld [vmem:[%s5 + $0x60] sm:$0xff]
      %v3258 = vld [vmem:[%s5 + $0x68] sm:$0xff]
      %v3259 = vld [vmem:[%s5 + $0x70] sm:$0xff]
      %v3260 = vld [vmem:[%s5 + $0x78] sm:$0xff]
      %v3261 = vld [vmem:[%s5 + $0x80] sm:$0xff]
      %v3262 = vld [vmem:[%s5 + $0x88] sm:$0xff]
      %v3263 = vld [vmem:[%s5 + $0x90] sm:$0xff]
      %v3264 = vld [vmem:[%s5 + $0x98] sm:$0xff]
      %v3265 = vld [vmem:[%s5 + $0xa0] sm:$0xff]
      %v3266 = vld [vmem:[%s5 + $0xa8] sm:$0xff]
      %v3267 = vld [vmem:[%s5 + $0xb0] sm:$0xff]
      %v3268 = vld [vmem:[%s5 + $0xb8] sm:$0xff]
      %v3269 = vld [vmem:[%s5 + $0xc0] sm:$0xff]
      %v3270 = vld [vmem:[%s5 + $0xc8] sm:$0xff]
      %v3271 = vld [vmem:[%s5 + $0xd0] sm:$0xff]
      %v3272 = vld [vmem:[%s5 + $0xd8] sm:$0xff]
      %v3273 = vld [vmem:[%s5 + $0xe0] sm:$0xff]
      %v3274 = vld [vmem:[%s5 + $0xe8] sm:$0xff]
      %v3275 = vld [vmem:[%s5 + $0xf0] sm:$0xff]
      %v3276 = vld [vmem:[%s5 + $0xf8] sm:$0xff]
      %v3277 = vld [vmem:[%s5 + $0x100] sm:$0xff]
      %v3278 = vld [vmem:[%s5 + $0x108] sm:$0xff]
      %v3279 = vld [vmem:[%s5 + $0x110] sm:$0xff]
      %v3280 = vld [vmem:[%s5 + $0x118] sm:$0xff]
      %v3281 = vld [vmem:[%s5 + $0x120] sm:$0xff]
      %v3282 = vld [vmem:[%s5 + $0x128] sm:$0xff]
      %v3283 = vld [vmem:[%s5 + $0x130] sm:$0xff]
      %v3284 = vld [vmem:[%s5 + $0x138] sm:$0xff]
      %v3285 = vld [vmem:[%s5 + $0x140] sm:$0xff]
      %v3286 = vld [vmem:[%s5 + $0x148] sm:$0xff]
      %v3287 = vld [vmem:[%s5 + $0x150] sm:$0xff]
      %v3288 = vld [vmem:[%s5 + $0x158] sm:$0xff]
      %v3289 = vld [vmem:[%s5 + $0x160] sm:$0xff]
      %v3290 = vld [vmem:[%s5 + $0x168] sm:$0xff]
      %v3291 = vld [vmem:[%s5 + $0x170] sm:$0xff]
      %v3292 = vld [vmem:[%s5 + $0x178] sm:$0xff]
      %v3293 = vld [vmem:[%s5 + $0x180] sm:$0xff]
      %v3294 = vld [vmem:[%s5 + $0x188] sm:$0xff]
      %v3295 = vld [vmem:[%s5 + $0x190] sm:$0xff]
      %v3296 = vld [vmem:[%s5 + $0x198] sm:$0xff]
      %v3297 = vld [vmem:[%s5 + $0x1a0] sm:$0xff]
      %v3298 = vld [vmem:[%s5 + $0x1a8] sm:$0xff]
      %v3299 = vld [vmem:[%s5 + $0x1b0] sm:$0xff]
      %v3300 = vld [vmem:[%s5 + $0x1b8] sm:$0xff]
      %v3301 = vld [vmem:[%s5 + $0x1c0] sm:$0xff]
      %v3302 = vld [vmem:[%s5 + $0x1c8] sm:$0xff]
      %v3303 = vld [vmem:[%s5 + $0x1d0] sm:$0xff]
      %v3304 = vld [vmem:[%s5 + $0x1d8] sm:$0xff]
      %v3305 = vld [vmem:[%s5 + $0x1e0] sm:$0xff]
      %v3306 = vld [vmem:[%s5 + $0x1e8] sm:$0xff]
      %v3307 = vld [vmem:[%s5 + $0x1f0] sm:$0xff]
      %v3308 = vld [vmem:[%s5 + $0x1f8] sm:$0xff]
      %v3309 = vld [vmem:[%s5 + $0x200] sm:$0xff]
      %v3310 = vld [vmem:[%s5 + $0x208] sm:$0xff]
      %v3311 = vld [vmem:[%s5 + $0x210] sm:$0xff]
      %v3312 = vld [vmem:[%s5 + $0x218] sm:$0xff]
      %v3313 = vld [vmem:[%s5 + $0x220] sm:$0xff]
      %v3314 = vld [vmem:[%s5 + $0x228] sm:$0xff]
      %v3315 = vld [vmem:[%s5 + $0x230] sm:$0xff]
      %v3316 = vld [vmem:[%s5 + $0x238] sm:$0xff]
      %v3317 = vld [vmem:[%s5 + $0x240] sm:$0xff]
      %v3318 = vld [vmem:[%s5 + $0x248] sm:$0xff]
      %v3319 = vld [vmem:[%s5 + $0x250] sm:$0xff]
      %v3320 = vld [vmem:[%s5 + $0x258] sm:$0xff]
      %v3321 = vld [vmem:[%s5 + $0x260] sm:$0xff]
      %v3322 = vld [vmem:[%s5 + $0x268] sm:$0xff]
      %v3323 = vld [vmem:[%s5 + $0x270] sm:$0xff]
      %v3324 = vld [vmem:[%s5 + $0x278] sm:$0xff]
      %v3325 = vld [vmem:[%s5 + $0x280] sm:$0xff]
      %v3326 = vld [vmem:[%s5 + $0x288] sm:$0xff]
      %v3327 = vld [vmem:[%s5 + $0x290] sm:$0xff]
      %v3328 = vld [vmem:[%s5 + $0x298] sm:$0xff]
      %v3329 = vld [vmem:[%s5 + $0x2a0] sm:$0xff]
      %v3330 = vld [vmem:[%s5 + $0x2a8] sm:$0xff]
      %v3331 = vld [vmem:[%s5 + $0x2b0] sm:$0xff]
      %v3332 = vld [vmem:[%s5 + $0x2b8] sm:$0xff]
      %v3333 = vld [vmem:[%s5 + $0x2c0] sm:$0xff]
      %v3334 = vld [vmem:[%s5 + $0x2c8] sm:$0xff]
      %v3335 = vld [vmem:[%s5 + $0x2d0] sm:$0xff]
      %v3336 = vld [vmem:[%s5 + $0x2d8] sm:$0xff]
      %v3337 = vld [vmem:[%s5 + $0x2e0] sm:$0xff]
      %v3338 = vld [vmem:[%s5 + $0x2e8] sm:$0xff]
      %v3339 = vld [vmem:[%s5 + $0x2f0] sm:$0xff]
      %v3340 = vld [vmem:[%s5 + $0x2f8] sm:$0xff]
      %v3341 = vld [vmem:[%s5 + $0x300] sm:$0xff]
      %v3342 = vld [vmem:[%s5 + $0x308] sm:$0xff]
      %v3343 = vld [vmem:[%s5 + $0x310] sm:$0xff]
      %v3344 = vld [vmem:[%s5 + $0x318] sm:$0xff]
      %v3345 = vld [vmem:[%s5 + $0x320] sm:$0xff]
      %v3346 = vld [vmem:[%s5 + $0x328] sm:$0xff]
      %v3347 = vld [vmem:[%s5 + $0x330] sm:$0xff]
      %v3348 = vld [vmem:[%s5 + $0x338] sm:$0xff]
      %v3349 = vld [vmem:[%s5 + $0x340] sm:$0xff]
      %v3350 = vld [vmem:[%s5 + $0x348] sm:$0xff]
      %v3351 = vld [vmem:[%s5 + $0x350] sm:$0xff]
      %v3352 = vld [vmem:[%s5 + $0x358] sm:$0xff]
      %v3353 = vld [vmem:[%s5 + $0x360] sm:$0xff]
      %v3354 = vld [vmem:[%s5 + $0x368] sm:$0xff]
      %v3355 = vld [vmem:[%s5 + $0x370] sm:$0xff]
      %v3356 = vld [vmem:[%s5 + $0x378] sm:$0xff]
      %v3357 = vld [vmem:[%s5 + $0x380] sm:$0xff]
      %v3358 = vld [vmem:[%s5 + $0x388] sm:$0xff]
      %v3359 = vld [vmem:[%s5 + $0x390] sm:$0xff]
      %v3360 = vld [vmem:[%s5 + $0x398] sm:$0xff]
      %v3361 = vld [vmem:[%s5 + $0x3a0] sm:$0xff]
      %v3362 = vld [vmem:[%s5 + $0x3a8] sm:$0xff]
      %v3363 = vld [vmem:[%s5 + $0x3b0] sm:$0xff]
      %v3364 = vld [vmem:[%s5 + $0x3b8] sm:$0xff]
      %v3365 = vld [vmem:[%s5 + $0x3c0] sm:$0xff]
      %v3366 = vld [vmem:[%s5 + $0x3c8] sm:$0xff]
      %v3367 = vld [vmem:[%s5 + $0x3d0] sm:$0xff]
      %v3368 = vld [vmem:[%s5 + $0x3d8] sm:$0xff]
      %v3369 = vld [vmem:[%s5 + $0x3e0] sm:$0xff]
      %v3370 = vld [vmem:[%s5 + $0x3e8] sm:$0xff]
      %v3371 = vld [vmem:[%s5 + $0x3f0] sm:$0xff]
      %v3372 = vld [vmem:[%s5 + $0x3f8] sm:$0xff]
      %v3373 = vld [vmem:[%s5 + $0x400] sm:$0xff]
      %v3374 = vld [vmem:[%s5 + $0x408] sm:$0xff]
      %v3375 = vld [vmem:[%s5 + $0x410] sm:$0xff]
      %v3376 = vld [vmem:[%s5 + $0x418] sm:$0xff]
      %v3377 = vld [vmem:[%s5 + $0x420] sm:$0xff]
      %v3378 = vld [vmem:[%s5 + $0x428] sm:$0xff]
      %v3379 = vld [vmem:[%s5 + $0x430] sm:$0xff]
      %v3380 = vld [vmem:[%s5 + $0x438] sm:$0xff]
      %v3381 = vld [vmem:[%s5 + $0x440] sm:$0xff]
      %v3382 = vld [vmem:[%s5 + $0x448] sm:$0xff]
      %v3383 = vld [vmem:[%s5 + $0x450] sm:$0xff]
      %v3384 = vld [vmem:[%s5 + $0x458] sm:$0xff]
      %v3385 = vld [vmem:[%s5 + $0x460] sm:$0xff]
      %v3386 = vld [vmem:[%s5 + $0x468] sm:$0xff]
      %v3387 = vld [vmem:[%s5 + $0x470] sm:$0xff]
      %v3388 = vld [vmem:[%s5 + $0x478] sm:$0xff]
      %v3389 = vld [vmem:[%s5 + $0x480] sm:$0xff]
      %v3390 = vld [vmem:[%s5 + $0x488] sm:$0xff]
      %v3391 = vld [vmem:[%s5 + $0x490] sm:$0xff]
      %v3392 = vld [vmem:[%s5 + $0x498] sm:$0xff]
      %v3393 = vld [vmem:[%s5 + $0x4a0] sm:$0xff]
      %v3394 = vld [vmem:[%s5 + $0x4a8] sm:$0xff]
      %v3395 = vld [vmem:[%s5 + $0x4b0] sm:$0xff]
      %v3396 = vld [vmem:[%s5 + $0x4b8] sm:$0xff]
      %v3397 = vld [vmem:[%s5 + $0x4c0] sm:$0xff]
      %v3398 = vld [vmem:[%s5 + $0x4c8] sm:$0xff]
      %v3399 = vld [vmem:[%s5 + $0x4d0] sm:$0xff]
      %v3400 = vld [vmem:[%s5 + $0x4d8] sm:$0xff]
      %v3401 = vld [vmem:[%s5 + $0x4e0] sm:$0xff]
      %v3402 = vld [vmem:[%s5 + $0x4e8] sm:$0xff]
      %v3403 = vld [vmem:[%s5 + $0x4f0] sm:$0xff]
      %v3404 = vld [vmem:[%s5 + $0x4f8] sm:$0xff]
      %v3405 = vld [vmem:[%s5 + $0x500] sm:$0xff]
      %v3406 = vld [vmem:[%s5 + $0x508] sm:$0xff]
      %v3407 = vld [vmem:[%s5 + $0x510] sm:$0xff]
      %v3408 = vld [vmem:[%s5 + $0x518] sm:$0xff]
      %v3409 = vld [vmem:[%s5 + $0x520] sm:$0xff]
      %v3410 = vld [vmem:[%s5 + $0x528] sm:$0xff]
      %v3411 = vld [vmem:[%s5 + $0x530] sm:$0xff]
      %v3412 = vld [vmem:[%s5 + $0x538] sm:$0xff]
      %v3413 = vld [vmem:[%s5 + $0x540] sm:$0xff]
      %v3414 = vld [vmem:[%s5 + $0x548] sm:$0xff]
      %v3415 = vld [vmem:[%s5 + $0x550] sm:$0xff]
      %v3416 = vld [vmem:[%s5 + $0x558] sm:$0xff]
      %v3417 = vld [vmem:[%s5 + $0x560] sm:$0xff]
      %v3418 = vld [vmem:[%s5 + $0x568] sm:$0xff]
      %v3419 = vld [vmem:[%s5 + $0x570] sm:$0xff]
      %v3420 = vld [vmem:[%s5 + $0x578] sm:$0xff]
      %v3421 = vld [vmem:[%s5 + $0x580] sm:$0xff]
      %v3422 = vld [vmem:[%s5 + $0x588] sm:$0xff]
      %v3423 = vld [vmem:[%s5 + $0x590] sm:$0xff]
      %v3424 = vld [vmem:[%s5 + $0x598] sm:$0xff]
      %v3425 = vld [vmem:[%s5 + $0x5a0] sm:$0xff]
      %v3426 = vld [vmem:[%s5 + $0x5a8] sm:$0xff]
      %v3427 = vld [vmem:[%s5 + $0x5b0] sm:$0xff]
      %v3428 = vld [vmem:[%s5 + $0x5b8] sm:$0xff]
      %v3429 = vld [vmem:[%s5 + $0x5c0] sm:$0xff]
      %v3430 = vld [vmem:[%s5 + $0x5c8] sm:$0xff]
      %v3431 = vld [vmem:[%s5 + $0x5d0] sm:$0xff]
      %v3432 = vld [vmem:[%s5 + $0x5d8] sm:$0xff]
      %v3433 = vld [vmem:[%s5 + $0x5e0] sm:$0xff]
      %v3434 = vld [vmem:[%s5 + $0x5e8] sm:$0xff]
      %v3435 = vld [vmem:[%s5 + $0x5f0] sm:$0xff]
      %v3436 = vld [vmem:[%s5 + $0x5f8] sm:$0xff]
      %v3437 = vld [vmem:[%s5 + $0x600] sm:$0xff]
      %v3438 = vld [vmem:[%s5 + $0x608] sm:$0xff]
      %v3439 = vld [vmem:[%s5 + $0x610] sm:$0xff]
      %v3440 = vld [vmem:[%s5 + $0x618] sm:$0xff]
      %v3441 = vld [vmem:[%s5 + $0x620] sm:$0xff]
      %v3442 = vld [vmem:[%s5 + $0x628] sm:$0xff]
      %v3443 = vld [vmem:[%s5 + $0x630] sm:$0xff]
      %v3444 = vld [vmem:[%s5 + $0x638] sm:$0xff]
      %v3445 = vld [vmem:[%s5 + $0x640] sm:$0xff]
      %v3446 = vld [vmem:[%s5 + $0x648] sm:$0xff]
      %v3447 = vld [vmem:[%s5 + $0x650] sm:$0xff]
      %v3448 = vld [vmem:[%s5 + $0x658] sm:$0xff]
      %v3449 = vld [vmem:[%s5 + $0x660] sm:$0xff]
      %v3450 = vld [vmem:[%s5 + $0x668] sm:$0xff]
      %v3451 = vld [vmem:[%s5 + $0x670] sm:$0xff]
      %v3452 = vld [vmem:[%s5 + $0x678] sm:$0xff]
      %v3453 = vld [vmem:[%s5 + $0x680] sm:$0xff]
      %v3454 = vld [vmem:[%s5 + $0x688] sm:$0xff]
      %v3455 = vld [vmem:[%s5 + $0x690] sm:$0xff]
      %v3456 = vld [vmem:[%s5 + $0x698] sm:$0xff]
      %v3457 = vld [vmem:[%s5 + $0x6a0] sm:$0xff]
      %v3458 = vld [vmem:[%s5 + $0x6a8] sm:$0xff]
      %v3459 = vld [vmem:[%s5 + $0x6b0] sm:$0xff]
      %v3460 = vld [vmem:[%s5 + $0x6b8] sm:$0xff]
      %v3461 = vld [vmem:[%s5 + $0x6c0] sm:$0xff]
      %v3462 = vld [vmem:[%s5 + $0x6c8] sm:$0xff]
      %v3463 = vld [vmem:[%s5 + $0x6d0] sm:$0xff]
      %v3464 = vld [vmem:[%s5 + $0x6d8] sm:$0xff]
      %v3465 = vld [vmem:[%s5 + $0x6e0] sm:$0xff]
      %v3466 = vld [vmem:[%s5 + $0x6e8] sm:$0xff]
      %v3467 = vld [vmem:[%s5 + $0x6f0] sm:$0xff]
      %v3468 = vld [vmem:[%s5 + $0x6f8] sm:$0xff]
      %v3469 = vld [vmem:[%s5 + $0x700] sm:$0xff]
      %v3470 = vld [vmem:[%s5 + $0x708] sm:$0xff]
      %v3471 = vld [vmem:[%s5 + $0x710] sm:$0xff]
      %v3472 = vld [vmem:[%s5 + $0x718] sm:$0xff]
      %v3473 = vld [vmem:[%s5 + $0x720] sm:$0xff]
      %v3474 = vld [vmem:[%s5 + $0x728] sm:$0xff]
      %v3475 = vld [vmem:[%s5 + $0x730] sm:$0xff]
      %v3476 = vld [vmem:[%s5 + $0x738] sm:$0xff]
      %v3477 = vld [vmem:[%s5 + $0x740] sm:$0xff]
      %v3478 = vld [vmem:[%s5 + $0x748] sm:$0xff]
      %v3479 = vld [vmem:[%s5 + $0x750] sm:$0xff]
      %v3480 = vld [vmem:[%s5 + $0x758] sm:$0xff]
      %v3481 = vld [vmem:[%s5 + $0x760] sm:$0xff]
      %v3482 = vld [vmem:[%s5 + $0x768] sm:$0xff]
      %v3483 = vld [vmem:[%s5 + $0x770] sm:$0xff]
      %v3484 = vld [vmem:[%s5 + $0x778] sm:$0xff]
      %v3485 = vld [vmem:[%s5 + $0x780] sm:$0xff]
      %v3486 = vld [vmem:[%s5 + $0x788] sm:$0xff]
      %v3487 = vld [vmem:[%s5 + $0x790] sm:$0xff]
      %v3488 = vld [vmem:[%s5 + $0x798] sm:$0xff]
      %v3489 = vld [vmem:[%s5 + $0x7a0] sm:$0xff]
      %v3490 = vld [vmem:[%s5 + $0x7a8] sm:$0xff]
      %v3491 = vld [vmem:[%s5 + $0x7b0] sm:$0xff]
      %v3492 = vld [vmem:[%s5 + $0x7b8] sm:$0xff]
      %v3493 = vld [vmem:[%s5 + $0x7c0] sm:$0xff]
      %v3494 = vld [vmem:[%s5 + $0x7c8] sm:$0xff]
      %v3495 = vld [vmem:[%s5 + $0x7d0] sm:$0xff]
      %v3496 = vld [vmem:[%s5 + $0x7d8] sm:$0xff]
      %v3497 = vld [vmem:[%s5 + $0x7e0] sm:$0xff]
      %v3498 = vld [vmem:[%s5 + $0x7e8] sm:$0xff]
      %v3499 = vld [vmem:[%s5 + $0x7f0] sm:$0xff]
      %v3500 = vld [vmem:[%s5 + $0x7f8] sm:$0xff]
      %v3501 = vld [vmem:[%s6] sm:$0x3]
      %v3503 = vlaneseq
      %v3504 = vshrl.u32 %v3503, 7
      %v3505 = vsub.s32 0, %v3504
      %v3506 = vrot.slane %v3501, %v3505
      %v3507 = vlaneseq
      %v3508 = vshrl.u32 %v3507, 7
      %v3509 = vsub.s32 1, %v3508
      %v3510 = vrot.slane %v3501, %v3509
      %3513 = vmatprep.subr.mxu0 %v3246
      %3514 = vmatpush1.msra.mxu0 %v3245
      %3515 = vmatprep.subr.mxu0 %v3248
      %3516 = vmatpush1.msra.mxu0 %v3247
      %3517 = vmatprep.subr.mxu0 %v3250
      %3518 = vmatpush1.msra.mxu0 %v3249
      %3519 = vmatprep.subr.mxu0 %v3252
      %3520 = vmatpush1.msra.mxu0 %v3251
      %3521 = vmatprep.subr.mxu0 %v3254
      %3522 = vmatpush1.msra.mxu0 %v3253
      %3523 = vmatprep.subr.mxu0 %v3256
      %3524 = vmatpush1.msra.mxu0 %v3255
      %3525 = vmatprep.subr.mxu0 %v3258
      %3526 = vmatpush1.msra.mxu0 %v3257
      %3527 = vmatprep.subr.mxu0 %v3260
      %3528 = vmatpush1.msra.mxu0 %v3259
      %3529 = vmatprep.subr.mxu0 %v3262
      %3530 = vmatpush1.msra.mxu0 %v3261
      %3531 = vmatprep.subr.mxu0 %v3264
      %3532 = vmatpush1.msra.mxu0 %v3263
      %3533 = vmatprep.subr.mxu0 %v3266
      %3534 = vmatpush1.msra.mxu0 %v3265
      %3535 = vmatprep.subr.mxu0 %v3268
      %3536 = vmatpush1.msra.mxu0 %v3267
      %3537 = vmatprep.subr.mxu0 %v3270
      %3538 = vmatpush1.msra.mxu0 %v3269
      %3539 = vmatprep.subr.mxu0 %v3272
      %3540 = vmatpush1.msra.mxu0 %v3271
      %3541 = vmatprep.subr.mxu0 %v3274
      %3542 = vmatpush1.msra.mxu0 %v3273
      %3543 = vmatprep.subr.mxu0 %v3276
      %3544 = vmatpush1.msra.mxu0 %v3275
      %3545 = vmatprep.subr.mxu0 %v3278
      %3546 = vmatpush1.msra.mxu0 %v3277
      %3547 = vmatprep.subr.mxu0 %v3280
      %3548 = vmatpush1.msra.mxu0 %v3279
      %3549 = vmatprep.subr.mxu0 %v3282
      %3550 = vmatpush1.msra.mxu0 %v3281
      %3551 = vmatprep.subr.mxu0 %v3284
      %3552 = vmatpush1.msra.mxu0 %v3283
      %3553 = vmatprep.subr.mxu0 %v3286
      %3554 = vmatpush1.msra.mxu0 %v3285
      %3555 = vmatprep.subr.mxu0 %v3288
      %3556 = vmatpush1.msra.mxu0 %v3287
      %3557 = vmatprep.subr.mxu0 %v3290
      %3558 = vmatpush1.msra.mxu0 %v3289
      %3559 = vmatprep.subr.mxu0 %v3292
      %3560 = vmatpush1.msra.mxu0 %v3291
      %3561 = vmatprep.subr.mxu0 %v3294
      %3562 = vmatpush1.msra.mxu0 %v3293
      %3563 = vmatprep.subr.mxu0 %v3296
      %3564 = vmatpush1.msra.mxu0 %v3295
      %3565 = vmatprep.subr.mxu0 %v3298
      %3566 = vmatpush1.msra.mxu0 %v3297
      %3567 = vmatprep.subr.mxu0 %v3300
      %3568 = vmatpush1.msra.mxu0 %v3299
      %3569 = vmatprep.subr.mxu0 %v3302
      %3570 = vmatpush1.msra.mxu0 %v3301
      %3571 = vmatprep.subr.mxu0 %v3304
      %3572 = vmatpush1.msra.mxu0 %v3303
      %3573 = vmatprep.subr.mxu0 %v3306
      %3574 = vmatpush1.msra.mxu0 %v3305
      %3575 = vmatprep.subr.mxu0 %v3308
      %3576 = vmatpush1.msra.mxu0 %v3307
      %3577 = vmatprep.mubr.f32.mxu0 %v3237
      %3578 = vmatmul.mubr.f32.gmra.mrb[0].mxu0 %v3236
      %v3579 = vpop.f32.mrb[0].mxu0
      %v3580 = vadd.f32 %v3506, %v3579
      %v3581 = vpop.f32.mrb[0].mxu0
      %v3582 = vadd.f32 %v3510, %v3581
      %3583 = vdwg.mxu0
      %3584 = vmatprep.subr.mxu0 %v3310
      %3585 = vmatpush1.msra.mxu0 %v3309
      %3586 = vmatprep.subr.mxu0 %v3312
      %3587 = vmatpush1.msra.mxu0 %v3311
      %3588 = vmatprep.subr.mxu0 %v3314
      %3589 = vmatpush1.msra.mxu0 %v3313
      %3590 = vmatprep.subr.mxu0 %v3316
      %3591 = vmatpush1.msra.mxu0 %v3315
      %3592 = vmatprep.subr.mxu0 %v3318
      %3593 = vmatpush1.msra.mxu0 %v3317
      %3594 = vmatprep.subr.mxu0 %v3320
      %3595 = vmatpush1.msra.mxu0 %v3319
      %3596 = vmatprep.subr.mxu0 %v3322
      %3597 = vmatpush1.msra.mxu0 %v3321
      %3598 = vmatprep.subr.mxu0 %v3324
      %3599 = vmatpush1.msra.mxu0 %v3323
      %3600 = vmatprep.subr.mxu0 %v3326
      %3601 = vmatpush1.msra.mxu0 %v3325
      %3602 = vmatprep.subr.mxu0 %v3328
      %3603 = vmatpush1.msra.mxu0 %v3327
      %3604 = vmatprep.subr.mxu0 %v3330
      %3605 = vmatpush1.msra.mxu0 %v3329
      %3606 = vmatprep.subr.mxu0 %v3332
      %3607 = vmatpush1.msra.mxu0 %v3331
      %3608 = vmatprep.subr.mxu0 %v3334
      %3609 = vmatpush1.msra.mxu0 %v3333
      %3610 = vmatprep.subr.mxu0 %v3336
      %3611 = vmatpush1.msra.mxu0 %v3335
      %3612 = vmatprep.subr.mxu0 %v3338
      %3613 = vmatpush1.msra.mxu0 %v3337
      %3614 = vmatprep.subr.mxu0 %v3340
      %3615 = vmatpush1.msra.mxu0 %v3339
      %3616 = vmatprep.subr.mxu0 %v3342
      %3617 = vmatpush1.msra.mxu0 %v3341
      %3618 = vmatprep.subr.mxu0 %v3344
      %3619 = vmatpush1.msra.mxu0 %v3343
      %3620 = vmatprep.subr.mxu0 %v3346
      %3621 = vmatpush1.msra.mxu0 %v3345
      %3622 = vmatprep.subr.mxu0 %v3348
      %3623 = vmatpush1.msra.mxu0 %v3347
      %3624 = vmatprep.subr.mxu0 %v3350
      %3625 = vmatpush1.msra.mxu0 %v3349
      %3626 = vmatprep.subr.mxu0 %v3352
      %3627 = vmatpush1.msra.mxu0 %v3351
      %3628 = vmatprep.subr.mxu0 %v3354
      %3629 = vmatpush1.msra.mxu0 %v3353
      %3630 = vmatprep.subr.mxu0 %v3356
      %3631 = vmatpush1.msra.mxu0 %v3355
      %3632 = vmatprep.subr.mxu0 %v3358
      %3633 = vmatpush1.msra.mxu0 %v3357
      %3634 = vmatprep.subr.mxu0 %v3360
      %3635 = vmatpush1.msra.mxu0 %v3359
      %3636 = vmatprep.subr.mxu0 %v3362
      %3637 = vmatpush1.msra.mxu0 %v3361
      %3638 = vmatprep.subr.mxu0 %v3364
      %3639 = vmatpush1.msra.mxu0 %v3363
      %3640 = vmatprep.subr.mxu0 %v3366
      %3641 = vmatpush1.msra.mxu0 %v3365
      %3642 = vmatprep.subr.mxu0 %v3368
      %3643 = vmatpush1.msra.mxu0 %v3367
      %3644 = vmatprep.subr.mxu0 %v3370
      %3645 = vmatpush1.msra.mxu0 %v3369
      %3646 = vmatprep.subr.mxu0 %v3372
      %3647 = vmatpush1.msra.mxu0 %v3371
      %3648 = vmatprep.mubr.f32.mxu0 %v3239
      %3649 = vmatmul.mubr.f32.gmra.mrb[0].mxu0 %v3238
      %v3650 = vpop.f32.mrb[0].mxu0
      %v3651 = vadd.f32 %v3580, %v3650
      %v3652 = vpop.f32.mrb[0].mxu0
      %v3653 = vadd.f32 %v3582, %v3652
      %3654 = vdwg.mxu0
      %3655 = vmatprep.subr.mxu0 %v3374
      %3656 = vmatpush1.msra.mxu0 %v3373
      %3657 = vmatprep.subr.mxu0 %v3376
      %3658 = vmatpush1.msra.mxu0 %v3375
      %3659 = vmatprep.subr.mxu0 %v3378
      %3660 = vmatpush1.msra.mxu0 %v3377
      %3661 = vmatprep.subr.mxu0 %v3380
      %3662 = vmatpush1.msra.mxu0 %v3379
      %3663 = vmatprep.subr.mxu0 %v3382
      %3664 = vmatpush1.msra.mxu0 %v3381
      %3665 = vmatprep.subr.mxu0 %v3384
      %3666 = vmatpush1.msra.mxu0 %v3383
      %3667 = vmatprep.subr.mxu0 %v3386
      %3668 = vmatpush1.msra.mxu0 %v3385
      %3669 = vmatprep.subr.mxu0 %v3388
      %3670 = vmatpush1.msra.mxu0 %v3387
      %3671 = vmatprep.subr.mxu0 %v3390
      %3672 = vmatpush1.msra.mxu0 %v3389
      %3673 = vmatprep.subr.mxu0 %v3392
      %3674 = vmatpush1.msra.mxu0 %v3391
      %3675 = vmatprep.subr.mxu0 %v3394
      %3676 = vmatpush1.msra.mxu0 %v3393
      %3677 = vmatprep.subr.mxu0 %v3396
      %3678 = vmatpush1.msra.mxu0 %v3395
      %3679 = vmatprep.subr.mxu0 %v3398
      %3680 = vmatpush1.msra.mxu0 %v3397
      %3681 = vmatprep.subr.mxu0 %v3400
      %3682 = vmatpush1.msra.mxu0 %v3399
      %3683 = vmatprep.subr.mxu0 %v3402
      %3684 = vmatpush1.msra.mxu0 %v3401
      %3685 = vmatprep.subr.mxu0 %v3404
      %3686 = vmatpush1.msra.mxu0 %v3403
      %3687 = vmatprep.subr.mxu0 %v3406
      %3688 = vmatpush1.msra.mxu0 %v3405
      %3689 = vmatprep.subr.mxu0 %v3408
      %3690 = vmatpush1.msra.mxu0 %v3407
      %3691 = vmatprep.subr.mxu0 %v3410
      %3692 = vmatpush1.msra.mxu0 %v3409
      %3693 = vmatprep.subr.mxu0 %v3412
      %3694 = vmatpush1.msra.mxu0 %v3411
      %3695 = vmatprep.subr.mxu0 %v3414
      %3696 = vmatpush1.msra.mxu0 %v3413
      %3697 = vmatprep.subr.mxu0 %v3416
      %3698 = vmatpush1.msra.mxu0 %v3415
      %3699 = vmatprep.subr.mxu0 %v3418
      %3700 = vmatpush1.msra.mxu0 %v3417
      %3701 = vmatprep.subr.mxu0 %v3420
      %3702 = vmatpush1.msra.mxu0 %v3419
      %3703 = vmatprep.subr.mxu0 %v3422
      %3704 = vmatpush1.msra.mxu0 %v3421
      %3705 = vmatprep.subr.mxu0 %v3424
      %3706 = vmatpush1.msra.mxu0 %v3423
      %3707 = vmatprep.subr.mxu0 %v3426
      %3708 = vmatpush1.msra.mxu0 %v3425
      %3709 = vmatprep.subr.mxu0 %v3428
      %3710 = vmatpush1.msra.mxu0 %v3427
      %3711 = vmatprep.subr.mxu0 %v3430
      %3712 = vmatpush1.msra.mxu0 %v3429
      %3713 = vmatprep.subr.mxu0 %v3432
      %3714 = vmatpush1.msra.mxu0 %v3431
      %3715 = vmatprep.subr.mxu0 %v3434
      %3716 = vmatpush1.msra.mxu0 %v3433
      %3717 = vmatprep.subr.mxu0 %v3436
      %3718 = vmatpush1.msra.mxu0 %v3435
      %3719 = vmatprep.mubr.f32.mxu0 %v3241
      %3720 = vmatmul.mubr.f32.gmra.mrb[0].mxu0 %v3240
      %v3721 = vpop.f32.mrb[0].mxu0
      %v3722 = vadd.f32 %v3651, %v3721
      %v3723 = vpop.f32.mrb[0].mxu0
      %v3724 = vadd.f32 %v3653, %v3723
      %3725 = vdwg.mxu0
      %3726 = vmatprep.subr.mxu0 %v3438
      %3727 = vmatpush1.msra.mxu0 %v3437
      %3728 = vmatprep.subr.mxu0 %v3440
      %3729 = vmatpush1.msra.mxu0 %v3439
      %3730 = vmatprep.subr.mxu0 %v3442
      %3731 = vmatpush1.msra.mxu0 %v3441
      %3732 = vmatprep.subr.mxu0 %v3444
      %3733 = vmatpush1.msra.mxu0 %v3443
      %3734 = vmatprep.subr.mxu0 %v3446
      %3735 = vmatpush1.msra.mxu0 %v3445
      %3736 = vmatprep.subr.mxu0 %v3448
      %3737 = vmatpush1.msra.mxu0 %v3447
      %3738 = vmatprep.subr.mxu0 %v3450
      %3739 = vmatpush1.msra.mxu0 %v3449
      %3740 = vmatprep.subr.mxu0 %v3452
      %3741 = vmatpush1.msra.mxu0 %v3451
      %3742 = vmatprep.subr.mxu0 %v3454
      %3743 = vmatpush1.msra.mxu0 %v3453
      %3744 = vmatprep.subr.mxu0 %v3456
      %3745 = vmatpush1.msra.mxu0 %v3455
      %3746 = vmatprep.subr.mxu0 %v3458
      %3747 = vmatpush1.msra.mxu0 %v3457
      %3748 = vmatprep.subr.mxu0 %v3460
      %3749 = vmatpush1.msra.mxu0 %v3459
      %3750 = vmatprep.subr.mxu0 %v3462
      %3751 = vmatpush1.msra.mxu0 %v3461
      %3752 = vmatprep.subr.mxu0 %v3464
      %3753 = vmatpush1.msra.mxu0 %v3463
      %3754 = vmatprep.subr.mxu0 %v3466
      %3755 = vmatpush1.msra.mxu0 %v3465
      %3756 = vmatprep.subr.mxu0 %v3468
      %3757 = vmatpush1.msra.mxu0 %v3467
      %3758 = vmatprep.subr.mxu0 %v3470
      %3759 = vmatpush1.msra.mxu0 %v3469
      %3760 = vmatprep.subr.mxu0 %v3472
      %3761 = vmatpush1.msra.mxu0 %v3471
      %3762 = vmatprep.subr.mxu0 %v3474
      %3763 = vmatpush1.msra.mxu0 %v3473
      %3764 = vmatprep.subr.mxu0 %v3476
      %3765 = vmatpush1.msra.mxu0 %v3475
      %3766 = vmatprep.subr.mxu0 %v3478
      %3767 = vmatpush1.msra.mxu0 %v3477
      %3768 = vmatprep.subr.mxu0 %v3480
      %3769 = vmatpush1.msra.mxu0 %v3479
      %3770 = vmatprep.subr.mxu0 %v3482
      %3771 = vmatpush1.msra.mxu0 %v3481
      %3772 = vmatprep.subr.mxu0 %v3484
      %3773 = vmatpush1.msra.mxu0 %v3483
      %3774 = vmatprep.subr.mxu0 %v3486
      %3775 = vmatpush1.msra.mxu0 %v3485
      %3776 = vmatprep.subr.mxu0 %v3488
      %3777 = vmatpush1.msra.mxu0 %v3487
      %3778 = vmatprep.subr.mxu0 %v3490
      %3779 = vmatpush1.msra.mxu0 %v3489
      %3780 = vmatprep.subr.mxu0 %v3492
      %3781 = vmatpush1.msra.mxu0 %v3491
      %3782 = vmatprep.subr.mxu0 %v3494
      %3783 = vmatpush1.msra.mxu0 %v3493
      %3784 = vmatprep.subr.mxu0 %v3496
      %3785 = vmatpush1.msra.mxu0 %v3495
      %3786 = vmatprep.subr.mxu0 %v3498
      %3787 = vmatpush1.msra.mxu0 %v3497
      %3788 = vmatprep.subr.mxu0 %v3500
      %3789 = vmatpush1.msra.mxu0 %v3499
      %3790 = vmatprep.mubr.f32.mxu0 %v3243
      %3791 = vmatmul.mubr.f32.gmra.mrb[0].mxu0 %v3242
      %v3792 = vpop.f32.mrb[0].mxu0
      %v3793 = vadd.f32 %v3722, %v3792
      %v3794 = vpop.f32.mrb[0].mxu0
      %v3795 = vadd.f32 %v3724, %v3794
      %3796 = vdwg.mxu0
      %v3797 = vmax.f32 %v3793, 0.0
      %v3798 = vmax.f32 %v3795, 0.0
      %v3799 = vld [vmem:[%s7] sm:$0xff]
      %v3800 = vld [vmem:[%s7 + $0x8] sm:$0xff]
      %v3801 = vld [vmem:[%s7 + $0x10] sm:$0xff]
      %v3802 = vld [vmem:[%s7 + $0x18] sm:$0xff]
      %v3803 = vld [vmem:[%s7 + $0x20] sm:$0xff]
      %v3804 = vld [vmem:[%s7 + $0x28] sm:$0xff]
      %v3805 = vld [vmem:[%s7 + $0x30] sm:$0xff]
      %v3806 = vld [vmem:[%s7 + $0x38] sm:$0xff]
      %v3807 = vld [vmem:[%s7 + $0x40] sm:$0xff]
      %v3808 = vld [vmem:[%s7 + $0x48] sm:$0xff]
      %v3809 = vld [vmem:[%s7 + $0x50] sm:$0xff]
      %v3810 = vld [vmem:[%s7 + $0x58] sm:$0xff]
      %v3811 = vld [vmem:[%s7 + $0x60] sm:$0xff]
      %v3812 = vld [vmem:[%s7 + $0x68] sm:$0xff]
      %v3813 = vld [vmem:[%s7 + $0x70] sm:$0xff]
      %v3814 = vld [vmem:[%s7 + $0x78] sm:$0xff]
      %v3815 = vld [vmem:[%s7 + $0x80] sm:$0xff]
      %v3816 = vld [vmem:[%s7 + $0x88] sm:$0xff]
      %v3817 = vld [vmem:[%s7 + $0x90] sm:$0xff]
      %v3818 = vld [vmem:[%s7 + $0x98] sm:$0xff]
      %v3819 = vld [vmem:[%s7 + $0xa0] sm:$0xff]
      %v3820 = vld [vmem:[%s7 + $0xa8] sm:$0xff]
      %v3821 = vld [vmem:[%s7 + $0xb0] sm:$0xff]
      %v3822 = vld [vmem:[%s7 + $0xb8] sm:$0xff]
      %v3823 = vld [vmem:[%s7 + $0xc0] sm:$0xff]
      %v3824 = vld [vmem:[%s7 + $0xc8] sm:$0xff]
      %v3825 = vld [vmem:[%s7 + $0xd0] sm:$0xff]
      %v3826 = vld [vmem:[%s7 + $0xd8] sm:$0xff]
      %v3827 = vld [vmem:[%s7 + $0xe0] sm:$0xff]
      %v3828 = vld [vmem:[%s7 + $0xe8] sm:$0xff]
      %v3829 = vld [vmem:[%s7 + $0xf0] sm:$0xff]
      %v3830 = vld [vmem:[%s7 + $0xf8] sm:$0xff]
      %v3831 = vld [vmem:[%s7 + $0x100] sm:$0xff]
      %v3832 = vld [vmem:[%s7 + $0x108] sm:$0xff]
      %v3833 = vld [vmem:[%s7 + $0x110] sm:$0xff]
      %v3834 = vld [vmem:[%s7 + $0x118] sm:$0xff]
      %v3835 = vld [vmem:[%s8] sm:$0x3]
      %v3837 = vlaneseq
      %v3838 = vshrl.u32 %v3837, 7
      %v3839 = vsub.s32 0, %v3838
      %v3840 = vrot.slane %v3835, %v3839
      %v3841 = vlaneseq
      %v3842 = vshrl.u32 %v3841, 7
      %v3843 = vsub.s32 1, %v3842
      %v3844 = vrot.slane %v3835, %v3843
      %vm3847 = vcmask 130048
      %v3849 = vsel %vm3847, %v3798, 0
      %3851 = vmatprep.subr.mxu0 %v3800
      %3852 = vmatpush1.msra.mxu0 %v3799
      %3853 = vmatprep.subr.mxu0 %v3802
      %3854 = vmatpush1.msra.mxu0 %v3801
      %3855 = vmatprep.subr.mxu0 %v3804
      %3856 = vmatpush1.msra.mxu0 %v3803
      %3857 = vmatprep.subr.mxu0 %v3806
      %3858 = vmatpush1.msra.mxu0 %v3805
      %3859 = vmatprep.subr.mxu0 %v3808
      %3860 = vmatpush1.msra.mxu0 %v3807
      %3861 = vmatprep.subr.mxu0 %v3810
      %3862 = vmatpush1.msra.mxu0 %v3809
      %3863 = vmatprep.subr.mxu0 %v3812
      %3864 = vmatpush1.msra.mxu0 %v3811
      %3865 = vmatprep.subr.mxu0 %v3814
      %3866 = vmatpush1.msra.mxu0 %v3813
      %3867 = vmatprep.subr.mxu0 %v3816
      %3868 = vmatpush1.msra.mxu0 %v3815
      %3869 = vmatprep.subr.mxu0 %v3818
      %3870 = vmatpush1.msra.mxu0 %v3817
      %3871 = vmatprep.subr.mxu0 %v3820
      %3872 = vmatpush1.msra.mxu0 %v3819
      %3873 = vmatprep.subr.mxu0 %v3822
      %3874 = vmatpush1.msra.mxu0 %v3821
      %3875 = vmatprep.subr.mxu0 %v3824
      %3876 = vmatpush1.msra.mxu0 %v3823
      %3877 = vmatprep.subr.mxu0 %v3826
      %3878 = vmatpush1.msra.mxu0 %v3825
      %3879 = vmatprep.subr.mxu0 %v3828
      %3880 = vmatpush1.msra.mxu0 %v3827
      %3881 = vmatprep.subr.mxu0 %v3830
      %3882 = vmatpush1.msra.mxu0 %v3829
      %3883 = vmatprep.subr.mxu0 %v3832
      %3884 = vmatpush1.msra.mxu0 %v3831
      %3885 = vmatprep.subr.mxu0 %v3834
      %3886 = vmatpush1.msra.mxu0 %v3833
      %3887 = vmatprep.subr.mxu0 0.0
      %3888 = vmatpush1.msra.mxu0 0.0
      %3889 = vmatprep.subr.mxu0 0.0
      %3890 = vmatpush1.msra.mxu0 0.0
      %3891 = vmatprep.subr.mxu0 0.0
      %3892 = vmatpush1.msra.mxu0 0.0
      %3893 = vmatprep.subr.mxu0 0.0
      %3894 = vmatpush1.msra.mxu0 0.0
      %3895 = vmatprep.subr.mxu0 0.0
      %3896 = vmatpush1.msra.mxu0 0.0
      %3897 = vmatprep.subr.mxu0 0.0
      %3898 = vmatpush1.msra.mxu0 0.0
      %3899 = vmatprep.subr.mxu0 0.0
      %3900 = vmatpush1.msra.mxu0 0.0
      %3901 = vmatprep.subr.mxu0 0.0
      %3902 = vmatpush1.msra.mxu0 0.0
      %3903 = vmatprep.subr.mxu0 0.0
      %3904 = vmatpush1.msra.mxu0 0.0
      %3905 = vmatprep.subr.mxu0 0.0
      %3906 = vmatpush1.msra.mxu0 0.0
      %3907 = vmatprep.subr.mxu0 0.0
      %3908 = vmatpush1.msra.mxu0 0.0
      %3909 = vmatprep.subr.mxu0 0.0
      %3910 = vmatpush1.msra.mxu0 0.0
      %3911 = vmatprep.subr.mxu0 0.0
      %3912 = vmatpush1.msra.mxu0 0.0
      %3913 = vmatprep.subr.mxu0 0.0
      %3914 = vmatpush1.msra.mxu0 0.0
      %3915 = vmatprep.mubr.f32.mxu0 %v3849
      %3916 = vmatmul.mubr.f32.gmra.mrb[0].mxu0 %v3797
      %v3917 = vpop.f32.mrb[0].mxu0
      %v3918 = vadd.f32 %v3840, %v3917
      %v3919 = vpop.f32.mrb[0].mxu0
      %v3920 = vadd.f32 %v3844, %v3919
      %3921 = vdwg.mxu0
      %v3922 = vmax.f32 %v3918, 0.0
      %v3923 = vmax.f32 %v3920, 0.0
      %v3924 = vld [vmem:[%s9] sm:$0xff]
      %v3925 = vld [vmem:[%s9 + $0x8] sm:$0xff]
      %v3926 = vld [vmem:[%s9 + $0x10] sm:$0xff]
      %v3927 = vld [vmem:[%s9 + $0x18] sm:$0xff]
      %v3928 = vld [vmem:[%s9 + $0x20] sm:$0xff]
      %v3929 = vld [vmem:[%s9 + $0x28] sm:$0xff]
      %v3930 = vld [vmem:[%s9 + $0x30] sm:$0xff]
      %v3931 = vld [vmem:[%s9 + $0x38] sm:$0xff]
      %v3932 = vld [vmem:[%s9 + $0x40] sm:$0xff]
      %v3933 = vld [vmem:[%s9 + $0x48] sm:$0xff]
      %v3934 = vld [vmem:[%s9 + $0x50] sm:$0xff]
      %v3935 = vld [vmem:[%s9 + $0x58] sm:$0xff]
      %v3936 = vld [vmem:[%s9 + $0x60] sm:$0xff]
      %v3937 = vld [vmem:[%s9 + $0x68] sm:$0xff]
      %v3938 = vld [vmem:[%s9 + $0x70] sm:$0xff]
      %v3939 = vld [vmem:[%s9 + $0x78] sm:$0xff]
      %v3940 = vld [vmem:[%s9 + $0x80] sm:$0xff]
      %v3941 = vld [vmem:[%s9 + $0x88] sm:$0xff]
      %v3942 = vld [vmem:[%s10] sm:$0x1]
      %v3944 = vlaneseq
      %v3945 = vshrl.u32 %v3944, 7
      %v3946 = vsub.s32 0, %v3945
      %v3947 = vrot.slane %v3942, %v3946
      %v3950 = vsel %vm3847, %v3923, 0
      %3952 = vmatprep.subr.mxu0 0.0
      %3953 = vmatpush1.msra.mxu0 %v3924
      %3954 = vmatprep.subr.mxu0 0.0
      %3955 = vmatpush1.msra.mxu0 %v3925
      %3956 = vmatprep.subr.mxu0 0.0
      %3957 = vmatpush1.msra.mxu0 %v3926
      %3958 = vmatprep.subr.mxu0 0.0
      %3959 = vmatpush1.msra.mxu0 %v3927
      %3960 = vmatprep.subr.mxu0 0.0
      %3961 = vmatpush1.msra.mxu0 %v3928
      %3962 = vmatprep.subr.mxu0 0.0
      %3963 = vmatpush1.msra.mxu0 %v3929
      %3964 = vmatprep.subr.mxu0 0.0
      %3965 = vmatpush1.msra.mxu0 %v3930
      %3966 = vmatprep.subr.mxu0 0.0
      %3967 = vmatpush1.msra.mxu0 %v3931
      %3968 = vmatprep.subr.mxu0 0.0
      %3969 = vmatpush1.msra.mxu0 %v3932
      %3970 = vmatprep.subr.mxu0 0.0
      %3971 = vmatpush1.msra.mxu0 %v3933
      %3972 = vmatprep.subr.mxu0 0.0
      %3973 = vmatpush1.msra.mxu0 %v3934
      %3974 = vmatprep.subr.mxu0 0.0
      %3975 = vmatpush1.msra.mxu0 %v3935
      %3976 = vmatprep.subr.mxu0 0.0
      %3977 = vmatpush1.msra.mxu0 %v3936
      %3978 = vmatprep.subr.mxu0 0.0
      %3979 = vmatpush1.msra.mxu0 %v3937
      %3980 = vmatprep.subr.mxu0 0.0
      %3981 = vmatpush1.msra.mxu0 %v3938
      %3982 = vmatprep.subr.mxu0 0.0
      %3983 = vmatpush1.msra.mxu0 %v3939
      %3984 = vmatprep.subr.mxu0 0.0
      %3985 = vmatpush1.msra.mxu0 %v3940
      %3986 = vmatprep.subr.mxu0 0.0
      %3987 = vmatpush1.msra.mxu0 %v3941
      %3988 = vmatprep.subr.mxu0 0.0
      %3989 = vmatpush1.msra.mxu0 0.0
      %3990 = vmatprep.subr.mxu0 0.0
      %3991 = vmatpush1.msra.mxu0 0.0
      %3992 = vmatprep.subr.mxu0 0.0
      %3993 = vmatpush1.msra.mxu0 0.0
      %3994 = vmatprep.subr.mxu0 0.0
      %3995 = vmatpush1.msra.mxu0 0.0
      %3996 = vmatprep.subr.mxu0 0.0
      %3997 = vmatpush1.msra.mxu0 0.0
      %3998 = vmatprep.subr.mxu0 0.0
      %3999 = vmatpush1.msra.mxu0 0.0
      %4000 = vmatprep.subr.mxu0 0.0
      %4001 = vmatpush1.msra.mxu0 0.0
      %4002 = vmatprep.subr.mxu0 0.0
      %4003 = vmatpush1.msra.mxu0 0.0
      %4004 = vmatprep.subr.mxu0 0.0
      %4005 = vmatpush1.msra.mxu0 0.0
      %4006 = vmatprep.subr.mxu0 0.0
      %4007 = vmatpush1.msra.mxu0 0.0
      %4008 = vmatprep.subr.mxu0 0.0
      %4009 = vmatpush1.msra.mxu0 0.0
      %4010 = vmatprep.subr.mxu0 0.0
      %4011 = vmatpush1.msra.mxu0 0.0
      %4012 = vmatprep.subr.mxu0 0.0
      %4013 = vmatpush1.msra.mxu0 0.0
      %4014 = vmatprep.subr.mxu0 0.0
      %4015 = vmatpush1.msra.mxu0 0.0
      %4016 = vmatprep.mubr.f32.mxu0 %v3950
      %4017 = vmatmul.mubr.f32.gmra.mrb[0].mxu0 %v3922
      %v4018 = vpop.f32.mrb[0].mxu0
      %v4019 = vadd.f32 %v3947, %v4018
      %v4020 = vpop.f32.mrb[0].mxu0
      %4021 = vdwg.mxu0
      %v4022 = vtanh.pop %v4019
      %v4023 = vlaneseq
      %v4024 = vshrl.u32 %v4023, 7
      %v4025 = vsub.s32 2, %v4024
      %v4026 = vrot.slane %v3244, %v4025
      %v4027 = vmul.f32 %v4022, %v4026
      %v4028 = vlaneseq
      %v4029 = vshrl.u32 %v4028, 7
      %v4030 = vsub.s32 3, %v4029
      %v4031 = vrot.slane %v3244, %v4030
      %v4032 = vadd.f32 %v4027, %v4031
      %v4033 = vmul.f32 %v4032, -1.0
      %v4034 = vld [vmem:[%s11] sm:$0xff]
      %v4035 = vld [vmem:[%s11 + $0x8] sm:$0xff]
      %v4036 = vld [vmem:[%s11 + $0x10] sm:$0xff]
      %v4037 = vld [vmem:[%s11 + $0x18] sm:$0xff]
      %v4038 = vld [vmem:[%s11 + $0x20] sm:$0xff]
      %v4039 = vld [vmem:[%s11 + $0x28] sm:$0xff]
      %v4040 = vld [vmem:[%s11 + $0x30] sm:$0xff]
      %v4041 = vld [vmem:[%s11 + $0x38] sm:$0xff]
      %v4042 = vld [vmem:[%s11 + $0x40] sm:$0xff]
      %v4043 = vld [vmem:[%s11 + $0x48] sm:$0xff]
      %v4044 = vld [vmem:[%s11 + $0x50] sm:$0xff]
      %v4045 = vld [vmem:[%s11 + $0x58] sm:$0xff]
      %v4046 = vld [vmem:[%s11 + $0x60] sm:$0xff]
      %v4047 = vld [vmem:[%s11 + $0x68] sm:$0xff]
      %v4048 = vld [vmem:[%s11 + $0x70] sm:$0xff]
      %v4049 = vld [vmem:[%s11 + $0x78] sm:$0xff]
      %v4050 = vld [vmem:[%s11 + $0x80] sm:$0xff]
      %v4051 = vld [vmem:[%s11 + $0x88] sm:$0xff]
      %v4052 = vld [vmem:[%s11 + $0x90] sm:$0xff]
      %v4053 = vld [vmem:[%s11 + $0x98] sm:$0xff]
      %v4054 = vld [vmem:[%s11 + $0xa0] sm:$0xff]
      %v4055 = vld [vmem:[%s11 + $0xa8] sm:$0xff]
      %v4056 = vld [vmem:[%s11 + $0xb0] sm:$0xff]
      %v4057 = vld [vmem:[%s11 + $0xb8] sm:$0xff]
      %v4058 = vld [vmem:[%s11 + $0xc0] sm:$0xff]
      %v4059 = vld [vmem:[%s11 + $0xc8] sm:$0xff]
      %v4060 = vld [vmem:[%s11 + $0xd0] sm:$0xff]
      %v4061 = vld [vmem:[%s11 + $0xd8] sm:$0xff]
      %v4062 = vld [vmem:[%s11 + $0xe0] sm:$0xff]
      %v4063 = vld [vmem:[%s11 + $0xe8] sm:$0xff]
      %v4064 = vld [vmem:[%s11 + $0xf0] sm:$0xff]
      %v4065 = vld [vmem:[%s11 + $0xf8] sm:$0xff]
      %v4066 = vld [vmem:[%s11 + $0x100] sm:$0xff]
      %v4067 = vld [vmem:[%s11 + $0x108] sm:$0xff]
      %v4068 = vld [vmem:[%s11 + $0x110] sm:$0xff]
      %v4069 = vld [vmem:[%s11 + $0x118] sm:$0xff]
      %v4070 = vld [vmem:[%s11 + $0x120] sm:$0xff]
      %v4071 = vld [vmem:[%s11 + $0x128] sm:$0xff]
      %v4072 = vld [vmem:[%s11 + $0x130] sm:$0xff]
      %v4073 = vld [vmem:[%s11 + $0x138] sm:$0xff]
      %v4074 = vld [vmem:[%s11 + $0x140] sm:$0xff]
      %v4075 = vld [vmem:[%s11 + $0x148] sm:$0xff]
      %v4076 = vld [vmem:[%s11 + $0x150] sm:$0xff]
      %v4077 = vld [vmem:[%s11 + $0x158] sm:$0xff]
      %v4078 = vld [vmem:[%s11 + $0x160] sm:$0xff]
      %v4079 = vld [vmem:[%s11 + $0x168] sm:$0xff]
      %v4080 = vld [vmem:[%s11 + $0x170] sm:$0xff]
      %v4081 = vld [vmem:[%s11 + $0x178] sm:$0xff]
      %v4082 = vld [vmem:[%s11 + $0x180] sm:$0xff]
      %v4083 = vld [vmem:[%s11 + $0x188] sm:$0xff]
      %v4084 = vld [vmem:[%s11 + $0x190] sm:$0xff]
      %v4085 = vld [vmem:[%s11 + $0x198] sm:$0xff]
      %v4086 = vld [vmem:[%s11 + $0x1a0] sm:$0xff]
      %v4087 = vld [vmem:[%s11 + $0x1a8] sm:$0xff]
      %v4088 = vld [vmem:[%s11 + $0x1b0] sm:$0xff]
      %v4089 = vld [vmem:[%s11 + $0x1b8] sm:$0xff]
      %v4090 = vld [vmem:[%s11 + $0x1c0] sm:$0xff]
      %v4091 = vld [vmem:[%s11 + $0x1c8] sm:$0xff]
      %v4092 = vld [vmem:[%s11 + $0x1d0] sm:$0xff]
      %v4093 = vld [vmem:[%s11 + $0x1d8] sm:$0xff]
      %v4094 = vld [vmem:[%s11 + $0x1e0] sm:$0xff]
      %v4095 = vld [vmem:[%s11 + $0x1e8] sm:$0xff]
      %v4096 = vld [vmem:[%s11 + $0x1f0] sm:$0xff]
      %v4097 = vld [vmem:[%s11 + $0x1f8] sm:$0xff]
      %v4098 = vld [vmem:[%s11 + $0x200] sm:$0xff]
      %v4099 = vld [vmem:[%s11 + $0x208] sm:$0xff]
      %v4100 = vld [vmem:[%s11 + $0x210] sm:$0xff]
      %v4101 = vld [vmem:[%s11 + $0x218] sm:$0xff]
      %v4102 = vld [vmem:[%s11 + $0x220] sm:$0xff]
      %v4103 = vld [vmem:[%s11 + $0x228] sm:$0xff]
      %v4104 = vld [vmem:[%s11 + $0x230] sm:$0xff]
      %v4105 = vld [vmem:[%s11 + $0x238] sm:$0xff]
      %v4106 = vld [vmem:[%s11 + $0x240] sm:$0xff]
      %v4107 = vld [vmem:[%s11 + $0x248] sm:$0xff]
      %v4108 = vld [vmem:[%s11 + $0x250] sm:$0xff]
      %v4109 = vld [vmem:[%s11 + $0x258] sm:$0xff]
      %v4110 = vld [vmem:[%s11 + $0x260] sm:$0xff]
      %v4111 = vld [vmem:[%s11 + $0x268] sm:$0xff]
      %v4112 = vld [vmem:[%s11 + $0x270] sm:$0xff]
      %v4113 = vld [vmem:[%s11 + $0x278] sm:$0xff]
      %v4114 = vld [vmem:[%s11 + $0x280] sm:$0xff]
      %v4115 = vld [vmem:[%s11 + $0x288] sm:$0xff]
      %v4116 = vld [vmem:[%s11 + $0x290] sm:$0xff]
      %v4117 = vld [vmem:[%s11 + $0x298] sm:$0xff]
      %v4118 = vld [vmem:[%s11 + $0x2a0] sm:$0xff]
      %v4119 = vld [vmem:[%s11 + $0x2a8] sm:$0xff]
      %v4120 = vld [vmem:[%s11 + $0x2b0] sm:$0xff]
      %v4121 = vld [vmem:[%s11 + $0x2b8] sm:$0xff]
      %v4122 = vld [vmem:[%s11 + $0x2c0] sm:$0xff]
      %v4123 = vld [vmem:[%s11 + $0x2c8] sm:$0xff]
      %v4124 = vld [vmem:[%s11 + $0x2d0] sm:$0xff]
      %v4125 = vld [vmem:[%s11 + $0x2d8] sm:$0xff]
      %v4126 = vld [vmem:[%s11 + $0x2e0] sm:$0xff]
      %v4127 = vld [vmem:[%s11 + $0x2e8] sm:$0xff]
      %v4128 = vld [vmem:[%s11 + $0x2f0] sm:$0xff]
      %v4129 = vld [vmem:[%s11 + $0x2f8] sm:$0xff]
      %v4130 = vld [vmem:[%s11 + $0x300] sm:$0xff]
      %v4131 = vld [vmem:[%s11 + $0x308] sm:$0xff]
      %v4132 = vld [vmem:[%s11 + $0x310] sm:$0xff]
      %v4133 = vld [vmem:[%s11 + $0x318] sm:$0xff]
      %v4134 = vld [vmem:[%s11 + $0x320] sm:$0xff]
      %v4135 = vld [vmem:[%s11 + $0x328] sm:$0xff]
      %v4136 = vld [vmem:[%s11 + $0x330] sm:$0xff]
      %v4137 = vld [vmem:[%s11 + $0x338] sm:$0xff]
      %v4138 = vld [vmem:[%s11 + $0x340] sm:$0xff]
      %v4139 = vld [vmem:[%s11 + $0x348] sm:$0xff]
      %v4140 = vld [vmem:[%s11 + $0x350] sm:$0xff]
      %v4141 = vld [vmem:[%s11 + $0x358] sm:$0xff]
      %v4142 = vld [vmem:[%s11 + $0x360] sm:$0xff]
      %v4143 = vld [vmem:[%s11 + $0x368] sm:$0xff]
      %v4144 = vld [vmem:[%s11 + $0x370] sm:$0xff]
      %v4145 = vld [vmem:[%s11 + $0x378] sm:$0xff]
      %v4146 = vld [vmem:[%s11 + $0x380] sm:$0xff]
      %v4147 = vld [vmem:[%s11 + $0x388] sm:$0xff]
      %v4148 = vld [vmem:[%s11 + $0x390] sm:$0xff]
      %v4149 = vld [vmem:[%s11 + $0x398] sm:$0xff]
      %v4150 = vld [vmem:[%s11 + $0x3a0] sm:$0xff]
      %v4151 = vld [vmem:[%s11 + $0x3a8] sm:$0xff]
      %v4152 = vld [vmem:[%s11 + $0x3b0] sm:$0xff]
      %v4153 = vld [vmem:[%s11 + $0x3b8] sm:$0xff]
      %v4154 = vld [vmem:[%s11 + $0x3c0] sm:$0xff]
      %v4155 = vld [vmem:[%s11 + $0x3c8] sm:$0xff]
      %v4156 = vld [vmem:[%s11 + $0x3d0] sm:$0xff]
      %v4157 = vld [vmem:[%s11 + $0x3d8] sm:$0xff]
      %v4158 = vld [vmem:[%s11 + $0x3e0] sm:$0xff]
      %v4159 = vld [vmem:[%s11 + $0x3e8] sm:$0xff]
      %v4160 = vld [vmem:[%s11 + $0x3f0] sm:$0xff]
      %v4161 = vld [vmem:[%s11 + $0x3f8] sm:$0xff]
      %v4162 = vld [vmem:[%s11 + $0x400] sm:$0xff]
      %v4163 = vld [vmem:[%s11 + $0x408] sm:$0xff]
      %v4164 = vld [vmem:[%s11 + $0x410] sm:$0xff]
      %v4165 = vld [vmem:[%s11 + $0x418] sm:$0xff]
      %v4166 = vld [vmem:[%s11 + $0x420] sm:$0xff]
      %v4167 = vld [vmem:[%s11 + $0x428] sm:$0xff]
      %v4168 = vld [vmem:[%s11 + $0x430] sm:$0xff]
      %v4169 = vld [vmem:[%s11 + $0x438] sm:$0xff]
      %v4170 = vld [vmem:[%s11 + $0x440] sm:$0xff]
      %v4171 = vld [vmem:[%s11 + $0x448] sm:$0xff]
      %v4172 = vld [vmem:[%s11 + $0x450] sm:$0xff]
      %v4173 = vld [vmem:[%s11 + $0x458] sm:$0xff]
      %v4174 = vld [vmem:[%s11 + $0x460] sm:$0xff]
      %v4175 = vld [vmem:[%s11 + $0x468] sm:$0xff]
      %v4176 = vld [vmem:[%s11 + $0x470] sm:$0xff]
      %v4177 = vld [vmem:[%s11 + $0x478] sm:$0xff]
      %v4178 = vld [vmem:[%s11 + $0x480] sm:$0xff]
      %v4179 = vld [vmem:[%s11 + $0x488] sm:$0xff]
      %v4180 = vld [vmem:[%s11 + $0x490] sm:$0xff]
      %v4181 = vld [vmem:[%s11 + $0x498] sm:$0xff]
      %v4182 = vld [vmem:[%s11 + $0x4a0] sm:$0xff]
      %v4183 = vld [vmem:[%s11 + $0x4a8] sm:$0xff]
      %v4184 = vld [vmem:[%s11 + $0x4b0] sm:$0xff]
      %v4185 = vld [vmem:[%s11 + $0x4b8] sm:$0xff]
      %v4186 = vld [vmem:[%s11 + $0x4c0] sm:$0xff]
      %v4187 = vld [vmem:[%s11 + $0x4c8] sm:$0xff]
      %v4188 = vld [vmem:[%s11 + $0x4d0] sm:$0xff]
      %v4189 = vld [vmem:[%s11 + $0x4d8] sm:$0xff]
      %v4190 = vld [vmem:[%s11 + $0x4e0] sm:$0xff]
      %v4191 = vld [vmem:[%s11 + $0x4e8] sm:$0xff]
      %v4192 = vld [vmem:[%s11 + $0x4f0] sm:$0xff]
      %v4193 = vld [vmem:[%s11 + $0x4f8] sm:$0xff]
      %v4194 = vld [vmem:[%s11 + $0x500] sm:$0xff]
      %v4195 = vld [vmem:[%s11 + $0x508] sm:$0xff]
      %v4196 = vld [vmem:[%s11 + $0x510] sm:$0xff]
      %v4197 = vld [vmem:[%s11 + $0x518] sm:$0xff]
      %v4198 = vld [vmem:[%s11 + $0x520] sm:$0xff]
      %v4199 = vld [vmem:[%s11 + $0x528] sm:$0xff]
      %v4200 = vld [vmem:[%s11 + $0x530] sm:$0xff]
      %v4201 = vld [vmem:[%s11 + $0x538] sm:$0xff]
      %v4202 = vld [vmem:[%s11 + $0x540] sm:$0xff]
      %v4203 = vld [vmem:[%s11 + $0x548] sm:$0xff]
      %v4204 = vld [vmem:[%s11 + $0x550] sm:$0xff]
      %v4205 = vld [vmem:[%s11 + $0x558] sm:$0xff]
      %v4206 = vld [vmem:[%s11 + $0x560] sm:$0xff]
      %v4207 = vld [vmem:[%s11 + $0x568] sm:$0xff]
      %v4208 = vld [vmem:[%s11 + $0x570] sm:$0xff]
      %v4209 = vld [vmem:[%s11 + $0x578] sm:$0xff]
      %v4210 = vld [vmem:[%s11 + $0x580] sm:$0xff]
      %v4211 = vld [vmem:[%s11 + $0x588] sm:$0xff]
      %v4212 = vld [vmem:[%s11 + $0x590] sm:$0xff]
      %v4213 = vld [vmem:[%s11 + $0x598] sm:$0xff]
      %v4214 = vld [vmem:[%s11 + $0x5a0] sm:$0xff]
      %v4215 = vld [vmem:[%s11 + $0x5a8] sm:$0xff]
      %v4216 = vld [vmem:[%s11 + $0x5b0] sm:$0xff]
      %v4217 = vld [vmem:[%s11 + $0x5b8] sm:$0xff]
      %v4218 = vld [vmem:[%s11 + $0x5c0] sm:$0xff]
      %v4219 = vld [vmem:[%s11 + $0x5c8] sm:$0xff]
      %v4220 = vld [vmem:[%s11 + $0x5d0] sm:$0xff]
      %v4221 = vld [vmem:[%s11 + $0x5d8] sm:$0xff]
      %v4222 = vld [vmem:[%s11 + $0x5e0] sm:$0xff]
      %v4223 = vld [vmem:[%s11 + $0x5e8] sm:$0xff]
      %v4224 = vld [vmem:[%s11 + $0x5f0] sm:$0xff]
      %v4225 = vld [vmem:[%s11 + $0x5f8] sm:$0xff]
      %v4226 = vld [vmem:[%s11 + $0x600] sm:$0xff]
      %v4227 = vld [vmem:[%s11 + $0x608] sm:$0xff]
      %v4228 = vld [vmem:[%s11 + $0x610] sm:$0xff]
      %v4229 = vld [vmem:[%s11 + $0x618] sm:$0xff]
      %v4230 = vld [vmem:[%s11 + $0x620] sm:$0xff]
      %v4231 = vld [vmem:[%s11 + $0x628] sm:$0xff]
      %v4232 = vld [vmem:[%s11 + $0x630] sm:$0xff]
      %v4233 = vld [vmem:[%s11 + $0x638] sm:$0xff]
      %v4234 = vld [vmem:[%s11 + $0x640] sm:$0xff]
      %v4235 = vld [vmem:[%s11 + $0x648] sm:$0xff]
      %v4236 = vld [vmem:[%s11 + $0x650] sm:$0xff]
      %v4237 = vld [vmem:[%s11 + $0x658] sm:$0xff]
      %v4238 = vld [vmem:[%s11 + $0x660] sm:$0xff]
      %v4239 = vld [vmem:[%s11 + $0x668] sm:$0xff]
      %v4240 = vld [vmem:[%s11 + $0x670] sm:$0xff]
      %v4241 = vld [vmem:[%s11 + $0x678] sm:$0xff]
      %v4242 = vld [vmem:[%s11 + $0x680] sm:$0xff]
      %v4243 = vld [vmem:[%s11 + $0x688] sm:$0xff]
      %v4244 = vld [vmem:[%s11 + $0x690] sm:$0xff]
      %v4245 = vld [vmem:[%s11 + $0x698] sm:$0xff]
      %v4246 = vld [vmem:[%s11 + $0x6a0] sm:$0xff]
      %v4247 = vld [vmem:[%s11 + $0x6a8] sm:$0xff]
      %v4248 = vld [vmem:[%s11 + $0x6b0] sm:$0xff]
      %v4249 = vld [vmem:[%s11 + $0x6b8] sm:$0xff]
      %v4250 = vld [vmem:[%s11 + $0x6c0] sm:$0xff]
      %v4251 = vld [vmem:[%s11 + $0x6c8] sm:$0xff]
      %v4252 = vld [vmem:[%s11 + $0x6d0] sm:$0xff]
      %v4253 = vld [vmem:[%s11 + $0x6d8] sm:$0xff]
      %v4254 = vld [vmem:[%s11 + $0x6e0] sm:$0xff]
      %v4255 = vld [vmem:[%s11 + $0x6e8] sm:$0xff]
      %v4256 = vld [vmem:[%s11 + $0x6f0] sm:$0xff]
      %v4257 = vld [vmem:[%s11 + $0x6f8] sm:$0xff]
      %v4258 = vld [vmem:[%s11 + $0x700] sm:$0xff]
      %v4259 = vld [vmem:[%s11 + $0x708] sm:$0xff]
      %v4260 = vld [vmem:[%s11 + $0x710] sm:$0xff]
      %v4261 = vld [vmem:[%s11 + $0x718] sm:$0xff]
      %v4262 = vld [vmem:[%s11 + $0x720] sm:$0xff]
      %v4263 = vld [vmem:[%s11 + $0x728] sm:$0xff]
      %v4264 = vld [vmem:[%s11 + $0x730] sm:$0xff]
      %v4265 = vld [vmem:[%s11 + $0x738] sm:$0xff]
      %v4266 = vld [vmem:[%s11 + $0x740] sm:$0xff]
      %v4267 = vld [vmem:[%s11 + $0x748] sm:$0xff]
      %v4268 = vld [vmem:[%s11 + $0x750] sm:$0xff]
      %v4269 = vld [vmem:[%s11 + $0x758] sm:$0xff]
      %v4270 = vld [vmem:[%s11 + $0x760] sm:$0xff]
      %v4271 = vld [vmem:[%s11 + $0x768] sm:$0xff]
      %v4272 = vld [vmem:[%s11 + $0x770] sm:$0xff]
      %v4273 = vld [vmem:[%s11 + $0x778] sm:$0xff]
      %v4274 = vld [vmem:[%s11 + $0x780] sm:$0xff]
      %v4275 = vld [vmem:[%s11 + $0x788] sm:$0xff]
      %v4276 = vld [vmem:[%s11 + $0x790] sm:$0xff]
      %v4277 = vld [vmem:[%s11 + $0x798] sm:$0xff]
      %v4278 = vld [vmem:[%s11 + $0x7a0] sm:$0xff]
      %v4279 = vld [vmem:[%s11 + $0x7a8] sm:$0xff]
      %v4280 = vld [vmem:[%s11 + $0x7b0] sm:$0xff]
      %v4281 = vld [vmem:[%s11 + $0x7b8] sm:$0xff]
      %v4282 = vld [vmem:[%s11 + $0x7c0] sm:$0xff]
      %v4283 = vld [vmem:[%s11 + $0x7c8] sm:$0xff]
      %v4284 = vld [vmem:[%s11 + $0x7d0] sm:$0xff]
      %v4285 = vld [vmem:[%s11 + $0x7d8] sm:$0xff]
      %v4286 = vld [vmem:[%s11 + $0x7e0] sm:$0xff]
      %v4287 = vld [vmem:[%s11 + $0x7e8] sm:$0xff]
      %v4288 = vld [vmem:[%s11 + $0x7f0] sm:$0xff]
      %v4289 = vld [vmem:[%s11 + $0x7f8] sm:$0xff]
      %v4290 = vld [vmem:[%s12] sm:$0x3]
      %v4292 = vlaneseq
      %v4293 = vshrl.u32 %v4292, 7
      %v4294 = vsub.s32 0, %v4293
      %v4295 = vrot.slane %v4290, %v4294
      %v4296 = vlaneseq
      %v4297 = vshrl.u32 %v4296, 7
      %v4298 = vsub.s32 1, %v4297
      %v4299 = vrot.slane %v4290, %v4298
      %4302 = vmatprep.subr.mxu0 %v4035
      %4303 = vmatpush1.msra.mxu0 %v4034
      %4304 = vmatprep.subr.mxu0 %v4037
      %4305 = vmatpush1.msra.mxu0 %v4036
      %4306 = vmatprep.subr.mxu0 %v4039
      %4307 = vmatpush1.msra.mxu0 %v4038
      %4308 = vmatprep.subr.mxu0 %v4041
      %4309 = vmatpush1.msra.mxu0 %v4040
      %4310 = vmatprep.subr.mxu0 %v4043
      %4311 = vmatpush1.msra.mxu0 %v4042
      %4312 = vmatprep.subr.mxu0 %v4045
      %4313 = vmatpush1.msra.mxu0 %v4044
      %4314 = vmatprep.subr.mxu0 %v4047
      %4315 = vmatpush1.msra.mxu0 %v4046
      %4316 = vmatprep.subr.mxu0 %v4049
      %4317 = vmatpush1.msra.mxu0 %v4048
      %4318 = vmatprep.subr.mxu0 %v4051
      %4319 = vmatpush1.msra.mxu0 %v4050
      %4320 = vmatprep.subr.mxu0 %v4053
      %4321 = vmatpush1.msra.mxu0 %v4052
      %4322 = vmatprep.subr.mxu0 %v4055
      %4323 = vmatpush1.msra.mxu0 %v4054
      %4324 = vmatprep.subr.mxu0 %v4057
      %4325 = vmatpush1.msra.mxu0 %v4056
      %4326 = vmatprep.subr.mxu0 %v4059
      %4327 = vmatpush1.msra.mxu0 %v4058
      %4328 = vmatprep.subr.mxu0 %v4061
      %4329 = vmatpush1.msra.mxu0 %v4060
      %4330 = vmatprep.subr.mxu0 %v4063
      %4331 = vmatpush1.msra.mxu0 %v4062
      %4332 = vmatprep.subr.mxu0 %v4065
      %4333 = vmatpush1.msra.mxu0 %v4064
      %4334 = vmatprep.subr.mxu0 %v4067
      %4335 = vmatpush1.msra.mxu0 %v4066
      %4336 = vmatprep.subr.mxu0 %v4069
      %4337 = vmatpush1.msra.mxu0 %v4068
      %4338 = vmatprep.subr.mxu0 %v4071
      %4339 = vmatpush1.msra.mxu0 %v4070
      %4340 = vmatprep.subr.mxu0 %v4073
      %4341 = vmatpush1.msra.mxu0 %v4072
      %4342 = vmatprep.subr.mxu0 %v4075
      %4343 = vmatpush1.msra.mxu0 %v4074
      %4344 = vmatprep.subr.mxu0 %v4077
      %4345 = vmatpush1.msra.mxu0 %v4076
      %4346 = vmatprep.subr.mxu0 %v4079
      %4347 = vmatpush1.msra.mxu0 %v4078
      %4348 = vmatprep.subr.mxu0 %v4081
      %4349 = vmatpush1.msra.mxu0 %v4080
      %4350 = vmatprep.subr.mxu0 %v4083
      %4351 = vmatpush1.msra.mxu0 %v4082
      %4352 = vmatprep.subr.mxu0 %v4085
      %4353 = vmatpush1.msra.mxu0 %v4084
      %4354 = vmatprep.subr.mxu0 %v4087
      %4355 = vmatpush1.msra.mxu0 %v4086
      %4356 = vmatprep.subr.mxu0 %v4089
      %4357 = vmatpush1.msra.mxu0 %v4088
      %4358 = vmatprep.subr.mxu0 %v4091
      %4359 = vmatpush1.msra.mxu0 %v4090
      %4360 = vmatprep.subr.mxu0 %v4093
      %4361 = vmatpush1.msra.mxu0 %v4092
      %4362 = vmatprep.subr.mxu0 %v4095
      %4363 = vmatpush1.msra.mxu0 %v4094
      %4364 = vmatprep.subr.mxu0 %v4097
      %4365 = vmatpush1.msra.mxu0 %v4096
      %4366 = vmatprep.mubr.f32.mxu0 %v3237
      %4367 = vmatmul.mubr.f32.gmra.mrb[0].mxu0 %v3236
      %v4368 = vpop.f32.mrb[0].mxu0
      %v4369 = vadd.f32 %v4295, %v4368
      %v4370 = vpop.f32.mrb[0].mxu0
      %v4371 = vadd.f32 %v4299, %v4370
      %4372 = vdwg.mxu0
      %4373 = vmatprep.subr.mxu0 %v4099
      %4374 = vmatpush1.msra.mxu0 %v4098
      %4375 = vmatprep.subr.mxu0 %v4101
      %4376 = vmatpush1.msra.mxu0 %v4100
      %4377 = vmatprep.subr.mxu0 %v4103
      %4378 = vmatpush1.msra.mxu0 %v4102
      %4379 = vmatprep.subr.mxu0 %v4105
      %4380 = vmatpush1.msra.mxu0 %v4104
      %4381 = vmatprep.subr.mxu0 %v4107
      %4382 = vmatpush1.msra.mxu0 %v4106
      %4383 = vmatprep.subr.mxu0 %v4109
      %4384 = vmatpush1.msra.mxu0 %v4108
      %4385 = vmatprep.subr.mxu0 %v4111
      %4386 = vmatpush1.msra.mxu0 %v4110
      %4387 = vmatprep.subr.mxu0 %v4113
      %4388 = vmatpush1.msra.mxu0 %v4112
      %4389 = vmatprep.subr.mxu0 %v4115
      %4390 = vmatpush1.msra.mxu0 %v4114
      %4391 = vmatprep.subr.mxu0 %v4117
      %4392 = vmatpush1.msra.mxu0 %v4116
      %4393 = vmatprep.subr.mxu0 %v4119
      %4394 = vmatpush1.msra.mxu0 %v4118
      %4395 = vmatprep.subr.mxu0 %v4121
      %4396 = vmatpush1.msra.mxu0 %v4120
      %4397 = vmatprep.subr.mxu0 %v4123
      %4398 = vmatpush1.msra.mxu0 %v4122
      %4399 = vmatprep.subr.mxu0 %v4125
      %4400 = vmatpush1.msra.mxu0 %v4124
      %4401 = vmatprep.subr.mxu0 %v4127
      %4402 = vmatpush1.msra.mxu0 %v4126
      %4403 = vmatprep.subr.mxu0 %v4129
      %4404 = vmatpush1.msra.mxu0 %v4128
      %4405 = vmatprep.subr.mxu0 %v4131
      %4406 = vmatpush1.msra.mxu0 %v4130
      %4407 = vmatprep.subr.mxu0 %v4133
      %4408 = vmatpush1.msra.mxu0 %v4132
      %4409 = vmatprep.subr.mxu0 %v4135
      %4410 = vmatpush1.msra.mxu0 %v4134
      %4411 = vmatprep.subr.mxu0 %v4137
      %4412 = vmatpush1.msra.mxu0 %v4136
      %4413 = vmatprep.subr.mxu0 %v4139
      %4414 = vmatpush1.msra.mxu0 %v4138
      %4415 = vmatprep.subr.mxu0 %v4141
      %4416 = vmatpush1.msra.mxu0 %v4140
      %4417 = vmatprep.subr.mxu0 %v4143
      %4418 = vmatpush1.msra.mxu0 %v4142
      %4419 = vmatprep.subr.mxu0 %v4145
      %4420 = vmatpush1.msra.mxu0 %v4144
      %4421 = vmatprep.subr.mxu0 %v4147
      %4422 = vmatpush1.msra.mxu0 %v4146
      %4423 = vmatprep.subr.mxu0 %v4149
      %4424 = vmatpush1.msra.mxu0 %v4148
      %4425 = vmatprep.subr.mxu0 %v4151
      %4426 = vmatpush1.msra.mxu0 %v4150
      %4427 = vmatprep.subr.mxu0 %v4153
      %4428 = vmatpush1.msra.mxu0 %v4152
      %4429 = vmatprep.subr.mxu0 %v4155
      %4430 = vmatpush1.msra.mxu0 %v4154
      %4431 = vmatprep.subr.mxu0 %v4157
      %4432 = vmatpush1.msra.mxu0 %v4156
      %4433 = vmatprep.subr.mxu0 %v4159
      %4434 = vmatpush1.msra.mxu0 %v4158
      %4435 = vmatprep.subr.mxu0 %v4161
      %4436 = vmatpush1.msra.mxu0 %v4160
      %4437 = vmatprep.mubr.f32.mxu0 %v3239
      %4438 = vmatmul.mubr.f32.gmra.mrb[0].mxu0 %v3238
      %v4439 = vpop.f32.mrb[0].mxu0
      %v4440 = vadd.f32 %v4369, %v4439
      %v4441 = vpop.f32.mrb[0].mxu0
      %v4442 = vadd.f32 %v4371, %v4441
      %4443 = vdwg.mxu0
      %4444 = vmatprep.subr.mxu0 %v4163
      %4445 = vmatpush1.msra.mxu0 %v4162
      %4446 = vmatprep.subr.mxu0 %v4165
      %4447 = vmatpush1.msra.mxu0 %v4164
      %4448 = vmatprep.subr.mxu0 %v4167
      %4449 = vmatpush1.msra.mxu0 %v4166
      %4450 = vmatprep.subr.mxu0 %v4169
      %4451 = vmatpush1.msra.mxu0 %v4168
      %4452 = vmatprep.subr.mxu0 %v4171
      %4453 = vmatpush1.msra.mxu0 %v4170
      %4454 = vmatprep.subr.mxu0 %v4173
      %4455 = vmatpush1.msra.mxu0 %v4172
      %4456 = vmatprep.subr.mxu0 %v4175
      %4457 = vmatpush1.msra.mxu0 %v4174
      %4458 = vmatprep.subr.mxu0 %v4177
      %4459 = vmatpush1.msra.mxu0 %v4176
      %4460 = vmatprep.subr.mxu0 %v4179
      %4461 = vmatpush1.msra.mxu0 %v4178
      %4462 = vmatprep.subr.mxu0 %v4181
      %4463 = vmatpush1.msra.mxu0 %v4180
      %4464 = vmatprep.subr.mxu0 %v4183
      %4465 = vmatpush1.msra.mxu0 %v4182
      %4466 = vmatprep.subr.mxu0 %v4185
      %4467 = vmatpush1.msra.mxu0 %v4184
      %4468 = vmatprep.subr.mxu0 %v4187
      %4469 = vmatpush1.msra.mxu0 %v4186
      %4470 = vmatprep.subr.mxu0 %v4189
      %4471 = vmatpush1.msra.mxu0 %v4188
      %4472 = vmatprep.subr.mxu0 %v4191
      %4473 = vmatpush1.msra.mxu0 %v4190
      %4474 = vmatprep.subr.mxu0 %v4193
      %4475 = vmatpush1.msra.mxu0 %v4192
      %4476 = vmatprep.subr.mxu0 %v4195
      %4477 = vmatpush1.msra.mxu0 %v4194
      %4478 = vmatprep.subr.mxu0 %v4197
      %4479 = vmatpush1.msra.mxu0 %v4196
      %4480 = vmatprep.subr.mxu0 %v4199
      %4481 = vmatpush1.msra.mxu0 %v4198
      %4482 = vmatprep.subr.mxu0 %v4201
      %4483 = vmatpush1.msra.mxu0 %v4200
      %4484 = vmatprep.subr.mxu0 %v4203
      %4485 = vmatpush1.msra.mxu0 %v4202
      %4486 = vmatprep.subr.mxu0 %v4205
      %4487 = vmatpush1.msra.mxu0 %v4204
      %4488 = vmatprep.subr.mxu0 %v4207
      %4489 = vmatpush1.msra.mxu0 %v4206
      %4490 = vmatprep.subr.mxu0 %v4209
      %4491 = vmatpush1.msra.mxu0 %v4208
      %4492 = vmatprep.subr.mxu0 %v4211
      %4493 = vmatpush1.msra.mxu0 %v4210
      %4494 = vmatprep.subr.mxu0 %v4213
      %4495 = vmatpush1.msra.mxu0 %v4212
      %4496 = vmatprep.subr.mxu0 %v4215
      %4497 = vmatpush1.msra.mxu0 %v4214
      %4498 = vmatprep.subr.mxu0 %v4217
      %4499 = vmatpush1.msra.mxu0 %v4216
      %4500 = vmatprep.subr.mxu0 %v4219
      %4501 = vmatpush1.msra.mxu0 %v4218
      %4502 = vmatprep.subr.mxu0 %v4221
      %4503 = vmatpush1.msra.mxu0 %v4220
      %4504 = vmatprep.subr.mxu0 %v4223
      %4505 = vmatpush1.msra.mxu0 %v4222
      %4506 = vmatprep.subr.mxu0 %v4225
      %4507 = vmatpush1.msra.mxu0 %v4224
      %4508 = vmatprep.mubr.f32.mxu0 %v3241
      %4509 = vmatmul.mubr.f32.gmra.mrb[0].mxu0 %v3240
      %v4510 = vpop.f32.mrb[0].mxu0
      %v4511 = vadd.f32 %v4440, %v4510
      %v4512 = vpop.f32.mrb[0].mxu0
      %v4513 = vadd.f32 %v4442, %v4512
      %4514 = vdwg.mxu0
      %4515 = vmatprep.subr.mxu0 %v4227
      %4516 = vmatpush1.msra.mxu0 %v4226
      %4517 = vmatprep.subr.mxu0 %v4229
      %4518 = vmatpush1.msra.mxu0 %v4228
      %4519 = vmatprep.subr.mxu0 %v4231
      %4520 = vmatpush1.msra.mxu0 %v4230
      %4521 = vmatprep.subr.mxu0 %v4233
      %4522 = vmatpush1.msra.mxu0 %v4232
      %4523 = vmatprep.subr.mxu0 %v4235
      %4524 = vmatpush1.msra.mxu0 %v4234
      %4525 = vmatprep.subr.mxu0 %v4237
      %4526 = vmatpush1.msra.mxu0 %v4236
      %4527 = vmatprep.subr.mxu0 %v4239
      %4528 = vmatpush1.msra.mxu0 %v4238
      %4529 = vmatprep.subr.mxu0 %v4241
      %4530 = vmatpush1.msra.mxu0 %v4240
      %4531 = vmatprep.subr.mxu0 %v4243
      %4532 = vmatpush1.msra.mxu0 %v4242
      %4533 = vmatprep.subr.mxu0 %v4245
      %4534 = vmatpush1.msra.mxu0 %v4244
      %4535 = vmatprep.subr.mxu0 %v4247
      %4536 = vmatpush1.msra.mxu0 %v4246
      %4537 = vmatprep.subr.mxu0 %v4249
      %4538 = vmatpush1.msra.mxu0 %v4248
      %4539 = vmatprep.subr.mxu0 %v4251
      %4540 = vmatpush1.msra.mxu0 %v4250
      %4541 = vmatprep.subr.mxu0 %v4253
      %4542 = vmatpush1.msra.mxu0 %v4252
      %4543 = vmatprep.subr.mxu0 %v4255
      %4544 = vmatpush1.msra.mxu0 %v4254
      %4545 = vmatprep.subr.mxu0 %v4257
      %4546 = vmatpush1.msra.mxu0 %v4256
      %4547 = vmatprep.subr.mxu0 %v4259
      %4548 = vmatpush1.msra.mxu0 %v4258
      %4549 = vmatprep.subr.mxu0 %v4261
      %4550 = vmatpush1.msra.mxu0 %v4260
      %4551 = vmatprep.subr.mxu0 %v4263
      %4552 = vmatpush1.msra.mxu0 %v4262
      %4553 = vmatprep.subr.mxu0 %v4265
      %4554 = vmatpush1.msra.mxu0 %v4264
      %4555 = vmatprep.subr.mxu0 %v4267
      %4556 = vmatpush1.msra.mxu0 %v4266
      %4557 = vmatprep.subr.mxu0 %v4269
      %4558 = vmatpush1.msra.mxu0 %v4268
      %4559 = vmatprep.subr.mxu0 %v4271
      %4560 = vmatpush1.msra.mxu0 %v4270
      %4561 = vmatprep.subr.mxu0 %v4273
      %4562 = vmatpush1.msra.mxu0 %v4272
      %4563 = vmatprep.subr.mxu0 %v4275
      %4564 = vmatpush1.msra.mxu0 %v4274
      %4565 = vmatprep.subr.mxu0 %v4277
      %4566 = vmatpush1.msra.mxu0 %v4276
      %4567 = vmatprep.subr.mxu0 %v4279
      %4568 = vmatpush1.msra.mxu0 %v4278
      %4569 = vmatprep.subr.mxu0 %v4281
      %4570 = vmatpush1.msra.mxu0 %v4280
      %4571 = vmatprep.subr.mxu0 %v4283
      %4572 = vmatpush1.msra.mxu0 %v4282
      %4573 = vmatprep.subr.mxu0 %v4285
      %4574 = vmatpush1.msra.mxu0 %v4284
      %4575 = vmatprep.subr.mxu0 %v4287
      %4576 = vmatpush1.msra.mxu0 %v4286
      %4577 = vmatprep.subr.mxu0 %v4289
      %4578 = vmatpush1.msra.mxu0 %v4288
      %4579 = vmatprep.mubr.f32.mxu0 %v3243
      %4580 = vmatmul.mubr.f32.gmra.mrb[0].mxu0 %v3242
      %v4581 = vpop.f32.mrb[0].mxu0
      %v4582 = vadd.f32 %v4511, %v4581
      %v4583 = vpop.f32.mrb[0].mxu0
      %v4584 = vadd.f32 %v4513, %v4583
      %4585 = vdwg.mxu0
      %v4586 = vmax.f32 %v4582, 0.0
      %v4587 = vmax.f32 %v4584, 0.0
      %v4588 = vld [vmem:[%s13] sm:$0xff]
      %v4589 = vld [vmem:[%s13 + $0x8] sm:$0xff]
      %v4590 = vld [vmem:[%s13 + $0x10] sm:$0xff]
      %v4591 = vld [vmem:[%s13 + $0x18] sm:$0xff]
      %v4592 = vld [vmem:[%s13 + $0x20] sm:$0xff]
      %v4593 = vld [vmem:[%s13 + $0x28] sm:$0xff]
      %v4594 = vld [vmem:[%s13 + $0x30] sm:$0xff]
      %v4595 = vld [vmem:[%s13 + $0x38] sm:$0xff]
      %v4596 = vld [vmem:[%s13 + $0x40] sm:$0xff]
      %v4597 = vld [vmem:[%s13 + $0x48] sm:$0xff]
      %v4598 = vld [vmem:[%s13 + $0x50] sm:$0xff]
      %v4599 = vld [vmem:[%s13 + $0x58] sm:$0xff]
      %v4600 = vld [vmem:[%s13 + $0x60] sm:$0xff]
      %v4601 = vld [vmem:[%s13 + $0x68] sm:$0xff]
      %v4602 = vld [vmem:[%s13 + $0x70] sm:$0xff]
      %v4603 = vld [vmem:[%s13 + $0x78] sm:$0xff]
      %v4604 = vld [vmem:[%s13 + $0x80] sm:$0xff]
      %v4605 = vld [vmem:[%s13 + $0x88] sm:$0xff]
      %v4606 = vld [vmem:[%s13 + $0x90] sm:$0xff]
      %v4607 = vld [vmem:[%s13 + $0x98] sm:$0xff]
      %v4608 = vld [vmem:[%s13 + $0xa0] sm:$0xff]
      %v4609 = vld [vmem:[%s13 + $0xa8] sm:$0xff]
      %v4610 = vld [vmem:[%s13 + $0xb0] sm:$0xff]
      %v4611 = vld [vmem:[%s13 + $0xb8] sm:$0xff]
      %v4612 = vld [vmem:[%s13 + $0xc0] sm:$0xff]
      %v4613 = vld [vmem:[%s13 + $0xc8] sm:$0xff]
      %v4614 = vld [vmem:[%s13 + $0xd0] sm:$0xff]
      %v4615 = vld [vmem:[%s13 + $0xd8] sm:$0xff]
      %v4616 = vld [vmem:[%s13 + $0xe0] sm:$0xff]
      %v4617 = vld [vmem:[%s13 + $0xe8] sm:$0xff]
      %v4618 = vld [vmem:[%s13 + $0xf0] sm:$0xff]
      %v4619 = vld [vmem:[%s13 + $0xf8] sm:$0xff]
      %v4620 = vld [vmem:[%s13 + $0x100] sm:$0xff]
      %v4621 = vld [vmem:[%s13 + $0x108] sm:$0xff]
      %v4622 = vld [vmem:[%s13 + $0x110] sm:$0xff]
      %v4623 = vld [vmem:[%s13 + $0x118] sm:$0xff]
      %v4624 = vld [vmem:[%s14] sm:$0x3]
      %v4626 = vlaneseq
      %v4627 = vshrl.u32 %v4626, 7
      %v4628 = vsub.s32 0, %v4627
      %v4629 = vrot.slane %v4624, %v4628
      %v4630 = vlaneseq
      %v4631 = vshrl.u32 %v4630, 7
      %v4632 = vsub.s32 1, %v4631
      %v4633 = vrot.slane %v4624, %v4632
      %v4637 = vsel %vm3847, %v4587, 0
      %4639 = vmatprep.subr.mxu0 %v4589
      %4640 = vmatpush1.msra.mxu0 %v4588
      %4641 = vmatprep.subr.mxu0 %v4591
      %4642 = vmatpush1.msra.mxu0 %v4590
      %4643 = vmatprep.subr.mxu0 %v4593
      %4644 = vmatpush1.msra.mxu0 %v4592
      %4645 = vmatprep.subr.mxu0 %v4595
      %4646 = vmatpush1.msra.mxu0 %v4594
      %4647 = vmatprep.subr.mxu0 %v4597
      %4648 = vmatpush1.msra.mxu0 %v4596
      %4649 = vmatprep.subr.mxu0 %v4599
      %4650 = vmatpush1.msra.mxu0 %v4598
      %4651 = vmatprep.subr.mxu0 %v4601
      %4652 = vmatpush1.msra.mxu0 %v4600
      %4653 = vmatprep.subr.mxu0 %v4603
      %4654 = vmatpush1.msra.mxu0 %v4602
      %4655 = vmatprep.subr.mxu0 %v4605
      %4656 = vmatpush1.msra.mxu0 %v4604
      %4657 = vmatprep.subr.mxu0 %v4607
      %4658 = vmatpush1.msra.mxu0 %v4606
      %4659 = vmatprep.subr.mxu0 %v4609
      %4660 = vmatpush1.msra.mxu0 %v4608
      %4661 = vmatprep.subr.mxu0 %v4611
      %4662 = vmatpush1.msra.mxu0 %v4610
      %4663 = vmatprep.subr.mxu0 %v4613
      %4664 = vmatpush1.msra.mxu0 %v4612
      %4665 = vmatprep.subr.mxu0 %v4615
      %4666 = vmatpush1.msra.mxu0 %v4614
      %4667 = vmatprep.subr.mxu0 %v4617
      %4668 = vmatpush1.msra.mxu0 %v4616
      %4669 = vmatprep.subr.mxu0 %v4619
      %4670 = vmatpush1.msra.mxu0 %v4618
      %4671 = vmatprep.subr.mxu0 %v4621
      %4672 = vmatpush1.msra.mxu0 %v4620
      %4673 = vmatprep.subr.mxu0 %v4623
      %4674 = vmatpush1.msra.mxu0 %v4622
      %4675 = vmatprep.subr.mxu0 0.0
      %4676 = vmatpush1.msra.mxu0 0.0
      %4677 = vmatprep.subr.mxu0 0.0
      %4678 = vmatpush1.msra.mxu0 0.0
      %4679 = vmatprep.subr.mxu0 0.0
      %4680 = vmatpush1.msra.mxu0 0.0
      %4681 = vmatprep.subr.mxu0 0.0
      %4682 = vmatpush1.msra.mxu0 0.0
      %4683 = vmatprep.subr.mxu0 0.0
      %4684 = vmatpush1.msra.mxu0 0.0
      %4685 = vmatprep.subr.mxu0 0.0
      %4686 = vmatpush1.msra.mxu0 0.0
      %4687 = vmatprep.subr.mxu0 0.0
      %4688 = vmatpush1.msra.mxu0 0.0
      %4689 = vmatprep.subr.mxu0 0.0
      %4690 = vmatpush1.msra.mxu0 0.0
      %4691 = vmatprep.subr.mxu0 0.0
      %4692 = vmatpush1.msra.mxu0 0.0
      %4693 = vmatprep.subr.mxu0 0.0
      %4694 = vmatpush1.msra.mxu0 0.0
      %4695 = vmatprep.subr.mxu0 0.0
      %4696 = vmatpush1.msra.mxu0 0.0
      %4697 = vmatprep.subr.mxu0 0.0
      %4698 = vmatpush1.msra.mxu0 0.0
      %4699 = vmatprep.subr.mxu0 0.0
      %4700 = vmatpush1.msra.mxu0 0.0
      %4701 = vmatprep.subr.mxu0 0.0
      %4702 = vmatpush1.msra.mxu0 0.0
      %4703 = vmatprep.mubr.f32.mxu0 %v4637
      %4704 = vmatmul.mubr.f32.gmra.mrb[0].mxu0 %v4586
      %v4705 = vpop.f32.mrb[0].mxu0
      %v4706 = vadd.f32 %v4629, %v4705
      %v4707 = vpop.f32.mrb[0].mxu0
      %v4708 = vadd.f32 %v4633, %v4707
      %4709 = vdwg.mxu0
      %v4710 = vmax.f32 %v4706, 0.0
      %v4711 = vmax.f32 %v4708, 0.0
      %v4712 = vld [vmem:[%s15] sm:$0xff]
      %v4713 = vld [vmem:[%s15 + $0x8] sm:$0xff]
      %v4714 = vld [vmem:[%s15 + $0x10] sm:$0xff]
      %v4715 = vld [vmem:[%s15 + $0x18] sm:$0xff]
      %v4716 = vld [vmem:[%s15 + $0x20] sm:$0xff]
      %v4717 = vld [vmem:[%s15 + $0x28] sm:$0xff]
      %v4718 = vld [vmem:[%s15 + $0x30] sm:$0xff]
      %v4719 = vld [vmem:[%s15 + $0x38] sm:$0xff]
      %v4720 = vld [vmem:[%s15 + $0x40] sm:$0xff]
      %v4721 = vld [vmem:[%s15 + $0x48] sm:$0xff]
      %v4722 = vld [vmem:[%s15 + $0x50] sm:$0xff]
      %v4723 = vld [vmem:[%s15 + $0x58] sm:$0xff]
      %v4724 = vld [vmem:[%s15 + $0x60] sm:$0xff]
      %v4725 = vld [vmem:[%s15 + $0x68] sm:$0xff]
      %v4726 = vld [vmem:[%s15 + $0x70] sm:$0xff]
      %v4727 = vld [vmem:[%s15 + $0x78] sm:$0xff]
      %v4728 = vld [vmem:[%s15 + $0x80] sm:$0xff]
      %v4729 = vld [vmem:[%s15 + $0x88] sm:$0xff]
      %v4730 = vld [vmem:[%s16] sm:$0x1]
      %v4732 = vlaneseq
      %v4733 = vshrl.u32 %v4732, 7
      %v4734 = vsub.s32 0, %v4733
      %v4735 = vrot.slane %v4730, %v4734
      %v4738 = vsel %vm3847, %v4711, 0
      %4740 = vmatprep.subr.mxu0 0.0
      %4741 = vmatpush1.msra.mxu0 %v4712
      %4742 = vmatprep.subr.mxu0 0.0
      %4743 = vmatpush1.msra.mxu0 %v4713
      %4744 = vmatprep.subr.mxu0 0.0
      %4745 = vmatpush1.msra.mxu0 %v4714
      %4746 = vmatprep.subr.mxu0 0.0
      %4747 = vmatpush1.msra.mxu0 %v4715
      %4748 = vmatprep.subr.mxu0 0.0
      %4749 = vmatpush1.msra.mxu0 %v4716
      %4750 = vmatprep.subr.mxu0 0.0
      %4751 = vmatpush1.msra.mxu0 %v4717
      %4752 = vmatprep.subr.mxu0 0.0
      %4753 = vmatpush1.msra.mxu0 %v4718
      %4754 = vmatprep.subr.mxu0 0.0
      %4755 = vmatpush1.msra.mxu0 %v4719
      %4756 = vmatprep.subr.mxu0 0.0
      %4757 = vmatpush1.msra.mxu0 %v4720
      %4758 = vmatprep.subr.mxu0 0.0
      %4759 = vmatpush1.msra.mxu0 %v4721
      %4760 = vmatprep.subr.mxu0 0.0
      %4761 = vmatpush1.msra.mxu0 %v4722
      %4762 = vmatprep.subr.mxu0 0.0
      %4763 = vmatpush1.msra.mxu0 %v4723
      %4764 = vmatprep.subr.mxu0 0.0
      %4765 = vmatpush1.msra.mxu0 %v4724
      %4766 = vmatprep.subr.mxu0 0.0
      %4767 = vmatpush1.msra.mxu0 %v4725
      %4768 = vmatprep.subr.mxu0 0.0
      %4769 = vmatpush1.msra.mxu0 %v4726
      %4770 = vmatprep.subr.mxu0 0.0
      %4771 = vmatpush1.msra.mxu0 %v4727
      %4772 = vmatprep.subr.mxu0 0.0
      %4773 = vmatpush1.msra.mxu0 %v4728
      %4774 = vmatprep.subr.mxu0 0.0
      %4775 = vmatpush1.msra.mxu0 %v4729
      %4776 = vmatprep.subr.mxu0 0.0
      %4777 = vmatpush1.msra.mxu0 0.0
      %4778 = vmatprep.subr.mxu0 0.0
      %4779 = vmatpush1.msra.mxu0 0.0
      %4780 = vmatprep.subr.mxu0 0.0
      %4781 = vmatpush1.msra.mxu0 0.0
      %4782 = vmatprep.subr.mxu0 0.0
      %4783 = vmatpush1.msra.mxu0 0.0
      %4784 = vmatprep.subr.mxu0 0.0
      %4785 = vmatpush1.msra.mxu0 0.0
      %4786 = vmatprep.subr.mxu0 0.0
      %4787 = vmatpush1.msra.mxu0 0.0
      %4788 = vmatprep.subr.mxu0 0.0
      %4789 = vmatpush1.msra.mxu0 0.0
      %4790 = vmatprep.subr.mxu0 0.0
      %4791 = vmatpush1.msra.mxu0 0.0
      %4792 = vmatprep.subr.mxu0 0.0
      %4793 = vmatpush1.msra.mxu0 0.0
      %4794 = vmatprep.subr.mxu0 0.0
      %4795 = vmatpush1.msra.mxu0 0.0
      %4796 = vmatprep.subr.mxu0 0.0
      %4797 = vmatpush1.msra.mxu0 0.0
      %4798 = vmatprep.subr.mxu0 0.0
      %4799 = vmatpush1.msra.mxu0 0.0
      %4800 = vmatprep.subr.mxu0 0.0
      %4801 = vmatpush1.msra.mxu0 0.0
      %4802 = vmatprep.subr.mxu0 0.0
      %4803 = vmatpush1.msra.mxu0 0.0
      %4804 = vmatprep.mubr.f32.mxu0 %v4738
      %4805 = vmatmul.mubr.f32.gmra.mrb[0].mxu0 %v4710
      %v4806 = vpop.f32.mrb[0].mxu0
      %v4807 = vadd.f32 %v4735, %v4806
      %v4808 = vpop.f32.mrb[0].mxu0
      %4809 = vdwg.mxu0
      %v4810 = vtanh.pop %v4807
      %v4811 = vlaneseq
      %v4812 = vshrl.u32 %v4811, 7
      %v4813 = vsub.s32 0, %v4812
      %v4814 = vrot.slane %v3244, %v4813
      %v4815 = vmul.f32 %v4810, %v4814
      %v4816 = vlaneseq
      %v4817 = vshrl.u32 %v4816, 7
      %v4818 = vsub.s32 1, %v4817
      %v4819 = vrot.slane %v3244, %v4818
      %v4820 = vadd.f32 %v4815, %v4819
      %4822 = vrot.lane.b32.xlu0 %v4033, 3
      %v4823 = vpop.permute.xlu0 %4822
      %vm4825 = vcmask 23552
      %v4826 = vsel %vm4825, %v4820, %v4823
      %vm4827 = vcmask 48128
      %v4828 = vsel %vm4827, %v4826, 0.0
      %4829 = vst [vmem:[%s570] sm:$0xff] %v4828
      %p4830 = scmp.lt.s32.totalorder %s29, 1
      %s4831 = scalar_select %p4830, %s29, 1
      %s4832 = smul.addr %s4831, 8
      %s4833 = scalar_lea.vmem %s18, %s4832
      // Predicated region
      $region93: #{actor_forward.1} parent=91 // pred_check
        %p4834 = pneg %p430
      $region94: #{actor_forward.1} parent=91 // pred_check_branch
        %4836 = sbr.rel (%p4834) target = $region96
      $region95: #{actor_forward.1} parent=91 // pred_region
        _
      $region96: #{actor_forward.1} parent=91 // pred_fallthru
        _
    $region92: #{actor_forward.1} parent=5 // pred_fallthru
      _
    %p4837 = scmp.le.s32.totalorder 2, %s24
    // Predicated region
    $region97: #{actor_forward.1} parent=5 // pred_check
      %p4838 = pneg %p4837
    $region98: #{actor_forward.1} parent=5 // pred_check_branch
      %4840 = sbr.rel (%p4838) target = $region100
    $region99: #{actor_forward.1} parent=5 // pred_region
      %s4841 = ssub.s32 %s24, 2
      // Predicated region
      $region101: #{actor_forward.1} parent=99 // pred_check
        %p4842 = pneg %p436
      $region102: #{actor_forward.1} parent=99 // pred_check_branch
        %4844 = sbr.rel (%p4842) target = $region104
      $region103: #{actor_forward.1} parent=99 // pred_region
        %p4845 = scmp.lt.s32.totalorder %s30, 1
        %s4846 = scalar_select %p4845, %s30, 1
        %s4847 = smul.addr %s4846, 8
        %s4848 = scalar_lea.vmem %s18, %s4847
      $region104: #{actor_forward.1} parent=99 // pred_fallthru
        _
    $region100: #{actor_forward.1} parent=5 // pred_fallthru
      _
  $region6: #{actor_forward.1} parent=0 // loop_footer
    %s28 = sadd.s32 1, %s24
  $region7: #{actor_forward.1} parent=0 // loop_footer_branch
    %23 = sbr.rel target = $region3
  $region8: #{actor_forward.1} parent=0 // loop_exit
    _

</llo_original>
